<compile_context>
chip_gen: v6e
topology: v6e:2x2x1
jax: 0.10.0
libtpu: 0.0.40
codegen_flags: <defaults>
</compile_context>

<pallas_src>
import functools
import math

import jax
import jax.numpy as jnp
from jax.experimental import pallas as pl
from jax.experimental.pallas import tpu as pltpu


# ---------------------------------------------------------------------------
# Fused forward kernel: one grid step per TB-sized batch tile.
# ---------------------------------------------------------------------------
def _fused_forward_kernel(
    x_ref, pe_ref,
    w_proj_ref,
    ln1_g_ref, ln1_b_ref,
    w_qkv_ref, b_qkv_ref,
    w_o_ref, b_o_ref,
    ln2_g_ref, ln2_b_ref,
    w_ff1_ref, b_ff1_ref,
    w_ff2_ref, b_ff2_ref,
    w_ac_ref, b_ac_ref,
    o_ref,
    *, seq_len, num_heads,
):
    f32, bf16 = jnp.float32, jnp.bfloat16
    L = seq_len
    R = x_ref.shape[0]              # TB * L rows in this tile
    TB = R // L
    D = w_proj_ref.shape[1]
    H = num_heads
    Dh = D // H
    dc = b_ac_ref.shape[1]
    scale = 1.0 / math.sqrt(Dh)

    def layernorm(v, g, b):
        mu = jnp.mean(v, axis=-1, keepdims=True)
        var = jnp.mean((v - mu) ** 2, axis=-1, keepdims=True)
        return (v - mu) * jax.lax.rsqrt(var + 1e-5) * g + b

    # Read LN params / biases once (JAX does not CSE broadcast_in_dim).
    ln1_g, ln1_b = ln1_g_ref[...], ln1_b_ref[...]
    ln2_g, ln2_b = ln2_g_ref[...], ln2_b_ref[...]
    b_qkv = b_qkv_ref[...]
    b_o = b_o_ref[...]
    b_ff1 = b_ff1_ref[...]
    b_ff2 = b_ff2_ref[...]

    # --- fC2_projection + (PE + b_proj) fused add (pe table pre-biased) ----
    x2 = x_ref[...].astype(bf16)                                    # (R, dx)
    h = jnp.dot(x2, w_proj_ref[...], preferred_element_type=f32)
    h = h + pe_ref[...]                                             # (R, D) f32

    # --- prenorm self-attention (dropout is a no-op at inference) ----------
    hn = layernorm(h, ln1_g, ln1_b)
    qkv = jnp.dot(hn.astype(bf16), w_qkv_ref[...],
                  preferred_element_type=f32) + b_qkv               # (R, 3D)
    # layout-free split of the row dim (L == 8 == f32 sublane tile)
    qkv3 = qkv.reshape(TB, L, 3 * D)

    heads = []
    for hd in range(H):                                             # static unroll
        s0 = hd * Dh
        q = (qkv3[:, :, s0:s0 + Dh] * scale).astype(bf16)           # (TB, L, Dh)
        k = qkv3[:, :, D + s0:D + s0 + Dh].astype(bf16)
        v = qkv3[:, :, 2 * D + s0:2 * D + s0 + Dh].astype(bf16)
        s = jnp.einsum("bqd,bkd->bqk", q, k,
                       preferred_element_type=f32)                  # (TB, L, L)
        s = s - jnp.max(s, axis=-1, keepdims=True)
        p = jnp.exp(s)
        p = p * pl.reciprocal(jnp.sum(p, axis=-1, keepdims=True), approx=True)
        heads.append(jnp.einsum("bqk,bkd->bqd", p.astype(bf16), v,
                                preferred_element_type=f32))        # (TB, L, Dh)
    attn = jnp.concatenate(heads, axis=-1).reshape(R, D)            # merge heads/rows
    h = h + jnp.dot(attn.astype(bf16), w_o_ref[...],
                    preferred_element_type=f32) + b_o               # residual

    # --- prenorm feed-forward ----------------------------------------------
    hn = layernorm(h, ln2_g, ln2_b)
    # TODO(synk): TransformerEncoderBlock FF activation assumed to be ReLU.
    ff = jnp.maximum(jnp.dot(hn.astype(bf16), w_ff1_ref[...],
                             preferred_element_type=f32) + b_ff1, 0.0)
    h = h + jnp.dot(ff.astype(bf16), w_ff2_ref[...],
                    preferred_element_type=f32) + b_ff2              # (R, D)

    # --- Aggregation_all (x) classifier, folded host-side -------------------
    # TODO(synk): transformers.Aggregation_all source unavailable; modeled as
    # Linear(window*d_model, d_model) over the flattened window.  The bias-free
    # classifier is linear, so it is folded exactly: w_ac = w_agg @ w_cls,
    # b_ac = b_agg @ w_cls.  Computed as dc broadcast-mul + reduce passes
    # (exact; avoids an in-kernel sublane->lane reshape; dc is tiny).
    h3 = h.reshape(TB, L, D)                                         # layout-free split
    cols = []
    for c in range(dc):                                              # static unroll
        t = jnp.sum(h3 * w_ac_ref[c], axis=-1)                       # (TB, L)
        cols.append(jnp.sum(t, axis=-1, keepdims=True))              # (TB, 1)
    logits = jnp.concatenate(cols, axis=-1) + b_ac_ref[...]          # (TB, dc)
    o_ref[...] = logits.astype(o_ref.dtype)


# ---------------------------------------------------------------------------
# pallas_call wrapper (host-side weight prep + BlockSpecs)
# ---------------------------------------------------------------------------
def code_posterior_seq_forward(x, p, d_model, num_heads, tb=8):
    N, L, dx = x.shape
    dc = p["w_cls"].shape[1]
    ff = p["w_ff1"].shape[1]
    assert N % tb == 0, "batch must be divisible by the batch tile"
    assert L % 8 == 0, "window must be a multiple of 8 (f32 sublane tile)"
    assert d_model % num_heads == 0

    bf = lambda a: a.astype(jnp.bfloat16)
    row = lambda v: v.reshape(1, -1)

    # PE + projection bias folded into one (tb*L, D) table.
    pe_b = jnp.tile(p["pe"][:L] + p["b_proj"][None, :], (tb, 1))     # f32
    # Aggregation (x) classifier folding (both linear, classifier bias-free).
    w_ac = p["w_agg"] @ p["w_cls"]                                   # (L*D, dc)
    w_ac3 = w_ac.T.reshape(dc, L, d_model)                           # (dc, L, D) f32
    b_ac = (p["b_agg"] @ p["w_cls"]).reshape(1, dc)                  # (1, dc)  f32

    x_flat = x.reshape(N * L, dx)

    def cblk(shape):
        return pl.BlockSpec(shape, lambda n: (0,) * len(shape))

    kern = functools.partial(_fused_forward_kernel,
                             seq_len=L, num_heads=num_heads)

    out = pl.pallas_call(
        kern,
        out_shape=jax.ShapeDtypeStruct((N, dc), x.dtype),
        grid=(N // tb,),
        in_specs=[
            pl.BlockSpec((tb * L, dx), lambda n: (n, 0)),            # x rows
            cblk((tb * L, d_model)),                                 # pe + b_proj
            cblk((dx, d_model)),                                     # w_proj (bf16)
            cblk((1, d_model)), cblk((1, d_model)),                  # ln1 g, b
            cblk((d_model, 3 * d_model)), cblk((1, 3 * d_model)),    # qkv
            cblk((d_model, d_model)), cblk((1, d_model)),            # out proj
            cblk((1, d_model)), cblk((1, d_model)),                  # ln2 g, b
            cblk((d_model, ff)), cblk((1, ff)),                      # ff1
            cblk((ff, d_model)), cblk((1, d_model)),                 # ff2
            cblk((dc, L, d_model)),                                  # agg (x) cls W
            cblk((1, dc)),                                           # agg (x) cls b
        ],
        out_specs=pl.BlockSpec((tb, dc), lambda n: (n, 0)),
        compiler_params=pltpu.CompilerParams(
            dimension_semantics=("parallel",)),   # >=2 steps -> v7x 2-TC split
    )(
        x_flat, pe_b,
        bf(p["w_proj"]),
        row(p["ln1_g"]), row(p["ln1_b"]),
        bf(p["w_qkv"]), row(p["b_qkv"]),
        bf(p["w_o"]), row(p["b_o"]),
        row(p["ln2_g"]), row(p["ln2_b"]),
        bf(p["w_ff1"]), row(p["b_ff1"]),
        bf(p["w_ff2"]), row(p["b_ff2"]),
        w_ac3, b_ac,
    )
    return out


# ---------------------------------------------------------------------------
# Parameters / positional encoding (glue, deterministic init)
# ---------------------------------------------------------------------------
def sincos_positional_encoding(max_len, d_model):
    pos = jnp.arange(max_len, dtype=jnp.float32)[:, None]
    i = jnp.arange(0, d_model, 2, dtype=jnp.float32)
    div = jnp.exp(-jnp.log(10000.0) * i / d_model)
    pe = jnp.zeros((max_len, d_model), dtype=jnp.float32)
    pe = pe.at[:, 0::2].set(jnp.sin(pos * div))
    pe = pe.at[:, 1::2].set(jnp.cos(pos * div))
    return pe


def init_params(key, dx, dc, d_model, window, num_heads):
    ff = int(d_model * 3)
    keys = jax.random.split(key, 12)
    n = lambda k, shape: (0.02 * jax.random.normal(k, shape)).astype(jnp.float32)
    z = lambda shape: jnp.zeros(shape, dtype=jnp.float32)
    o = lambda shape: jnp.ones(shape, dtype=jnp.float32)
    # Q/K/V weights fused along the output axis: [W_q | W_k | W_v].
    w_qkv = jnp.concatenate(
        [n(keys[1], (d_model, d_model)),
         n(keys[2], (d_model, d_model)),
         n(keys[3], (d_model, d_model))], axis=1)
    return dict(
        # fC2_projection: Linear(dx, d_model)
        w_proj=n(keys[0], (dx, d_model)), b_proj=z((d_model,)),
        # TransformerEncoderBlock (prenorm), depth=1
        ln1_g=o((d_model,)), ln1_b=z((d_model,)),
        w_qkv=w_qkv, b_qkv=z((3 * d_model,)),
        w_o=n(keys[4], (d_model, d_model)), b_o=z((d_model,)),
        ln2_g=o((d_model,)), ln2_b=z((d_model,)),
        w_ff1=n(keys[5], (d_model, ff)), b_ff1=z((ff,)),
        w_ff2=n(keys[6], (ff, d_model)), b_ff2=z((d_model,)),
        # Aggregation_all(d_model, window): Linear(window*d_model, d_model)
        w_agg=n(keys[7], (window * d_model, d_model)), b_agg=z((d_model,)),
        # classifier: Linear(d_model, dc, bias=False)
        w_cls=n(keys[8], (d_model, dc)),
        pe=sincos_positional_encoding(window + 2, d_model),
    )


if __name__ == "__main__":
    # small shapes: dx=16, dc=4, d_model=32, heads=4, window(=L)=8,
    # batch=16 with a batch tile of 8 -> grid of 2 "parallel" steps.
    dx, dc, d_model, num_heads, window = 16, 4, 32, 4, 8
    N, L, TB = 16, window, 8

    root = jax.random.PRNGKey(0)
    kx, kp = jax.random.split(root)
    x = jax.random.normal(kx, (N, L, dx), dtype=jnp.float32)
    params = init_params(kp, dx, dc, d_model, window, num_heads)

    logits = code_posterior_seq_forward(x, params, d_model, num_heads, tb=TB)
    jax.block_until_ready(logits)
    assert logits.shape == (N, dc), logits.shape
    assert bool(jnp.all(jnp.isfinite(logits)))
    print("KERNEL_OK")
</pallas_src>

<mosaic_0001>
module attributes {stable_mosaic.version = 11 : i64} {
  func.func @_fused_forward_kernel(%arg0: i32, %arg1: memref<64x16xf32, #tpu.memory_space<vmem>>, %arg2: memref<64x32xf32, #tpu.memory_space<vmem>>, %arg3: memref<16x32xbf16, #tpu.memory_space<vmem>>, %arg4: memref<1x32xf32, #tpu.memory_space<vmem>>, %arg5: memref<1x32xf32, #tpu.memory_space<vmem>>, %arg6: memref<32x96xbf16, #tpu.memory_space<vmem>>, %arg7: memref<1x96xf32, #tpu.memory_space<vmem>>, %arg8: memref<32x32xbf16, #tpu.memory_space<vmem>>, %arg9: memref<1x32xf32, #tpu.memory_space<vmem>>, %arg10: memref<1x32xf32, #tpu.memory_space<vmem>>, %arg11: memref<1x32xf32, #tpu.memory_space<vmem>>, %arg12: memref<32x96xbf16, #tpu.memory_space<vmem>>, %arg13: memref<1x96xf32, #tpu.memory_space<vmem>>, %arg14: memref<96x32xbf16, #tpu.memory_space<vmem>>, %arg15: memref<1x32xf32, #tpu.memory_space<vmem>>, %arg16: memref<4x8x32xf32, #tpu.memory_space<vmem>>, %arg17: memref<1x4xf32, #tpu.memory_space<vmem>>, %arg18: memref<8x4xf32, #tpu.memory_space<vmem>>) attributes {dimension_semantics = [#tpu.dimension_semantics<parallel>], iteration_bounds = array<i64: 2>, scalar_prefetch = 0 : i64, scratch_operands = 0 : i64, tpu.core_type = #tpu.core_type<tc>, window_params = [{transform_indices = @transform_0, window_bounds = array<i64: 64, 16>}, {pipeline_mode = #tpu.pipeline_mode<synchronous>, transform_indices = @transform_1, window_bounds = array<i64: 64, 32>}, {pipeline_mode = #tpu.pipeline_mode<synchronous>, transform_indices = @transform_2, window_bounds = array<i64: 16, 32>}, {pipeline_mode = #tpu.pipeline_mode<synchronous>, transform_indices = @transform_3, window_bounds = array<i64: 1, 32>}, {pipeline_mode = #tpu.pipeline_mode<synchronous>, transform_indices = @transform_4, window_bounds = array<i64: 1, 32>}, {pipeline_mode = #tpu.pipeline_mode<synchronous>, transform_indices = @transform_5, window_bounds = array<i64: 32, 96>}, {pipeline_mode = #tpu.pipeline_mode<synchronous>, transform_indices = @transform_6, window_bounds = array<i64: 1, 96>}, {pipeline_mode = #tpu.pipeline_mode<synchronous>, transform_indices = @transform_7, window_bounds = array<i64: 32, 32>}, {pipeline_mode = #tpu.pipeline_mode<synchronous>, transform_indices = @transform_8, window_bounds = array<i64: 1, 32>}, {pipeline_mode = #tpu.pipeline_mode<synchronous>, transform_indices = @transform_9, window_bounds = array<i64: 1, 32>}, {pipeline_mode = #tpu.pipeline_mode<synchronous>, transform_indices = @transform_10, window_bounds = array<i64: 1, 32>}, {pipeline_mode = #tpu.pipeline_mode<synchronous>, transform_indices = @transform_11, window_bounds = array<i64: 32, 96>}, {pipeline_mode = #tpu.pipeline_mode<synchronous>, transform_indices = @transform_12, window_bounds = array<i64: 1, 96>}, {pipeline_mode = #tpu.pipeline_mode<synchronous>, transform_indices = @transform_13, window_bounds = array<i64: 96, 32>}, {pipeline_mode = #tpu.pipeline_mode<synchronous>, transform_indices = @transform_14, window_bounds = array<i64: 1, 32>}, {pipeline_mode = #tpu.pipeline_mode<synchronous>, transform_indices = @transform_15, window_bounds = array<i64: 4, 8, 32>}, {pipeline_mode = #tpu.pipeline_mode<synchronous>, transform_indices = @transform_16, window_bounds = array<i64: 1, 4>}, {transform_indices = @transform_17, window_bounds = array<i64: 8, 4>}]} {
    %c0 = arith.constant 0 : index
    %c0_0 = arith.constant 0 : index
    %0 = vector.load %arg4[%c0, %c0_0] : memref<1x32xf32, #tpu.memory_space<vmem>>, vector<1x32xf32>
    %c0_1 = arith.constant 0 : index
    %c0_2 = arith.constant 0 : index
    %1 = vector.load %arg5[%c0_1, %c0_2] : memref<1x32xf32, #tpu.memory_space<vmem>>, vector<1x32xf32>
    %c0_3 = arith.constant 0 : index
    %c0_4 = arith.constant 0 : index
    %2 = vector.load %arg10[%c0_3, %c0_4] : memref<1x32xf32, #tpu.memory_space<vmem>>, vector<1x32xf32>
    %c0_5 = arith.constant 0 : index
    %c0_6 = arith.constant 0 : index
    %3 = vector.load %arg11[%c0_5, %c0_6] : memref<1x32xf32, #tpu.memory_space<vmem>>, vector<1x32xf32>
    %c0_7 = arith.constant 0 : index
    %c0_8 = arith.constant 0 : index
    %4 = vector.load %arg7[%c0_7, %c0_8] : memref<1x96xf32, #tpu.memory_space<vmem>>, vector<1x96xf32>
    %c0_9 = arith.constant 0 : index
    %c0_10 = arith.constant 0 : index
    %5 = vector.load %arg9[%c0_9, %c0_10] : memref<1x32xf32, #tpu.memory_space<vmem>>, vector<1x32xf32>
    %c0_11 = arith.constant 0 : index
    %c0_12 = arith.constant 0 : index
    %6 = vector.load %arg13[%c0_11, %c0_12] : memref<1x96xf32, #tpu.memory_space<vmem>>, vector<1x96xf32>
    %c0_13 = arith.constant 0 : index
    %c0_14 = arith.constant 0 : index
    %7 = vector.load %arg15[%c0_13, %c0_14] : memref<1x32xf32, #tpu.memory_space<vmem>>, vector<1x32xf32>
    %c0_15 = arith.constant 0 : index
    %c0_16 = arith.constant 0 : index
    %8 = vector.load %arg1[%c0_15, %c0_16] : memref<64x16xf32, #tpu.memory_space<vmem>>, vector<64x16xf32>
    %9 = arith.truncf %8 : vector<64x16xf32> to vector<64x16xbf16>
    %c0_17 = arith.constant 0 : index
    %c0_18 = arith.constant 0 : index
    %10 = vector.load %arg3[%c0_17, %c0_18] : memref<16x32xbf16, #tpu.memory_space<vmem>>, vector<16x32xbf16>
    %cst = arith.constant dense<0.000000e+00> : vector<64x32xf32>
    %11 = tpu.matmul %9, %10, %cst {dimension_numbers = #tpu.dot_dimension_numbers<[1], [0], [0], [1], [0, 0, 1, 1], [], []>} : vector<64x16xbf16>, vector<16x32xbf16>, vector<64x32xf32> -> vector<64x32xf32>
    %c0_19 = arith.constant 0 : index
    %c0_20 = arith.constant 0 : index
    %12 = vector.load %arg2[%c0_19, %c0_20] : memref<64x32xf32, #tpu.memory_space<vmem>>, vector<64x32xf32>
    %13 = arith.addf %11, %12 : vector<64x32xf32>
    %cst_21 = arith.constant dense<0.000000e+00> : vector<64xf32>
    %14 = vector.multi_reduction <add>, %13, %cst_21 [1] : vector<64x32xf32> to vector<64xf32>
    %15 = vector.shape_cast %14 : vector<64xf32> to vector<64x1xf32>
    %cst_22 = arith.constant 3.200000e+01 : f32
    %16 = vector.broadcast %cst_22 : f32 to vector<64x1xf32>
    %17 = arith.divf %15, %16 : vector<64x1xf32>
    %18 = vector.broadcast %17 : vector<64x1xf32> to vector<64x32xf32>
    %19 = arith.subf %13, %18 : vector<64x32xf32>
    %20 = arith.mulf %19, %19 : vector<64x32xf32>
    %cst_23 = arith.constant dense<0.000000e+00> : vector<64xf32>
    %21 = vector.multi_reduction <add>, %20, %cst_23 [1] : vector<64x32xf32> to vector<64xf32>
    %22 = vector.shape_cast %21 : vector<64xf32> to vector<64x1xf32>
    %cst_24 = arith.constant 3.200000e+01 : f32
    %23 = vector.broadcast %cst_24 : f32 to vector<64x1xf32>
    %24 = arith.divf %22, %23 : vector<64x1xf32>
    %25 = vector.broadcast %17 : vector<64x1xf32> to vector<64x32xf32>
    %26 = arith.subf %13, %25 : vector<64x32xf32>
    %cst_25 = arith.constant 9.99999974E-6 : f32
    %27 = vector.broadcast %cst_25 : f32 to vector<64x1xf32>
    %28 = arith.addf %24, %27 : vector<64x1xf32>
    %29 = math.rsqrt %28 : vector<64x1xf32>
    %30 = vector.broadcast %29 : vector<64x1xf32> to vector<64x32xf32>
    %31 = arith.mulf %26, %30 : vector<64x32xf32>
    %32 = vector.broadcast %0 : vector<1x32xf32> to vector<64x32xf32>
    %33 = arith.mulf %31, %32 : vector<64x32xf32>
    %34 = vector.broadcast %1 : vector<1x32xf32> to vector<64x32xf32>
    %35 = arith.addf %33, %34 : vector<64x32xf32>
    %36 = arith.truncf %35 : vector<64x32xf32> to vector<64x32xbf16>
    %c0_26 = arith.constant 0 : index
    %c0_27 = arith.constant 0 : index
    %37 = vector.load %arg6[%c0_26, %c0_27] : memref<32x96xbf16, #tpu.memory_space<vmem>>, vector<32x96xbf16>
    %cst_28 = arith.constant dense<0.000000e+00> : vector<64x96xf32>
    %38 = tpu.matmul %36, %37, %cst_28 {dimension_numbers = #tpu.dot_dimension_numbers<[1], [0], [0], [1], [0, 0, 1, 1], [], []>} : vector<64x32xbf16>, vector<32x96xbf16>, vector<64x96xf32> -> vector<64x96xf32>
    %39 = vector.broadcast %4 : vector<1x96xf32> to vector<64x96xf32>
    %40 = arith.addf %38, %39 : vector<64x96xf32>
    %41 = vector.shape_cast %40 : vector<64x96xf32> to vector<8x8x96xf32>
    %42 = vector.extract_strided_slice %41 {offsets = [0, 0, 0], sizes = [8, 8, 8], strides = [1, 1, 1]} : vector<8x8x96xf32> to vector<8x8x8xf32>
    %cst_29 = arith.constant 0.353553385 : f32
    %43 = vector.broadcast %cst_29 : f32 to vector<8x8x8xf32>
    %44 = arith.mulf %42, %43 : vector<8x8x8xf32>
    %45 = arith.truncf %44 : vector<8x8x8xf32> to vector<8x8x8xbf16>
    %46 = vector.extract_strided_slice %41 {offsets = [0, 0, 32], sizes = [8, 8, 8], strides = [1, 1, 1]} : vector<8x8x96xf32> to vector<8x8x8xf32>
    %47 = arith.truncf %46 : vector<8x8x8xf32> to vector<8x8x8xbf16>
    %48 = vector.extract_strided_slice %41 {offsets = [0, 0, 64], sizes = [8, 8, 8], strides = [1, 1, 1]} : vector<8x8x96xf32> to vector<8x8x8xf32>
    %49 = arith.truncf %48 : vector<8x8x8xf32> to vector<8x8x8xbf16>
    "tpu.trace_start"() <{level = 10 : i32, message = "bqd,bkd->bqk"}> : () -> ()
    %cst_30 = arith.constant dense<0.000000e+00> : vector<8x8x8xf32>
    %50 = tpu.matmul %45, %47, %cst_30 {dimension_numbers = #tpu.dot_dimension_numbers<[2], [2], [1], [1], [0, 0, 0, 1, 1, 1], [0], [0]>} : vector<8x8x8xbf16>, vector<8x8x8xbf16>, vector<8x8x8xf32> -> vector<8x8x8xf32>
    "tpu.trace_stop"() : () -> ()
    %cst_31 = arith.constant dense<0xFF800000> : vector<8x8xf32>
    %51 = vector.multi_reduction <maximumf>, %50, %cst_31 [2] : vector<8x8x8xf32> to vector<8x8xf32>
    %52 = vector.shape_cast %51 : vector<8x8xf32> to vector<8x8x1xf32>
    %53 = vector.broadcast %52 : vector<8x8x1xf32> to vector<8x8x8xf32>
    %54 = arith.subf %50, %53 : vector<8x8x8xf32>
    %55 = math.exp %54 : vector<8x8x8xf32>
    %cst_32 = arith.constant dense<0.000000e+00> : vector<8x8xf32>
    %56 = vector.multi_reduction <add>, %55, %cst_32 [2] : vector<8x8x8xf32> to vector<8x8xf32>
    %57 = vector.shape_cast %56 : vector<8x8xf32> to vector<8x8x1xf32>
    %58 = tpu.reciprocal %57 {approx = true} : vector<8x8x1xf32> -> vector<8x8x1xf32>
    %59 = vector.broadcast %58 : vector<8x8x1xf32> to vector<8x8x8xf32>
    %60 = arith.mulf %55, %59 : vector<8x8x8xf32>
    %61 = arith.truncf %60 : vector<8x8x8xf32> to vector<8x8x8xbf16>
    "tpu.trace_start"() <{level = 10 : i32, message = "bqk,bkd->bqd"}> : () -> ()
    %cst_33 = arith.constant dense<0.000000e+00> : vector<8x8x8xf32>
    %62 = tpu.matmul %61, %49, %cst_33 {dimension_numbers = #tpu.dot_dimension_numbers<[2], [1], [1], [2], [0, 0, 0, 1, 1, 2], [0], [0]>} : vector<8x8x8xbf16>, vector<8x8x8xbf16>, vector<8x8x8xf32> -> vector<8x8x8xf32>
    "tpu.trace_stop"() : () -> ()
    %63 = vector.extract_strided_slice %41 {offsets = [0, 0, 8], sizes = [8, 8, 8], strides = [1, 1, 1]} : vector<8x8x96xf32> to vector<8x8x8xf32>
    %cst_34 = arith.constant 0.353553385 : f32
    %64 = vector.broadcast %cst_34 : f32 to vector<8x8x8xf32>
    %65 = arith.mulf %63, %64 : vector<8x8x8xf32>
    %66 = arith.truncf %65 : vector<8x8x8xf32> to vector<8x8x8xbf16>
    %67 = vector.extract_strided_slice %41 {offsets = [0, 0, 40], sizes = [8, 8, 8], strides = [1, 1, 1]} : vector<8x8x96xf32> to vector<8x8x8xf32>
    %68 = arith.truncf %67 : vector<8x8x8xf32> to vector<8x8x8xbf16>
    %69 = vector.extract_strided_slice %41 {offsets = [0, 0, 72], sizes = [8, 8, 8], strides = [1, 1, 1]} : vector<8x8x96xf32> to vector<8x8x8xf32>
    %70 = arith.truncf %69 : vector<8x8x8xf32> to vector<8x8x8xbf16>
    "tpu.trace_start"() <{level = 10 : i32, message = "bqd,bkd->bqk"}> : () -> ()
    %cst_35 = arith.constant dense<0.000000e+00> : vector<8x8x8xf32>
    %71 = tpu.matmul %66, %68, %cst_35 {dimension_numbers = #tpu.dot_dimension_numbers<[2], [2], [1], [1], [0, 0, 0, 1, 1, 1], [0], [0]>} : vector<8x8x8xbf16>, vector<8x8x8xbf16>, vector<8x8x8xf32> -> vector<8x8x8xf32>
    "tpu.trace_stop"() : () -> ()
    %cst_36 = arith.constant dense<0xFF800000> : vector<8x8xf32>
    %72 = vector.multi_reduction <maximumf>, %71, %cst_36 [2] : vector<8x8x8xf32> to vector<8x8xf32>
    %73 = vector.shape_cast %72 : vector<8x8xf32> to vector<8x8x1xf32>
    %74 = vector.broadcast %73 : vector<8x8x1xf32> to vector<8x8x8xf32>
    %75 = arith.subf %71, %74 : vector<8x8x8xf32>
    %76 = math.exp %75 : vector<8x8x8xf32>
    %cst_37 = arith.constant dense<0.000000e+00> : vector<8x8xf32>
    %77 = vector.multi_reduction <add>, %76, %cst_37 [2] : vector<8x8x8xf32> to vector<8x8xf32>
    %78 = vector.shape_cast %77 : vector<8x8xf32> to vector<8x8x1xf32>
    %79 = tpu.reciprocal %78 {approx = true} : vector<8x8x1xf32> -> vector<8x8x1xf32>
    %80 = vector.broadcast %79 : vector<8x8x1xf32> to vector<8x8x8xf32>
    %81 = arith.mulf %76, %80 : vector<8x8x8xf32>
    %82 = arith.truncf %81 : vector<8x8x8xf32> to vector<8x8x8xbf16>
    "tpu.trace_start"() <{level = 10 : i32, message = "bqk,bkd->bqd"}> : () -> ()
    %cst_38 = arith.constant dense<0.000000e+00> : vector<8x8x8xf32>
    %83 = tpu.matmul %82, %70, %cst_38 {dimension_numbers = #tpu.dot_dimension_numbers<[2], [1], [1], [2], [0, 0, 0, 1, 1, 2], [0], [0]>} : vector<8x8x8xbf16>, vector<8x8x8xbf16>, vector<8x8x8xf32> -> vector<8x8x8xf32>
    "tpu.trace_stop"() : () -> ()
    %84 = vector.extract_strided_slice %41 {offsets = [0, 0, 16], sizes = [8, 8, 8], strides = [1, 1, 1]} : vector<8x8x96xf32> to vector<8x8x8xf32>
    %cst_39 = arith.constant 0.353553385 : f32
    %85 = vector.broadcast %cst_39 : f32 to vector<8x8x8xf32>
    %86 = arith.mulf %84, %85 : vector<8x8x8xf32>
    %87 = arith.truncf %86 : vector<8x8x8xf32> to vector<8x8x8xbf16>
    %88 = vector.extract_strided_slice %41 {offsets = [0, 0, 48], sizes = [8, 8, 8], strides = [1, 1, 1]} : vector<8x8x96xf32> to vector<8x8x8xf32>
    %89 = arith.truncf %88 : vector<8x8x8xf32> to vector<8x8x8xbf16>
    %90 = vector.extract_strided_slice %41 {offsets = [0, 0, 80], sizes = [8, 8, 8], strides = [1, 1, 1]} : vector<8x8x96xf32> to vector<8x8x8xf32>
    %91 = arith.truncf %90 : vector<8x8x8xf32> to vector<8x8x8xbf16>
    "tpu.trace_start"() <{level = 10 : i32, message = "bqd,bkd->bqk"}> : () -> ()
    %cst_40 = arith.constant dense<0.000000e+00> : vector<8x8x8xf32>
    %92 = tpu.matmul %87, %89, %cst_40 {dimension_numbers = #tpu.dot_dimension_numbers<[2], [2], [1], [1], [0, 0, 0, 1, 1, 1], [0], [0]>} : vector<8x8x8xbf16>, vector<8x8x8xbf16>, vector<8x8x8xf32> -> vector<8x8x8xf32>
    "tpu.trace_stop"() : () -> ()
    %cst_41 = arith.constant dense<0xFF800000> : vector<8x8xf32>
    %93 = vector.multi_reduction <maximumf>, %92, %cst_41 [2] : vector<8x8x8xf32> to vector<8x8xf32>
    %94 = vector.shape_cast %93 : vector<8x8xf32> to vector<8x8x1xf32>
    %95 = vector.broadcast %94 : vector<8x8x1xf32> to vector<8x8x8xf32>
    %96 = arith.subf %92, %95 : vector<8x8x8xf32>
    %97 = math.exp %96 : vector<8x8x8xf32>
    %cst_42 = arith.constant dense<0.000000e+00> : vector<8x8xf32>
    %98 = vector.multi_reduction <add>, %97, %cst_42 [2] : vector<8x8x8xf32> to vector<8x8xf32>
    %99 = vector.shape_cast %98 : vector<8x8xf32> to vector<8x8x1xf32>
    %100 = tpu.reciprocal %99 {approx = true} : vector<8x8x1xf32> -> vector<8x8x1xf32>
    %101 = vector.broadcast %100 : vector<8x8x1xf32> to vector<8x8x8xf32>
    %102 = arith.mulf %97, %101 : vector<8x8x8xf32>
    %103 = arith.truncf %102 : vector<8x8x8xf32> to vector<8x8x8xbf16>
    "tpu.trace_start"() <{level = 10 : i32, message = "bqk,bkd->bqd"}> : () -> ()
    %cst_43 = arith.constant dense<0.000000e+00> : vector<8x8x8xf32>
    %104 = tpu.matmul %103, %91, %cst_43 {dimension_numbers = #tpu.dot_dimension_numbers<[2], [1], [1], [2], [0, 0, 0, 1, 1, 2], [0], [0]>} : vector<8x8x8xbf16>, vector<8x8x8xbf16>, vector<8x8x8xf32> -> vector<8x8x8xf32>
    "tpu.trace_stop"() : () -> ()
    %105 = vector.extract_strided_slice %41 {offsets = [0, 0, 24], sizes = [8, 8, 8], strides = [1, 1, 1]} : vector<8x8x96xf32> to vector<8x8x8xf32>
    %cst_44 = arith.constant 0.353553385 : f32
    %106 = vector.broadcast %cst_44 : f32 to vector<8x8x8xf32>
    %107 = arith.mulf %105, %106 : vector<8x8x8xf32>
    %108 = arith.truncf %107 : vector<8x8x8xf32> to vector<8x8x8xbf16>
    %109 = vector.extract_strided_slice %41 {offsets = [0, 0, 56], sizes = [8, 8, 8], strides = [1, 1, 1]} : vector<8x8x96xf32> to vector<8x8x8xf32>
    %110 = arith.truncf %109 : vector<8x8x8xf32> to vector<8x8x8xbf16>
    %111 = vector.extract_strided_slice %41 {offsets = [0, 0, 88], sizes = [8, 8, 8], strides = [1, 1, 1]} : vector<8x8x96xf32> to vector<8x8x8xf32>
    %112 = arith.truncf %111 : vector<8x8x8xf32> to vector<8x8x8xbf16>
    "tpu.trace_start"() <{level = 10 : i32, message = "bqd,bkd->bqk"}> : () -> ()
    %cst_45 = arith.constant dense<0.000000e+00> : vector<8x8x8xf32>
    %113 = tpu.matmul %108, %110, %cst_45 {dimension_numbers = #tpu.dot_dimension_numbers<[2], [2], [1], [1], [0, 0, 0, 1, 1, 1], [0], [0]>} : vector<8x8x8xbf16>, vector<8x8x8xbf16>, vector<8x8x8xf32> -> vector<8x8x8xf32>
    "tpu.trace_stop"() : () -> ()
    %cst_46 = arith.constant dense<0xFF800000> : vector<8x8xf32>
    %114 = vector.multi_reduction <maximumf>, %113, %cst_46 [2] : vector<8x8x8xf32> to vector<8x8xf32>
    %115 = vector.shape_cast %114 : vector<8x8xf32> to vector<8x8x1xf32>
    %116 = vector.broadcast %115 : vector<8x8x1xf32> to vector<8x8x8xf32>
    %117 = arith.subf %113, %116 : vector<8x8x8xf32>
    %118 = math.exp %117 : vector<8x8x8xf32>
    %cst_47 = arith.constant dense<0.000000e+00> : vector<8x8xf32>
    %119 = vector.multi_reduction <add>, %118, %cst_47 [2] : vector<8x8x8xf32> to vector<8x8xf32>
    %120 = vector.shape_cast %119 : vector<8x8xf32> to vector<8x8x1xf32>
    %121 = tpu.reciprocal %120 {approx = true} : vector<8x8x1xf32> -> vector<8x8x1xf32>
    %122 = vector.broadcast %121 : vector<8x8x1xf32> to vector<8x8x8xf32>
    %123 = arith.mulf %118, %122 : vector<8x8x8xf32>
    %124 = arith.truncf %123 : vector<8x8x8xf32> to vector<8x8x8xbf16>
    "tpu.trace_start"() <{level = 10 : i32, message = "bqk,bkd->bqd"}> : () -> ()
    %cst_48 = arith.constant dense<0.000000e+00> : vector<8x8x8xf32>
    %125 = tpu.matmul %124, %112, %cst_48 {dimension_numbers = #tpu.dot_dimension_numbers<[2], [1], [1], [2], [0, 0, 0, 1, 1, 2], [0], [0]>} : vector<8x8x8xbf16>, vector<8x8x8xbf16>, vector<8x8x8xf32> -> vector<8x8x8xf32>
    "tpu.trace_stop"() : () -> ()
    %126 = tpu.concatenate %62, %83, %104, %125 in 2 : vector<8x8x8xf32>, vector<8x8x8xf32>, vector<8x8x8xf32>, vector<8x8x8xf32> -> vector<8x8x32xf32>
    %127 = vector.shape_cast %126 : vector<8x8x32xf32> to vector<64x32xf32>
    %128 = arith.truncf %127 : vector<64x32xf32> to vector<64x32xbf16>
    %c0_49 = arith.constant 0 : index
    %c0_50 = arith.constant 0 : index
    %129 = vector.load %arg8[%c0_49, %c0_50] : memref<32x32xbf16, #tpu.memory_space<vmem>>, vector<32x32xbf16>
    %cst_51 = arith.constant dense<0.000000e+00> : vector<64x32xf32>
    %130 = tpu.matmul %128, %129, %cst_51 {dimension_numbers = #tpu.dot_dimension_numbers<[1], [0], [0], [1], [0, 0, 1, 1], [], []>} : vector<64x32xbf16>, vector<32x32xbf16>, vector<64x32xf32> -> vector<64x32xf32>
    %131 = arith.addf %13, %130 : vector<64x32xf32>
    %132 = vector.broadcast %5 : vector<1x32xf32> to vector<64x32xf32>
    %133 = arith.addf %131, %132 : vector<64x32xf32>
    %cst_52 = arith.constant dense<0.000000e+00> : vector<64xf32>
    %134 = vector.multi_reduction <add>, %133, %cst_52 [1] : vector<64x32xf32> to vector<64xf32>
    %135 = vector.shape_cast %134 : vector<64xf32> to vector<64x1xf32>
    %cst_53 = arith.constant 3.200000e+01 : f32
    %136 = vector.broadcast %cst_53 : f32 to vector<64x1xf32>
    %137 = arith.divf %135, %136 : vector<64x1xf32>
    %138 = vector.broadcast %137 : vector<64x1xf32> to vector<64x32xf32>
    %139 = arith.subf %133, %138 : vector<64x32xf32>
    %140 = arith.mulf %139, %139 : vector<64x32xf32>
    %cst_54 = arith.constant dense<0.000000e+00> : vector<64xf32>
    %141 = vector.multi_reduction <add>, %140, %cst_54 [1] : vector<64x32xf32> to vector<64xf32>
    %142 = vector.shape_cast %141 : vector<64xf32> to vector<64x1xf32>
    %cst_55 = arith.constant 3.200000e+01 : f32
    %143 = vector.broadcast %cst_55 : f32 to vector<64x1xf32>
    %144 = arith.divf %142, %143 : vector<64x1xf32>
    %145 = vector.broadcast %137 : vector<64x1xf32> to vector<64x32xf32>
    %146 = arith.subf %133, %145 : vector<64x32xf32>
    %cst_56 = arith.constant 9.99999974E-6 : f32
    %147 = vector.broadcast %cst_56 : f32 to vector<64x1xf32>
    %148 = arith.addf %144, %147 : vector<64x1xf32>
    %149 = math.rsqrt %148 : vector<64x1xf32>
    %150 = vector.broadcast %149 : vector<64x1xf32> to vector<64x32xf32>
    %151 = arith.mulf %146, %150 : vector<64x32xf32>
    %152 = vector.broadcast %2 : vector<1x32xf32> to vector<64x32xf32>
    %153 = arith.mulf %151, %152 : vector<64x32xf32>
    %154 = vector.broadcast %3 : vector<1x32xf32> to vector<64x32xf32>
    %155 = arith.addf %153, %154 : vector<64x32xf32>
    %156 = arith.truncf %155 : vector<64x32xf32> to vector<64x32xbf16>
    %c0_57 = arith.constant 0 : index
    %c0_58 = arith.constant 0 : index
    %157 = vector.load %arg12[%c0_57, %c0_58] : memref<32x96xbf16, #tpu.memory_space<vmem>>, vector<32x96xbf16>
    %cst_59 = arith.constant dense<0.000000e+00> : vector<64x96xf32>
    %158 = tpu.matmul %156, %157, %cst_59 {dimension_numbers = #tpu.dot_dimension_numbers<[1], [0], [0], [1], [0, 0, 1, 1], [], []>} : vector<64x32xbf16>, vector<32x96xbf16>, vector<64x96xf32> -> vector<64x96xf32>
    %159 = vector.broadcast %6 : vector<1x96xf32> to vector<64x96xf32>
    %160 = arith.addf %158, %159 : vector<64x96xf32>
    %cst_60 = arith.constant 0.000000e+00 : f32
    %161 = vector.broadcast %cst_60 : f32 to vector<64x96xf32>
    %162 = arith.maximumf %160, %161 : vector<64x96xf32>
    %163 = arith.truncf %162 : vector<64x96xf32> to vector<64x96xbf16>
    %c0_61 = arith.constant 0 : index
    %c0_62 = arith.constant 0 : index
    %164 = vector.load %arg14[%c0_61, %c0_62] : memref<96x32xbf16, #tpu.memory_space<vmem>>, vector<96x32xbf16>
    %cst_63 = arith.constant dense<0.000000e+00> : vector<64x32xf32>
    %165 = tpu.matmul %163, %164, %cst_63 {dimension_numbers = #tpu.dot_dimension_numbers<[1], [0], [0], [1], [0, 0, 1, 1], [], []>} : vector<64x96xbf16>, vector<96x32xbf16>, vector<64x32xf32> -> vector<64x32xf32>
    %166 = arith.addf %133, %165 : vector<64x32xf32>
    %167 = vector.broadcast %7 : vector<1x32xf32> to vector<64x32xf32>
    %168 = arith.addf %166, %167 : vector<64x32xf32>
    %169 = vector.shape_cast %168 : vector<64x32xf32> to vector<8x8x32xf32>
    %c0_64 = arith.constant 0 : index
    %c0_65 = arith.constant 0 : index
    %c0_66 = arith.constant 0 : index
    %170 = vector.load %arg16[%c0_64, %c0_65, %c0_66] : memref<4x8x32xf32, #tpu.memory_space<vmem>>, vector<1x8x32xf32>
    %171 = vector.shape_cast %170 : vector<1x8x32xf32> to vector<8x32xf32>
    %172 = vector.shape_cast %171 : vector<8x32xf32> to vector<1x8x32xf32>
    %173 = vector.broadcast %172 : vector<1x8x32xf32> to vector<8x8x32xf32>
    %174 = arith.mulf %169, %173 : vector<8x8x32xf32>
    %cst_67 = arith.constant dense<0.000000e+00> : vector<8x8xf32>
    %175 = vector.multi_reduction <add>, %174, %cst_67 [2] : vector<8x8x32xf32> to vector<8x8xf32>
    %cst_68 = arith.constant dense<0.000000e+00> : vector<8xf32>
    %176 = vector.multi_reduction <add>, %175, %cst_68 [1] : vector<8x8xf32> to vector<8xf32>
    %177 = vector.shape_cast %176 : vector<8xf32> to vector<8x1xf32>
    %c1 = arith.constant 1 : index
    %c0_69 = arith.constant 0 : index
    %c0_70 = arith.constant 0 : index
    %178 = vector.load %arg16[%c1, %c0_69, %c0_70] : memref<4x8x32xf32, #tpu.memory_space<vmem>>, vector<1x8x32xf32>
    %179 = vector.shape_cast %178 : vector<1x8x32xf32> to vector<8x32xf32>
    %180 = vector.shape_cast %179 : vector<8x32xf32> to vector<1x8x32xf32>
    %181 = vector.broadcast %180 : vector<1x8x32xf32> to vector<8x8x32xf32>
    %182 = arith.mulf %169, %181 : vector<8x8x32xf32>
    %cst_71 = arith.constant dense<0.000000e+00> : vector<8x8xf32>
    %183 = vector.multi_reduction <add>, %182, %cst_71 [2] : vector<8x8x32xf32> to vector<8x8xf32>
    %cst_72 = arith.constant dense<0.000000e+00> : vector<8xf32>
    %184 = vector.multi_reduction <add>, %183, %cst_72 [1] : vector<8x8xf32> to vector<8xf32>
    %185 = vector.shape_cast %184 : vector<8xf32> to vector<8x1xf32>
    %c2 = arith.constant 2 : index
    %c0_73 = arith.constant 0 : index
    %c0_74 = arith.constant 0 : index
    %186 = vector.load %arg16[%c2, %c0_73, %c0_74] : memref<4x8x32xf32, #tpu.memory_space<vmem>>, vector<1x8x32xf32>
    %187 = vector.shape_cast %186 : vector<1x8x32xf32> to vector<8x32xf32>
    %188 = vector.shape_cast %187 : vector<8x32xf32> to vector<1x8x32xf32>
    %189 = vector.broadcast %188 : vector<1x8x32xf32> to vector<8x8x32xf32>
    %190 = arith.mulf %169, %189 : vector<8x8x32xf32>
    %cst_75 = arith.constant dense<0.000000e+00> : vector<8x8xf32>
    %191 = vector.multi_reduction <add>, %190, %cst_75 [2] : vector<8x8x32xf32> to vector<8x8xf32>
    %cst_76 = arith.constant dense<0.000000e+00> : vector<8xf32>
    %192 = vector.multi_reduction <add>, %191, %cst_76 [1] : vector<8x8xf32> to vector<8xf32>
    %193 = vector.shape_cast %192 : vector<8xf32> to vector<8x1xf32>
    %c3 = arith.constant 3 : index
    %c0_77 = arith.constant 0 : index
    %c0_78 = arith.constant 0 : index
    %194 = vector.load %arg16[%c3, %c0_77, %c0_78] : memref<4x8x32xf32, #tpu.memory_space<vmem>>, vector<1x8x32xf32>
    %195 = vector.shape_cast %194 : vector<1x8x32xf32> to vector<8x32xf32>
    %196 = vector.shape_cast %195 : vector<8x32xf32> to vector<1x8x32xf32>
    %197 = vector.broadcast %196 : vector<1x8x32xf32> to vector<8x8x32xf32>
    %198 = arith.mulf %169, %197 : vector<8x8x32xf32>
    %cst_79 = arith.constant dense<0.000000e+00> : vector<8x8xf32>
    %199 = vector.multi_reduction <add>, %198, %cst_79 [2] : vector<8x8x32xf32> to vector<8x8xf32>
    %cst_80 = arith.constant dense<0.000000e+00> : vector<8xf32>
    %200 = vector.multi_reduction <add>, %199, %cst_80 [1] : vector<8x8xf32> to vector<8xf32>
    %201 = vector.shape_cast %200 : vector<8xf32> to vector<8x1xf32>
    %202 = tpu.concatenate %177, %185, %193, %201 in 1 : vector<8x1xf32>, vector<8x1xf32>, vector<8x1xf32>, vector<8x1xf32> -> vector<8x4xf32>
    %c0_81 = arith.constant 0 : index
    %c0_82 = arith.constant 0 : index
    %203 = vector.load %arg17[%c0_81, %c0_82] : memref<1x4xf32, #tpu.memory_space<vmem>>, vector<1x4xf32>
    %204 = vector.broadcast %203 : vector<1x4xf32> to vector<8x4xf32>
    %205 = arith.addf %202, %204 : vector<8x4xf32>
    %c0_83 = arith.constant 0 : index
    %c0_84 = arith.constant 0 : index
    %206 = vector.load %arg18[%c0_83, %c0_84] : memref<8x4xf32, #tpu.memory_space<vmem>>, vector<8x4xf32>
    tpu.vector_store %arg18[%c0_83, %c0_84], %205 {strides = array<i32>} : memref<8x4xf32, #tpu.memory_space<vmem>>, vector<8x4xf32>,
    return
  }
  func.func @transform_0(%arg0: i32) -> (i32, i32) {
    %c0_i32 = arith.constant 0 : i32
    %c0_i32_0 = arith.constant 0 : i32
    return %arg0, %c0_i32 : i32, i32
  }
  func.func @transform_1(%arg0: i32) -> (i32, i32) {
    %c0_i32 = arith.constant 0 : i32
    %c0_i32_0 = arith.constant 0 : i32
    %c0_i32_1 = arith.constant 0 : i32
    return %c0_i32, %c0_i32_0 : i32, i32
  }
  func.func @transform_2(%arg0: i32) -> (i32, i32) {
    %c0_i32 = arith.constant 0 : i32
    %c0_i32_0 = arith.constant 0 : i32
    %c0_i32_1 = arith.constant 0 : i32
    return %c0_i32, %c0_i32_0 : i32, i32
  }
  func.func @transform_3(%arg0: i32) -> (i32, i32) {
    %c0_i32 = arith.constant 0 : i32
    %c0_i32_0 = arith.constant 0 : i32
    %c0_i32_1 = arith.constant 0 : i32
    return %c0_i32, %c0_i32_0 : i32, i32
  }
  func.func @transform_4(%arg0: i32) -> (i32, i32) {
    %c0_i32 = arith.constant 0 : i32
    %c0_i32_0 = arith.constant 0 : i32
    %c0_i32_1 = arith.constant 0 : i32
    return %c0_i32, %c0_i32_0 : i32, i32
  }
  func.func @transform_5(%arg0: i32) -> (i32, i32) {
    %c0_i32 = arith.constant 0 : i32
    %c0_i32_0 = arith.constant 0 : i32
    %c0_i32_1 = arith.constant 0 : i32
    return %c0_i32, %c0_i32_0 : i32, i32
  }
  func.func @transform_6(%arg0: i32) -> (i32, i32) {
    %c0_i32 = arith.constant 0 : i32
    %c0_i32_0 = arith.constant 0 : i32
    %c0_i32_1 = arith.constant 0 : i32
    return %c0_i32, %c0_i32_0 : i32, i32
  }
  func.func @transform_7(%arg0: i32) -> (i32, i32) {
    %c0_i32 = arith.constant 0 : i32
    %c0_i32_0 = arith.constant 0 : i32
    %c0_i32_1 = arith.constant 0 : i32
    return %c0_i32, %c0_i32_0 : i32, i32
  }
  func.func @transform_8(%arg0: i32) -> (i32, i32) {
    %c0_i32 = arith.constant 0 : i32
    %c0_i32_0 = arith.constant 0 : i32
    %c0_i32_1 = arith.constant 0 : i32
    return %c0_i32, %c0_i32_0 : i32, i32
  }
  func.func @transform_9(%arg0: i32) -> (i32, i32) {
    %c0_i32 = arith.constant 0 : i32
    %c0_i32_0 = arith.constant 0 : i32
    %c0_i32_1 = arith.constant 0 : i32
    return %c0_i32, %c0_i32_0 : i32, i32
  }
  func.func @transform_10(%arg0: i32) -> (i32, i32) {
    %c0_i32 = arith.constant 0 : i32
    %c0_i32_0 = arith.constant 0 : i32
    %c0_i32_1 = arith.constant 0 : i32
    return %c0_i32, %c0_i32_0 : i32, i32
  }
  func.func @transform_11(%arg0: i32) -> (i32, i32) {
    %c0_i32 = arith.constant 0 : i32
    %c0_i32_0 = arith.constant 0 : i32
    %c0_i32_1 = arith.constant 0 : i32
    return %c0_i32, %c0_i32_0 : i32, i32
  }
  func.func @transform_12(%arg0: i32) -> (i32, i32) {
    %c0_i32 = arith.constant 0 : i32
    %c0_i32_0 = arith.constant 0 : i32
    %c0_i32_1 = arith.constant 0 : i32
    return %c0_i32, %c0_i32_0 : i32, i32
  }
  func.func @transform_13(%arg0: i32) -> (i32, i32) {
    %c0_i32 = arith.constant 0 : i32
    %c0_i32_0 = arith.constant 0 : i32
    %c0_i32_1 = arith.constant 0 : i32
    return %c0_i32, %c0_i32_0 : i32, i32
  }
  func.func @transform_14(%arg0: i32) -> (i32, i32) {
    %c0_i32 = arith.constant 0 : i32
    %c0_i32_0 = arith.constant 0 : i32
    %c0_i32_1 = arith.constant 0 : i32
    return %c0_i32, %c0_i32_0 : i32, i32
  }
  func.func @transform_15(%arg0: i32) -> (i32, i32, i32) {
    %c0_i32 = arith.constant 0 : i32
    %c0_i32_0 = arith.constant 0 : i32
    %c0_i32_1 = arith.constant 0 : i32
    %c0_i32_2 = arith.constant 0 : i32
    return %c0_i32, %c0_i32_0, %c0_i32_1 : i32, i32, i32
  }
  func.func @transform_16(%arg0: i32) -> (i32, i32) {
    %c0_i32 = arith.constant 0 : i32
    %c0_i32_0 = arith.constant 0 : i32
    %c0_i32_1 = arith.constant 0 : i32
    return %c0_i32, %c0_i32_0 : i32, i32
  }
  func.func @transform_17(%arg0: i32) -> (i32, i32) {
    %c0_i32 = arith.constant 0 : i32
    %c0_i32_0 = arith.constant 0 : i32
    return %arg0, %c0_i32 : i32, i32
  }
}

</mosaic_0001>

<llo_original>
// kernel: tpu_custom_call.1
$region0: #{tpu_custom_call.1}
  #allocation0 [shape = 'u32[]', space=smem, size = 0x4, offset = 0x4, fixed_abs, tag = 'smem constant byte address 0x4 - core index']
  #allocation1 [shape = 'u32[144,128]{1,0:T(1,128)}', space=vmem, size = 0x12000, scoped, tag = 'internal scratch']
  %s0 = inlined_call_operand.vmem [shape: f32[128,16], index: 0, kind: input, shape index: {}]
  %s1 = inlined_call_operand.vmem [shape: f32[64,32], index: 1, kind: input, shape index: {}]
  %s2 = inlined_call_operand.vmem [shape: bf16[16,32], index: 2, kind: input, shape index: {}]
  %s3 = inlined_call_operand.vmem [shape: f32[1,32], index: 3, kind: input, shape index: {}]
  %s4 = inlined_call_operand.vmem [shape: f32[1,32], index: 4, kind: input, shape index: {}]
  %s5 = inlined_call_operand.vmem [shape: bf16[32,96], index: 5, kind: input, shape index: {}]
  %s6 = inlined_call_operand.vmem [shape: f32[1,96], index: 6, kind: input, shape index: {}]
  %s7 = inlined_call_operand.vmem [shape: bf16[32,32], index: 7, kind: input, shape index: {}]
  %s8 = inlined_call_operand.vmem [shape: f32[1,32], index: 8, kind: input, shape index: {}]
  %s9 = inlined_call_operand.vmem [shape: f32[1,32], index: 9, kind: input, shape index: {}]
  %s10 = inlined_call_operand.vmem [shape: f32[1,32], index: 10, kind: input, shape index: {}]
  %s11 = inlined_call_operand.vmem [shape: bf16[32,96], index: 11, kind: input, shape index: {}]
  %s12 = inlined_call_operand.vmem [shape: f32[1,96], index: 12, kind: input, shape index: {}]
  %s13 = inlined_call_operand.vmem [shape: bf16[96,32], index: 13, kind: input, shape index: {}]
  %s14 = inlined_call_operand.vmem [shape: f32[1,32], index: 14, kind: input, shape index: {}]
  %s15 = inlined_call_operand.vmem [shape: f32[4,8,32], index: 15, kind: input, shape index: {}]
  %s16 = inlined_call_operand.vmem [shape: f32[1,4], index: 16, kind: input, shape index: {}]
  %s17 = inlined_call_operand.vmem [shape: f32[16,4], index: 17, kind: output, shape index: {}]
  %s18 = sld [smem:[#allocation0]]
  $region101: #{tpu_custom_call.1} parent=0
    _
  %s20 = ssub.s32 1, %s18
  %s21 = scalar_select 0, %s20, %s18
  loop: start=0, step=1, limit=4
  $region2: #{tpu_custom_call.1} parent=0 // loop_pre_header
    _
  $region3: #{tpu_custom_call.1} parent=0 // loop_header
    %s23 = sphi 0, %s27
    %p24 = scmp.ge.s32.totalorder %s23, 4
    %s33 = sphi 0, %s35
    %s36 = sphi 0, %s33
    %s37 = sphi 0, %s36
    %s53 = sphi 0, %s37
    %s57 = sphi 0, %s57
    %s59 = sphi 0, %s57
    %s60 = sphi 0, %s59
    %s74 = sphi 0, %s60
    %s78 = sphi 0, %s78
    %s80 = sphi 0, %s78
    %s81 = sphi 0, %s80
    %s95 = sphi 0, %s81
    %s99 = sphi 0, %s99
    %s101 = sphi 0, %s99
    %s102 = sphi 0, %s101
    %s116 = sphi 0, %s102
    %s120 = sphi 0, %s120
    %s122 = sphi 0, %s120
    %s123 = sphi 0, %s122
    %s137 = sphi 0, %s123
    %s141 = sphi 0, %s141
    %s143 = sphi 0, %s141
    %s144 = sphi 0, %s143
    %s158 = sphi 0, %s144
    %s162 = sphi 0, %s162
    %s164 = sphi 0, %s162
    %s165 = sphi 0, %s164
    %s179 = sphi 0, %s165
    %s183 = sphi 0, %s183
    %s185 = sphi 0, %s183
    %s186 = sphi 0, %s185
    %s200 = sphi 0, %s186
    %s204 = sphi 0, %s204
    %s206 = sphi 0, %s204
    %s207 = sphi 0, %s206
    %s221 = sphi 0, %s207
    %s225 = sphi 0, %s225
    %s227 = sphi 0, %s225
    %s228 = sphi 0, %s227
    %s242 = sphi 0, %s228
    %s246 = sphi 0, %s246
    %s248 = sphi 0, %s246
    %s249 = sphi 0, %s248
    %s263 = sphi 0, %s249
    %s267 = sphi 0, %s267
    %s269 = sphi 0, %s267
    %s270 = sphi 0, %s269
    %s284 = sphi 0, %s270
    %s288 = sphi 0, %s288
    %s290 = sphi 0, %s288
    %s291 = sphi 0, %s290
    %s305 = sphi 0, %s291
    %s309 = sphi 0, %s309
    %s311 = sphi 0, %s309
    %s312 = sphi 0, %s311
    %s326 = sphi 0, %s312
    %s330 = sphi 0, %s330
    %s332 = sphi 0, %s330
    %s333 = sphi 0, %s332
    %s347 = sphi 0, %s333
    %s351 = sphi 0, %s351
    %s353 = sphi 0, %s351
    %s354 = sphi 0, %s353
    %s368 = sphi 0, %s354
    %s372 = sphi 0, %s372
    %s374 = sphi 0, %s372
    %s375 = sphi 0, %s374
    %s389 = sphi 0, %s375
    %s395 = sphi 0, %s397
    %s398 = sphi 0, %s395
    %s399 = sphi 0, %s398
    %s415 = sphi 0, %s399
  $region4: #{tpu_custom_call.1} parent=0 // loop_header_branch
    %26 = sbr.rel (%p24) target = $region8
  $region5: #{tpu_custom_call.1} parent=0 // loop_body
    %s28 = ssub.s32 %s23, 1
    %s29 = ssub.s32 %s23, 2
    %s30 = sadd.s32 %s23, 1
    %s31 = ssub.s32 %s23, %s30
    %p32 = scmp.eq.s32.totalorder %s31, 0
    %s34 = sadd.s32 %s33, 1
    %s35 = scalar_select %p32, %s33, %s34
    %p38 = pneg %p32
    %p39 = scmp.eq.s32.totalorder %s23, 1
    %p40 = por %p38, %p39
    %p41 = scmp.ne.s32.totalorder %s33, %s36
    %p42 = scmp.eq.s32.totalorder %s23, 0
    %p43 = por %p41, %p42
    %p44 = scmp.ne.s32.totalorder %s33, %s36
    %p45 = scmp.eq.s32.totalorder %s28, 1
    %p46 = por %p44, %p45
    %p47 = scmp.ne.s32.totalorder %s36, %s37
    %p48 = scmp.eq.s32.totalorder %s28, 0
    %p49 = por %p47, %p48
    %p50 = scmp.ne.s32.totalorder %s36, %s37
    %p51 = scmp.eq.s32.totalorder %s29, 1
    %p52 = por %p50, %p51
    %p54 = scmp.ne.s32.totalorder %s37, %s53
    %p55 = scmp.eq.s32.totalorder %s29, 0
    %p56 = por %p54, %p55
    %s58 = sadd.s32 %s57, 1
    %p61 = scmp.eq.s32.totalorder %s23, 1
    %p62 = scmp.ne.s32.totalorder %s57, %s59
    %p63 = scmp.eq.s32.totalorder %s23, 0
    %p64 = por %p62, %p63
    %p65 = scmp.ne.s32.totalorder %s57, %s59
    %p66 = scmp.eq.s32.totalorder %s28, 1
    %p67 = por %p65, %p66
    %p68 = scmp.ne.s32.totalorder %s59, %s60
    %p69 = scmp.eq.s32.totalorder %s28, 0
    %p70 = por %p68, %p69
    %p71 = scmp.ne.s32.totalorder %s59, %s60
    %p72 = scmp.eq.s32.totalorder %s29, 1
    %p73 = por %p71, %p72
    %p75 = scmp.ne.s32.totalorder %s60, %s74
    %p76 = scmp.eq.s32.totalorder %s29, 0
    %p77 = por %p75, %p76
    %s79 = sadd.s32 %s78, 1
    %p82 = scmp.eq.s32.totalorder %s23, 1
    %p83 = scmp.ne.s32.totalorder %s78, %s80
    %p84 = scmp.eq.s32.totalorder %s23, 0
    %p85 = por %p83, %p84
    %p86 = scmp.ne.s32.totalorder %s78, %s80
    %p87 = scmp.eq.s32.totalorder %s28, 1
    %p88 = por %p86, %p87
    %p89 = scmp.ne.s32.totalorder %s80, %s81
    %p90 = scmp.eq.s32.totalorder %s28, 0
    %p91 = por %p89, %p90
    %p92 = scmp.ne.s32.totalorder %s80, %s81
    %p93 = scmp.eq.s32.totalorder %s29, 1
    %p94 = por %p92, %p93
    %p96 = scmp.ne.s32.totalorder %s81, %s95
    %p97 = scmp.eq.s32.totalorder %s29, 0
    %p98 = por %p96, %p97
    %s100 = sadd.s32 %s99, 1
    %p103 = scmp.eq.s32.totalorder %s23, 1
    %p104 = scmp.ne.s32.totalorder %s99, %s101
    %p105 = scmp.eq.s32.totalorder %s23, 0
    %p106 = por %p104, %p105
    %p107 = scmp.ne.s32.totalorder %s99, %s101
    %p108 = scmp.eq.s32.totalorder %s28, 1
    %p109 = por %p107, %p108
    %p110 = scmp.ne.s32.totalorder %s101, %s102
    %p111 = scmp.eq.s32.totalorder %s28, 0
    %p112 = por %p110, %p111
    %p113 = scmp.ne.s32.totalorder %s101, %s102
    %p114 = scmp.eq.s32.totalorder %s29, 1
    %p115 = por %p113, %p114
    %p117 = scmp.ne.s32.totalorder %s102, %s116
    %p118 = scmp.eq.s32.totalorder %s29, 0
    %p119 = por %p117, %p118
    %s121 = sadd.s32 %s120, 1
    %p124 = scmp.eq.s32.totalorder %s23, 1
    %p125 = scmp.ne.s32.totalorder %s120, %s122
    %p126 = scmp.eq.s32.totalorder %s23, 0
    %p127 = por %p125, %p126
    %p128 = scmp.ne.s32.totalorder %s120, %s122
    %p129 = scmp.eq.s32.totalorder %s28, 1
    %p130 = por %p128, %p129
    %p131 = scmp.ne.s32.totalorder %s122, %s123
    %p132 = scmp.eq.s32.totalorder %s28, 0
    %p133 = por %p131, %p132
    %p134 = scmp.ne.s32.totalorder %s122, %s123
    %p135 = scmp.eq.s32.totalorder %s29, 1
    %p136 = por %p134, %p135
    %p138 = scmp.ne.s32.totalorder %s123, %s137
    %p139 = scmp.eq.s32.totalorder %s29, 0
    %p140 = por %p138, %p139
    %s142 = sadd.s32 %s141, 1
    %p145 = scmp.eq.s32.totalorder %s23, 1
    %p146 = scmp.ne.s32.totalorder %s141, %s143
    %p147 = scmp.eq.s32.totalorder %s23, 0
    %p148 = por %p146, %p147
    %p149 = scmp.ne.s32.totalorder %s141, %s143
    %p150 = scmp.eq.s32.totalorder %s28, 1
    %p151 = por %p149, %p150
    %p152 = scmp.ne.s32.totalorder %s143, %s144
    %p153 = scmp.eq.s32.totalorder %s28, 0
    %p154 = por %p152, %p153
    %p155 = scmp.ne.s32.totalorder %s143, %s144
    %p156 = scmp.eq.s32.totalorder %s29, 1
    %p157 = por %p155, %p156
    %p159 = scmp.ne.s32.totalorder %s144, %s158
    %p160 = scmp.eq.s32.totalorder %s29, 0
    %p161 = por %p159, %p160
    %s163 = sadd.s32 %s162, 1
    %p166 = scmp.eq.s32.totalorder %s23, 1
    %p167 = scmp.ne.s32.totalorder %s162, %s164
    %p168 = scmp.eq.s32.totalorder %s23, 0
    %p169 = por %p167, %p168
    %p170 = scmp.ne.s32.totalorder %s162, %s164
    %p171 = scmp.eq.s32.totalorder %s28, 1
    %p172 = por %p170, %p171
    %p173 = scmp.ne.s32.totalorder %s164, %s165
    %p174 = scmp.eq.s32.totalorder %s28, 0
    %p175 = por %p173, %p174
    %p176 = scmp.ne.s32.totalorder %s164, %s165
    %p177 = scmp.eq.s32.totalorder %s29, 1
    %p178 = por %p176, %p177
    %p180 = scmp.ne.s32.totalorder %s165, %s179
    %p181 = scmp.eq.s32.totalorder %s29, 0
    %p182 = por %p180, %p181
    %s184 = sadd.s32 %s183, 1
    %p187 = scmp.eq.s32.totalorder %s23, 1
    %p188 = scmp.ne.s32.totalorder %s183, %s185
    %p189 = scmp.eq.s32.totalorder %s23, 0
    %p190 = por %p188, %p189
    %p191 = scmp.ne.s32.totalorder %s183, %s185
    %p192 = scmp.eq.s32.totalorder %s28, 1
    %p193 = por %p191, %p192
    %p194 = scmp.ne.s32.totalorder %s185, %s186
    %p195 = scmp.eq.s32.totalorder %s28, 0
    %p196 = por %p194, %p195
    %p197 = scmp.ne.s32.totalorder %s185, %s186
    %p198 = scmp.eq.s32.totalorder %s29, 1
    %p199 = por %p197, %p198
    %p201 = scmp.ne.s32.totalorder %s186, %s200
    %p202 = scmp.eq.s32.totalorder %s29, 0
    %p203 = por %p201, %p202
    %s205 = sadd.s32 %s204, 1
    %p208 = scmp.eq.s32.totalorder %s23, 1
    %p209 = scmp.ne.s32.totalorder %s204, %s206
    %p210 = scmp.eq.s32.totalorder %s23, 0
    %p211 = por %p209, %p210
    %p212 = scmp.ne.s32.totalorder %s204, %s206
    %p213 = scmp.eq.s32.totalorder %s28, 1
    %p214 = por %p212, %p213
    %p215 = scmp.ne.s32.totalorder %s206, %s207
    %p216 = scmp.eq.s32.totalorder %s28, 0
    %p217 = por %p215, %p216
    %p218 = scmp.ne.s32.totalorder %s206, %s207
    %p219 = scmp.eq.s32.totalorder %s29, 1
    %p220 = por %p218, %p219
    %p222 = scmp.ne.s32.totalorder %s207, %s221
    %p223 = scmp.eq.s32.totalorder %s29, 0
    %p224 = por %p222, %p223
    %s226 = sadd.s32 %s225, 1
    %p229 = scmp.eq.s32.totalorder %s23, 1
    %p230 = scmp.ne.s32.totalorder %s225, %s227
    %p231 = scmp.eq.s32.totalorder %s23, 0
    %p232 = por %p230, %p231
    %p233 = scmp.ne.s32.totalorder %s225, %s227
    %p234 = scmp.eq.s32.totalorder %s28, 1
    %p235 = por %p233, %p234
    %p236 = scmp.ne.s32.totalorder %s227, %s228
    %p237 = scmp.eq.s32.totalorder %s28, 0
    %p238 = por %p236, %p237
    %p239 = scmp.ne.s32.totalorder %s227, %s228
    %p240 = scmp.eq.s32.totalorder %s29, 1
    %p241 = por %p239, %p240
    %p243 = scmp.ne.s32.totalorder %s228, %s242
    %p244 = scmp.eq.s32.totalorder %s29, 0
    %p245 = por %p243, %p244
    %s247 = sadd.s32 %s246, 1
    %p250 = scmp.eq.s32.totalorder %s23, 1
    %p251 = scmp.ne.s32.totalorder %s246, %s248
    %p252 = scmp.eq.s32.totalorder %s23, 0
    %p253 = por %p251, %p252
    %p254 = scmp.ne.s32.totalorder %s246, %s248
    %p255 = scmp.eq.s32.totalorder %s28, 1
    %p256 = por %p254, %p255
    %p257 = scmp.ne.s32.totalorder %s248, %s249
    %p258 = scmp.eq.s32.totalorder %s28, 0
    %p259 = por %p257, %p258
    %p260 = scmp.ne.s32.totalorder %s248, %s249
    %p261 = scmp.eq.s32.totalorder %s29, 1
    %p262 = por %p260, %p261
    %p264 = scmp.ne.s32.totalorder %s249, %s263
    %p265 = scmp.eq.s32.totalorder %s29, 0
    %p266 = por %p264, %p265
    %s268 = sadd.s32 %s267, 1
    %p271 = scmp.eq.s32.totalorder %s23, 1
    %p272 = scmp.ne.s32.totalorder %s267, %s269
    %p273 = scmp.eq.s32.totalorder %s23, 0
    %p274 = por %p272, %p273
    %p275 = scmp.ne.s32.totalorder %s267, %s269
    %p276 = scmp.eq.s32.totalorder %s28, 1
    %p277 = por %p275, %p276
    %p278 = scmp.ne.s32.totalorder %s269, %s270
    %p279 = scmp.eq.s32.totalorder %s28, 0
    %p280 = por %p278, %p279
    %p281 = scmp.ne.s32.totalorder %s269, %s270
    %p282 = scmp.eq.s32.totalorder %s29, 1
    %p283 = por %p281, %p282
    %p285 = scmp.ne.s32.totalorder %s270, %s284
    %p286 = scmp.eq.s32.totalorder %s29, 0
    %p287 = por %p285, %p286
    %s289 = sadd.s32 %s288, 1
    %p292 = scmp.eq.s32.totalorder %s23, 1
    %p293 = scmp.ne.s32.totalorder %s288, %s290
    %p294 = scmp.eq.s32.totalorder %s23, 0
    %p295 = por %p293, %p294
    %p296 = scmp.ne.s32.totalorder %s288, %s290
    %p297 = scmp.eq.s32.totalorder %s28, 1
    %p298 = por %p296, %p297
    %p299 = scmp.ne.s32.totalorder %s290, %s291
    %p300 = scmp.eq.s32.totalorder %s28, 0
    %p301 = por %p299, %p300
    %p302 = scmp.ne.s32.totalorder %s290, %s291
    %p303 = scmp.eq.s32.totalorder %s29, 1
    %p304 = por %p302, %p303
    %p306 = scmp.ne.s32.totalorder %s291, %s305
    %p307 = scmp.eq.s32.totalorder %s29, 0
    %p308 = por %p306, %p307
    %s310 = sadd.s32 %s309, 1
    %p313 = scmp.eq.s32.totalorder %s23, 1
    %p314 = scmp.ne.s32.totalorder %s309, %s311
    %p315 = scmp.eq.s32.totalorder %s23, 0
    %p316 = por %p314, %p315
    %p317 = scmp.ne.s32.totalorder %s309, %s311
    %p318 = scmp.eq.s32.totalorder %s28, 1
    %p319 = por %p317, %p318
    %p320 = scmp.ne.s32.totalorder %s311, %s312
    %p321 = scmp.eq.s32.totalorder %s28, 0
    %p322 = por %p320, %p321
    %p323 = scmp.ne.s32.totalorder %s311, %s312
    %p324 = scmp.eq.s32.totalorder %s29, 1
    %p325 = por %p323, %p324
    %p327 = scmp.ne.s32.totalorder %s312, %s326
    %p328 = scmp.eq.s32.totalorder %s29, 0
    %p329 = por %p327, %p328
    %s331 = sadd.s32 %s330, 1
    %p334 = scmp.eq.s32.totalorder %s23, 1
    %p335 = scmp.ne.s32.totalorder %s330, %s332
    %p336 = scmp.eq.s32.totalorder %s23, 0
    %p337 = por %p335, %p336
    %p338 = scmp.ne.s32.totalorder %s330, %s332
    %p339 = scmp.eq.s32.totalorder %s28, 1
    %p340 = por %p338, %p339
    %p341 = scmp.ne.s32.totalorder %s332, %s333
    %p342 = scmp.eq.s32.totalorder %s28, 0
    %p343 = por %p341, %p342
    %p344 = scmp.ne.s32.totalorder %s332, %s333
    %p345 = scmp.eq.s32.totalorder %s29, 1
    %p346 = por %p344, %p345
    %p348 = scmp.ne.s32.totalorder %s333, %s347
    %p349 = scmp.eq.s32.totalorder %s29, 0
    %p350 = por %p348, %p349
    %s352 = sadd.s32 %s351, 1
    %p355 = scmp.eq.s32.totalorder %s23, 1
    %p356 = scmp.ne.s32.totalorder %s351, %s353
    %p357 = scmp.eq.s32.totalorder %s23, 0
    %p358 = por %p356, %p357
    %p359 = scmp.ne.s32.totalorder %s351, %s353
    %p360 = scmp.eq.s32.totalorder %s28, 1
    %p361 = por %p359, %p360
    %p362 = scmp.ne.s32.totalorder %s353, %s354
    %p363 = scmp.eq.s32.totalorder %s28, 0
    %p364 = por %p362, %p363
    %p365 = scmp.ne.s32.totalorder %s353, %s354
    %p366 = scmp.eq.s32.totalorder %s29, 1
    %p367 = por %p365, %p366
    %p369 = scmp.ne.s32.totalorder %s354, %s368
    %p370 = scmp.eq.s32.totalorder %s29, 0
    %p371 = por %p369, %p370
    %s373 = sadd.s32 %s372, 1
    %p376 = scmp.eq.s32.totalorder %s23, 1
    %p377 = scmp.ne.s32.totalorder %s372, %s374
    %p378 = scmp.eq.s32.totalorder %s23, 0
    %p379 = por %p377, %p378
    %p380 = scmp.ne.s32.totalorder %s372, %s374
    %p381 = scmp.eq.s32.totalorder %s28, 1
    %p382 = por %p380, %p381
    %p383 = scmp.ne.s32.totalorder %s374, %s375
    %p384 = scmp.eq.s32.totalorder %s28, 0
    %p385 = por %p383, %p384
    %p386 = scmp.ne.s32.totalorder %s374, %s375
    %p387 = scmp.eq.s32.totalorder %s29, 1
    %p388 = por %p386, %p387
    %p390 = scmp.ne.s32.totalorder %s375, %s389
    %p391 = scmp.eq.s32.totalorder %s29, 0
    %p392 = por %p390, %p391
    %s393 = ssub.s32 %s23, %s30
    %p394 = scmp.eq.s32.totalorder %s393, 0
    %s396 = sadd.s32 %s395, 1
    %s397 = scalar_select %p394, %s395, %s396
    %p400 = pneg %p394
    %p401 = scmp.eq.s32.totalorder %s23, 1
    %p402 = por %p400, %p401
    %p403 = scmp.ne.s32.totalorder %s395, %s398
    %p404 = scmp.eq.s32.totalorder %s23, 0
    %p405 = por %p403, %p404
    %p406 = scmp.ne.s32.totalorder %s395, %s398
    %p407 = scmp.eq.s32.totalorder %s28, 1
    %p408 = por %p406, %p407
    %p409 = scmp.ne.s32.totalorder %s398, %s399
    %p410 = scmp.eq.s32.totalorder %s28, 0
    %p411 = por %p409, %p410
    %p412 = scmp.ne.s32.totalorder %s398, %s399
    %p413 = scmp.eq.s32.totalorder %s29, 1
    %p414 = por %p412, %p413
    %p416 = scmp.ne.s32.totalorder %s399, %s415
    %p417 = scmp.eq.s32.totalorder %s29, 0
    %p418 = por %p416, %p417
    %p419 = scmp.le.s32.totalorder 1, %s23
    %p420 = scmp.lt.s32.totalorder %s23, 3
    %p421 = pnand %p419, %p420
    %p422 = pneg %p421
    // Predicated region
    $region9: #{tpu_custom_call.1} parent=5 // pred_check
      _
    $region10: #{tpu_custom_call.1} parent=5 // pred_check_branch
      %424 = sbr.rel (%p421) target = $region12
    $region11: #{tpu_custom_call.1} parent=5 // pred_region
      %s425 = ssub.s32 %s23, 1
      // Predicated region
      $region13: #{tpu_custom_call.1} parent=11 // pred_check
        %p426 = pneg %p70
      $region14: #{tpu_custom_call.1} parent=11 // pred_check_branch
        %428 = sbr.rel (%p426) target = $region16
      $region15: #{tpu_custom_call.1} parent=11 // pred_region
        _
      $region16: #{tpu_custom_call.1} parent=11 // pred_fallthru
        _
      // Predicated region
      $region17: #{tpu_custom_call.1} parent=11 // pred_check
        %p429 = pneg %p91
      $region18: #{tpu_custom_call.1} parent=11 // pred_check_branch
        %431 = sbr.rel (%p429) target = $region20
      $region19: #{tpu_custom_call.1} parent=11 // pred_region
        _
      $region20: #{tpu_custom_call.1} parent=11 // pred_fallthru
        _
      // Predicated region
      $region21: #{tpu_custom_call.1} parent=11 // pred_check
        %p432 = pneg %p112
      $region22: #{tpu_custom_call.1} parent=11 // pred_check_branch
        %434 = sbr.rel (%p432) target = $region24
      $region23: #{tpu_custom_call.1} parent=11 // pred_region
        _
      $region24: #{tpu_custom_call.1} parent=11 // pred_fallthru
        _
      // Predicated region
      $region25: #{tpu_custom_call.1} parent=11 // pred_check
        %p435 = pneg %p133
      $region26: #{tpu_custom_call.1} parent=11 // pred_check_branch
        %437 = sbr.rel (%p435) target = $region28
      $region27: #{tpu_custom_call.1} parent=11 // pred_region
        _
      $region28: #{tpu_custom_call.1} parent=11 // pred_fallthru
        _
      // Predicated region
      $region29: #{tpu_custom_call.1} parent=11 // pred_check
        %p438 = pneg %p154
      $region30: #{tpu_custom_call.1} parent=11 // pred_check_branch
        %440 = sbr.rel (%p438) target = $region32
      $region31: #{tpu_custom_call.1} parent=11 // pred_region
        _
      $region32: #{tpu_custom_call.1} parent=11 // pred_fallthru
        _
      // Predicated region
      $region33: #{tpu_custom_call.1} parent=11 // pred_check
        %p441 = pneg %p175
      $region34: #{tpu_custom_call.1} parent=11 // pred_check_branch
        %443 = sbr.rel (%p441) target = $region36
      $region35: #{tpu_custom_call.1} parent=11 // pred_region
        _
      $region36: #{tpu_custom_call.1} parent=11 // pred_fallthru
        _
      // Predicated region
      $region37: #{tpu_custom_call.1} parent=11 // pred_check
        %p444 = pneg %p196
      $region38: #{tpu_custom_call.1} parent=11 // pred_check_branch
        %446 = sbr.rel (%p444) target = $region40
      $region39: #{tpu_custom_call.1} parent=11 // pred_region
        _
      $region40: #{tpu_custom_call.1} parent=11 // pred_fallthru
        _
      // Predicated region
      $region41: #{tpu_custom_call.1} parent=11 // pred_check
        %p447 = pneg %p217
      $region42: #{tpu_custom_call.1} parent=11 // pred_check_branch
        %449 = sbr.rel (%p447) target = $region44
      $region43: #{tpu_custom_call.1} parent=11 // pred_region
        _
      $region44: #{tpu_custom_call.1} parent=11 // pred_fallthru
        _
      // Predicated region
      $region45: #{tpu_custom_call.1} parent=11 // pred_check
        %p450 = pneg %p238
      $region46: #{tpu_custom_call.1} parent=11 // pred_check_branch
        %452 = sbr.rel (%p450) target = $region48
      $region47: #{tpu_custom_call.1} parent=11 // pred_region
        _
      $region48: #{tpu_custom_call.1} parent=11 // pred_fallthru
        _
      // Predicated region
      $region49: #{tpu_custom_call.1} parent=11 // pred_check
        %p453 = pneg %p259
      $region50: #{tpu_custom_call.1} parent=11 // pred_check_branch
        %455 = sbr.rel (%p453) target = $region52
      $region51: #{tpu_custom_call.1} parent=11 // pred_region
        _
      $region52: #{tpu_custom_call.1} parent=11 // pred_fallthru
        _
      // Predicated region
      $region53: #{tpu_custom_call.1} parent=11 // pred_check
        %p456 = pneg %p280
      $region54: #{tpu_custom_call.1} parent=11 // pred_check_branch
        %458 = sbr.rel (%p456) target = $region56
      $region55: #{tpu_custom_call.1} parent=11 // pred_region
        _
      $region56: #{tpu_custom_call.1} parent=11 // pred_fallthru
        _
      // Predicated region
      $region57: #{tpu_custom_call.1} parent=11 // pred_check
        %p459 = pneg %p301
      $region58: #{tpu_custom_call.1} parent=11 // pred_check_branch
        %461 = sbr.rel (%p459) target = $region60
      $region59: #{tpu_custom_call.1} parent=11 // pred_region
        _
      $region60: #{tpu_custom_call.1} parent=11 // pred_fallthru
        _
      // Predicated region
      $region61: #{tpu_custom_call.1} parent=11 // pred_check
        %p462 = pneg %p322
      $region62: #{tpu_custom_call.1} parent=11 // pred_check_branch
        %464 = sbr.rel (%p462) target = $region64
      $region63: #{tpu_custom_call.1} parent=11 // pred_region
        _
      $region64: #{tpu_custom_call.1} parent=11 // pred_fallthru
        _
      // Predicated region
      $region65: #{tpu_custom_call.1} parent=11 // pred_check
        %p465 = pneg %p343
      $region66: #{tpu_custom_call.1} parent=11 // pred_check_branch
        %467 = sbr.rel (%p465) target = $region68
      $region67: #{tpu_custom_call.1} parent=11 // pred_region
        _
      $region68: #{tpu_custom_call.1} parent=11 // pred_fallthru
        _
      // Predicated region
      $region69: #{tpu_custom_call.1} parent=11 // pred_check
        %p468 = pneg %p364
      $region70: #{tpu_custom_call.1} parent=11 // pred_check_branch
        %470 = sbr.rel (%p468) target = $region72
      $region71: #{tpu_custom_call.1} parent=11 // pred_region
        _
      $region72: #{tpu_custom_call.1} parent=11 // pred_fallthru
        _
      // Predicated region
      $region73: #{tpu_custom_call.1} parent=11 // pred_check
        %p471 = pneg %p385
      $region74: #{tpu_custom_call.1} parent=11 // pred_check_branch
        %473 = sbr.rel (%p471) target = $region76
      $region75: #{tpu_custom_call.1} parent=11 // pred_region
        _
      $region76: #{tpu_custom_call.1} parent=11 // pred_fallthru
        _
    $region12: #{tpu_custom_call.1} parent=5 // pred_fallthru
      _
    %p474 = scmp.lt.s32.totalorder %s23, 2
    // Predicated region
    $region77: #{tpu_custom_call.1} parent=5 // pred_check
      %p475 = pneg %p474
    $region78: #{tpu_custom_call.1} parent=5 // pred_check_branch
      %477 = sbr.rel (%p475) target = $region80
    $region79: #{tpu_custom_call.1} parent=5 // pred_region
      // Predicated region
      $region81: #{tpu_custom_call.1} parent=79 // pred_check
        %p478 = pneg %p43
      $region82: #{tpu_custom_call.1} parent=79 // pred_check_branch
        %480 = sbr.rel (%p478) target = $region84
      $region83: #{tpu_custom_call.1} parent=79 // pred_region
        %s481 = smul.u32 8, %s23
        %p482 = scmp.lt.s32.totalorder %s481, 15
        %s483 = scalar_select %p482, %s481, 15
        %s484 = smul.addr %s483, 8
        %s485 = scalar_lea.vmem %s0, %s484
        %s486 = smul.u32 8, %s23
      $region84: #{tpu_custom_call.1} parent=79 // pred_fallthru
        _
    $region80: #{tpu_custom_call.1} parent=5 // pred_fallthru
      _
    %p487 = scmp.le.s32.totalorder 1, %s23
    %p488 = scmp.lt.s32.totalorder %s23, 3
    %p489 = pnand %p487, %p488
    %p490 = pneg %p489
    // Predicated region
    $region85: #{tpu_custom_call.1} parent=5 // pred_check
      _
    $region86: #{tpu_custom_call.1} parent=5 // pred_check_branch
      %492 = sbr.rel (%p489) target = $region88
    $region87: #{tpu_custom_call.1} parent=5 // pred_region
      %s493 = ssub.s32 %s23, 1
      %s494 = smul.u32 8, %s28
      %p495 = scmp.lt.s32.totalorder %s494, 15
      %s496 = scalar_select %p495, %s494, 15
      %s497 = smul.addr %s496, 8
      %s498 = scalar_lea.vmem %s0, %s497
      %p499 = pneg %p49
      %p500 = pneg %p46
      %p501 = pneg %p70
      %p502 = pneg %p67
      %p503 = pneg %p91
      %p504 = pneg %p88
      %p505 = pneg %p112
      %p506 = pneg %p109
      %p507 = pneg %p133
      %p508 = pneg %p130
      %p509 = pneg %p154
      %p510 = pneg %p151
      %p511 = pneg %p175
      %p512 = pneg %p172
      %p513 = pneg %p196
      %p514 = pneg %p193
      %p515 = pneg %p217
      %p516 = pneg %p214
      %p517 = pneg %p238
      %p518 = pneg %p235
      %p519 = pneg %p259
      %p520 = pneg %p256
      %p521 = pneg %p280
      %p522 = pneg %p277
      %p523 = pneg %p301
      %p524 = pneg %p298
      %p525 = pneg %p322
      %p526 = pneg %p319
      %p527 = pneg %p343
      %p528 = pneg %p340
      %p529 = pneg %p364
      %p530 = pneg %p361
      %p531 = pneg %p385
      %p532 = pneg %p382
      %p533 = pneg %p411
      %p534 = pneg %p408
      %p535 = scmp.lt.s32.totalorder %s28, 1
      %s536 = scalar_select %p535, %s28, 1
      %s537 = smul.addr %s536, 8
      %s538 = scalar_lea.vmem %s17, %s537
      %s539 = smul.u32 8, %s28
      %p540 = scmp.lt.s32.totalorder %s539, 15
      %s541 = scalar_select %p540, %s539, 15
      %s542 = smul.addr %s541, 8
      %s543 = scalar_lea.vmem %s0, %s542
      %s544 = smul.u32 8, %s28
      %p545 = scmp.lt.s32.totalorder %s28, 1
      %s546 = scalar_select %p545, %s28, 1
      %s547 = smul.addr %s546, 8
      %s548 = scalar_lea.vmem %s17, %s547
      %v550 = vld [vmem:[%s3] sm:$0x1]
      %v551 = vld [vmem:[%s4] sm:$0x1]
      %v552 = vld [vmem:[%s9] sm:$0x1]
      %v553 = vld [vmem:[%s10] sm:$0x1]
      %v554 = vld [vmem:[%s6] sm:$0x1]
      %v555 = vld [vmem:[%s8] sm:$0x1]
      %v556 = vld [vmem:[%s12] sm:$0x1]
      %v557 = vld [vmem:[%s14] sm:$0x1]
      %v558 = vld [vmem:[%s543] sm:$0xff]
      %v559 = vld [vmem:[%s543 + $0x8] sm:$0xff]
      %v560 = vld [vmem:[%s543 + $0x10] sm:$0xff]
      %v561 = vld [vmem:[%s543 + $0x18] sm:$0xff]
      %v562 = vld [vmem:[%s543 + $0x20] sm:$0xff]
      %v563 = vld [vmem:[%s543 + $0x28] sm:$0xff]
      %v564 = vld [vmem:[%s543 + $0x30] sm:$0xff]
      %v565 = vld [vmem:[%s543 + $0x38] sm:$0xff]
      %v566 = vpack.c.bf16 %v559, %v558
      %v567 = vpack.c.bf16 %v561, %v560
      %v568 = vpack.c.bf16 %v563, %v562
      %v569 = vpack.c.bf16 %v565, %v564
      %v570 = vld [vmem:[%s2] sm:$0xf]
      %v571 = vld [vmem:[%s2 + $0x4] sm:$0xf]
      %v572 = vld [vmem:[%s1] sm:$0xff]
      %v573 = vld [vmem:[%s1 + $0x8] sm:$0xff]
      %v574 = vld [vmem:[%s1 + $0x10] sm:$0xff]
      %v575 = vld [vmem:[%s1 + $0x18] sm:$0xff]
      %v576 = vld [vmem:[%s1 + $0x20] sm:$0xff]
      %v577 = vld [vmem:[%s1 + $0x28] sm:$0xff]
      %v578 = vld [vmem:[%s1 + $0x30] sm:$0xff]
      %v579 = vld [vmem:[%s1 + $0x38] sm:$0xff]
      %v582 = vunpack.c.l.b16 %v570
      %v583 = vunpack.c.l.b16 %v571
      %v584 = vpack.c.b16 %v583, %v582
      %vm586 = vcmask 130048
      %v588 = vsel %vm586, %v566, 0
      %v591 = vsel %vm586, %v567, 0
      %v594 = vsel %vm586, %v568, 0
      %v597 = vsel %vm586, %v569, 0
      %599 = vmatprep.subr.bf16.mxu0 0
      %600 = vmatpush1.bf16.msra.mxu0 0
      %601 = vmatprep.subr.bf16.mxu0 0
      %602 = vmatpush1.bf16.msra.mxu0 0
      %603 = vmatprep.subr.bf16.mxu0 0
      %604 = vmatpush1.bf16.msra.mxu0 0
      %605 = vmatprep.subr.bf16.mxu0 0
      %606 = vmatpush1.bf16.msra.mxu0 0
      %607 = vmatprep.subr.bf16.mxu0 0
      %608 = vmatpush1.bf16.msra.mxu0 0
      %609 = vmatprep.subr.bf16.mxu0 0
      %610 = vmatpush1.bf16.msra.mxu0 0
      %611 = vmatprep.subr.bf16.mxu0 0
      %612 = vmatpush1.bf16.msra.mxu0 0
      %613 = vmatprep.subr.bf16.mxu0 0
      %614 = vmatpush1.bf16.msra.mxu0 %v584
      %615 = vmatprep.subr.bf16.mxu0 0
      %616 = vmatpush2.bf16.msra.mxu0 0
      %617 = vmatprep.subr.bf16.mxu0 0
      %618 = vmatpush2.bf16.msra.mxu0 0
      %619 = vmatprep.subr.bf16.mxu0 0
      %620 = vmatpush2.bf16.msra.mxu0 0
      %621 = vmatprep.subr.bf16.mxu0 0
      %622 = vmatpush2.bf16.msra.mxu0 0
      %623 = vmatprep.subr.bf16.mxu0 0
      %624 = vmatpush2.bf16.msra.mxu0 0
      %625 = vmatprep.subr.bf16.mxu0 0
      %626 = vmatpush2.bf16.msra.mxu0 0
      %627 = vmatprep.subr.bf16.mxu0 0
      %628 = vmatpush2.bf16.msra.mxu0 0
      %629 = vmatprep.subr.bf16.mxu0 0
      %630 = vmatpush2.bf16.msra.mxu0 0
      %631 = vmatprep.mubr.bf16.mxu0 0
      %632 = vmatmul.mubr.bf16.gmra.mxu0 %v588
      %v633 = vpop.f32.mrf.mxu0
      %v634 = vadd.f32 %v572, %v633
      %v635 = vpop.f32.mrf.mxu0
      %v636 = vpop.f32.mrf.mxu0
      %v637 = vadd.f32 %v573, %v636
      %v638 = vpop.f32.mrf.mxu0
      %639 = vmatprep.mubr.bf16.mxu0 0
      %640 = vmatmul.mubr.bf16.gmra.mxu0 %v591
      %v641 = vpop.f32.mrf.mxu0
      %v642 = vadd.f32 %v574, %v641
      %v643 = vpop.f32.mrf.mxu0
      %v644 = vpop.f32.mrf.mxu0
      %v645 = vadd.f32 %v575, %v644
      %v646 = vpop.f32.mrf.mxu0
      %647 = vmatprep.mubr.bf16.mxu0 0
      %648 = vmatmul.mubr.bf16.gmra.mxu0 %v594
      %v649 = vpop.f32.mrf.mxu0
      %v650 = vadd.f32 %v576, %v649
      %v651 = vpop.f32.mrf.mxu0
      %v652 = vpop.f32.mrf.mxu0
      %v653 = vadd.f32 %v577, %v652
      %v654 = vpop.f32.mrf.mxu0
      %655 = vmatprep.mubr.bf16.mxu0 0
      %656 = vmatmul.mubr.bf16.gmra.mxu0 %v597
      %v657 = vpop.f32.mrf.mxu0
      %v658 = vadd.f32 %v578, %v657
      %v659 = vpop.f32.mrf.mxu0
      %v660 = vpop.f32.mrf.mxu0
      %v661 = vadd.f32 %v579, %v660
      %v662 = vpop.f32.mrf.mxu0
      %663 = vdwg.mxu0
      %vm664 = vcmask 261120
      %v665 = vsel %vm664, %v634, 0.0
      %666 = vadd.xlane.f32.xlu0 %v665
      %v667 = vpop.xlane.xlu0 %666
      %v668 = vsel %vm664, %v637, 0.0
      %669 = vadd.xlane.f32.xlu0 %v668
      %v670 = vpop.xlane.xlu0 %669
      %v671 = vsel %vm664, %v642, 0.0
      %672 = vadd.xlane.f32.xlu0 %v671
      %v673 = vpop.xlane.xlu0 %672
      %v674 = vsel %vm664, %v645, 0.0
      %675 = vadd.xlane.f32.xlu0 %v674
      %v676 = vpop.xlane.xlu0 %675
      %v677 = vsel %vm664, %v650, 0.0
      %678 = vadd.xlane.f32.xlu0 %v677
      %v679 = vpop.xlane.xlu0 %678
      %v680 = vsel %vm664, %v653, 0.0
      %681 = vadd.xlane.f32.xlu0 %v680
      %v682 = vpop.xlane.xlu0 %681
      %v683 = vsel %vm664, %v658, 0.0
      %684 = vadd.xlane.f32.xlu0 %v683
      %v685 = vpop.xlane.xlu0 %684
      %v686 = vsel %vm664, %v661, 0.0
      %687 = vadd.xlane.f32.xlu0 %v686
      %v688 = vpop.xlane.xlu0 %687
      %v689 = vrcp.pop 32.0
      %v690 = vmul.f32 %v667, %v689
      %v691 = vmul.f32 %v670, %v689
      %v692 = vmul.f32 %v673, %v689
      %v693 = vmul.f32 %v676, %v689
      %v694 = vmul.f32 %v679, %v689
      %v695 = vmul.f32 %v682, %v689
      %v696 = vmul.f32 %v685, %v689
      %v697 = vmul.f32 %v688, %v689
      %v698 = vsub.f32 %v634, %v690
      %v699 = vsub.f32 %v637, %v691
      %v700 = vsub.f32 %v642, %v692
      %v701 = vsub.f32 %v645, %v693
      %v702 = vsub.f32 %v650, %v694
      %v703 = vsub.f32 %v653, %v695
      %v704 = vsub.f32 %v658, %v696
      %v705 = vsub.f32 %v661, %v697
      %v706 = vmul.f32 %v698, %v698
      %v707 = vmul.f32 %v699, %v699
      %v708 = vmul.f32 %v700, %v700
      %v709 = vmul.f32 %v701, %v701
      %v710 = vmul.f32 %v702, %v702
      %v711 = vmul.f32 %v703, %v703
      %v712 = vmul.f32 %v704, %v704
      %v713 = vmul.f32 %v705, %v705
      %v714 = vsel %vm664, %v706, 0.0
      %715 = vadd.xlane.f32.xlu0 %v714
      %v716 = vpop.xlane.xlu0 %715
      %v717 = vsel %vm664, %v707, 0.0
      %718 = vadd.xlane.f32.xlu0 %v717
      %v719 = vpop.xlane.xlu0 %718
      %v720 = vsel %vm664, %v708, 0.0
      %721 = vadd.xlane.f32.xlu0 %v720
      %v722 = vpop.xlane.xlu0 %721
      %v723 = vsel %vm664, %v709, 0.0
      %724 = vadd.xlane.f32.xlu0 %v723
      %v725 = vpop.xlane.xlu0 %724
      %v726 = vsel %vm664, %v710, 0.0
      %727 = vadd.xlane.f32.xlu0 %v726
      %v728 = vpop.xlane.xlu0 %727
      %v729 = vsel %vm664, %v711, 0.0
      %730 = vadd.xlane.f32.xlu0 %v729
      %v731 = vpop.xlane.xlu0 %730
      %v732 = vsel %vm664, %v712, 0.0
      %733 = vadd.xlane.f32.xlu0 %v732
      %v734 = vpop.xlane.xlu0 %733
      %v735 = vsel %vm664, %v713, 0.0
      %736 = vadd.xlane.f32.xlu0 %v735
      %v737 = vpop.xlane.xlu0 %736
      %v738 = vmul.f32 %v716, %v689
      %v739 = vmul.f32 %v719, %v689
      %v740 = vmul.f32 %v722, %v689
      %v741 = vmul.f32 %v725, %v689
      %v742 = vmul.f32 %v728, %v689
      %v743 = vmul.f32 %v731, %v689
      %v744 = vmul.f32 %v734, %v689
      %v745 = vmul.f32 %v737, %v689
      %v746 = vadd.f32 %v738, 1e-05
      %v747 = vadd.f32 %v739, 1e-05
      %v748 = vadd.f32 %v740, 1e-05
      %v749 = vadd.f32 %v741, 1e-05
      %v750 = vadd.f32 %v742, 1e-05
      %v751 = vadd.f32 %v743, 1e-05
      %v752 = vadd.f32 %v744, 1e-05
      %v753 = vadd.f32 %v745, 1e-05
      %v754 = vrsqrt.pop %v746
      %v755 = vrsqrt.pop %v747
      %v756 = vrsqrt.pop %v748
      %v757 = vrsqrt.pop %v749
      %v758 = vrsqrt.pop %v750
      %v759 = vrsqrt.pop %v751
      %v760 = vrsqrt.pop %v752
      %v761 = vrsqrt.pop %v753
      %v762 = vmul.f32 %v698, %v754
      %v763 = vmul.f32 %v699, %v755
      %v764 = vmul.f32 %v700, %v756
      %v765 = vmul.f32 %v701, %v757
      %v766 = vmul.f32 %v702, %v758
      %v767 = vmul.f32 %v703, %v759
      %v768 = vmul.f32 %v704, %v760
      %v769 = vmul.f32 %v705, %v761
      %v771 = vlaneseq
      %v772 = vshrl.u32 %v771, 7
      %v773 = vsub.s32 0, %v772
      %v774 = vrot.slane %v550, %v773
      %v776 = vmul.f32 %v762, %v774
      %v777 = vmul.f32 %v763, %v774
      %v778 = vmul.f32 %v764, %v774
      %v779 = vmul.f32 %v765, %v774
      %v780 = vmul.f32 %v766, %v774
      %v781 = vmul.f32 %v767, %v774
      %v782 = vmul.f32 %v768, %v774
      %v783 = vmul.f32 %v769, %v774
      %v785 = vlaneseq
      %v786 = vshrl.u32 %v785, 7
      %v787 = vsub.s32 0, %v786
      %v788 = vrot.slane %v551, %v787
      %v790 = vadd.f32 %v776, %v788
      %v791 = vadd.f32 %v777, %v788
      %v792 = vadd.f32 %v778, %v788
      %v793 = vadd.f32 %v779, %v788
      %v794 = vadd.f32 %v780, %v788
      %v795 = vadd.f32 %v781, %v788
      %v796 = vadd.f32 %v782, %v788
      %v797 = vadd.f32 %v783, %v788
      %v798 = vpack.c.bf16 %v791, %v790
      %v799 = vpack.c.bf16 %v793, %v792
      %v800 = vpack.c.bf16 %v795, %v794
      %v801 = vpack.c.bf16 %v797, %v796
      %v802 = vld [vmem:[%s5] sm:$0xf]
      %v803 = vld [vmem:[%s5 + $0x4] sm:$0xf]
      %v804 = vld [vmem:[%s5 + $0x8] sm:$0xf]
      %v805 = vld [vmem:[%s5 + $0xc] sm:$0xf]
      %v807 = vlaneseq
      %v808 = vshrl.u32 %v807, 7
      %v809 = vsub.s32 0, %v808
      %v810 = vrot.slane %v554, %v809
      %v816 = vunpack.c.l.b16 %v802
      %v817 = vunpack.c.l.b16 %v803
      %v818 = vunpack.c.l.b16 %v804
      %v819 = vunpack.c.l.b16 %v805
      %v820 = vpack.c.b16 %v817, %v816
      %v821 = vpack.c.b16 %v819, %v818
      %v825 = vsel %vm664, %v798, 0
      %v828 = vsel %vm664, %v799, 0
      %v831 = vsel %vm664, %v800, 0
      %v834 = vsel %vm664, %v801, 0
      %836 = vmatprep.subr.bf16.mxu0 0
      %837 = vmatpush1.bf16.msra.mxu0 0
      %838 = vmatprep.subr.bf16.mxu0 0
      %839 = vmatpush1.bf16.msra.mxu0 0
      %840 = vmatprep.subr.bf16.mxu0 0
      %841 = vmatpush1.bf16.msra.mxu0 0
      %842 = vmatprep.subr.bf16.mxu0 0
      %843 = vmatpush1.bf16.msra.mxu0 0
      %844 = vmatprep.subr.bf16.mxu0 0
      %845 = vmatpush1.bf16.msra.mxu0 0
      %846 = vmatprep.subr.bf16.mxu0 0
      %847 = vmatpush1.bf16.msra.mxu0 0
      %848 = vmatprep.subr.bf16.mxu0 0
      %849 = vmatpush1.bf16.msra.mxu0 %v821
      %850 = vmatprep.subr.bf16.mxu0 0
      %851 = vmatpush1.bf16.msra.mxu0 %v820
      %852 = vmatprep.subr.bf16.mxu0 0
      %853 = vmatpush2.bf16.msra.mxu0 0
      %854 = vmatprep.subr.bf16.mxu0 0
      %855 = vmatpush2.bf16.msra.mxu0 0
      %856 = vmatprep.subr.bf16.mxu0 0
      %857 = vmatpush2.bf16.msra.mxu0 0
      %858 = vmatprep.subr.bf16.mxu0 0
      %859 = vmatpush2.bf16.msra.mxu0 0
      %860 = vmatprep.subr.bf16.mxu0 0
      %861 = vmatpush2.bf16.msra.mxu0 0
      %862 = vmatprep.subr.bf16.mxu0 0
      %863 = vmatpush2.bf16.msra.mxu0 0
      %864 = vmatprep.subr.bf16.mxu0 0
      %865 = vmatpush2.bf16.msra.mxu0 0
      %866 = vmatprep.subr.bf16.mxu0 0
      %867 = vmatpush2.bf16.msra.mxu0 0
      %868 = vmatprep.mubr.bf16.mxu0 0
      %869 = vmatmul.mubr.bf16.gmra.mxu0 %v825
      %v870 = vpop.f32.mrf.mxu0
      %v871 = vadd.f32 %v810, %v870
      %v872 = vpop.f32.mrf.mxu0
      %v873 = vpop.f32.mrf.mxu0
      %v874 = vadd.f32 %v810, %v873
      %v875 = vpop.f32.mrf.mxu0
      %876 = vmatprep.mubr.bf16.mxu0 0
      %877 = vmatmul.mubr.bf16.gmra.mxu0 %v828
      %v878 = vpop.f32.mrf.mxu0
      %v879 = vadd.f32 %v810, %v878
      %v880 = vpop.f32.mrf.mxu0
      %v881 = vpop.f32.mrf.mxu0
      %v882 = vadd.f32 %v810, %v881
      %v883 = vpop.f32.mrf.mxu0
      %884 = vmatprep.mubr.bf16.mxu0 0
      %885 = vmatmul.mubr.bf16.gmra.mxu0 %v831
      %v886 = vpop.f32.mrf.mxu0
      %v887 = vadd.f32 %v810, %v886
      %v888 = vpop.f32.mrf.mxu0
      %v889 = vpop.f32.mrf.mxu0
      %v890 = vadd.f32 %v810, %v889
      %v891 = vpop.f32.mrf.mxu0
      %892 = vmatprep.mubr.bf16.mxu0 0
      %893 = vmatmul.mubr.bf16.gmra.mxu0 %v834
      %v894 = vpop.f32.mrf.mxu0
      %v895 = vadd.f32 %v810, %v894
      %v896 = vpop.f32.mrf.mxu0
      %v897 = vpop.f32.mrf.mxu0
      %v898 = vadd.f32 %v810, %v897
      %v899 = vpop.f32.mrf.mxu0
      %900 = vdwg.mxu0
      %v901 = vmul.f32 %v871, 0.35355338
      %v902 = vmul.f32 %v874, 0.35355338
      %v903 = vmul.f32 %v879, 0.35355338
      %v904 = vmul.f32 %v882, 0.35355338
      %v905 = vmul.f32 %v887, 0.35355338
      %v906 = vmul.f32 %v890, 0.35355338
      %v907 = vmul.f32 %v895, 0.35355338
      %v908 = vmul.f32 %v898, 0.35355338
      %v909 = vpack.c.bf16 %v901, %v901
      %v910 = vpack.c.bf16 %v902, %v902
      %v911 = vpack.c.bf16 %v903, %v903
      %v912 = vpack.c.bf16 %v904, %v904
      %v913 = vpack.c.bf16 %v905, %v905
      %v914 = vpack.c.bf16 %v906, %v906
      %v915 = vpack.c.bf16 %v907, %v907
      %v916 = vpack.c.bf16 %v908, %v908
      %v917 = vpack.c.bf16 %v871, %v871
      %v918 = vpack.c.bf16 %v874, %v874
      %v919 = vpack.c.bf16 %v879, %v879
      %v920 = vpack.c.bf16 %v882, %v882
      %v921 = vpack.c.bf16 %v887, %v887
      %v922 = vpack.c.bf16 %v890, %v890
      %v923 = vpack.c.bf16 %v895, %v895
      %v924 = vpack.c.bf16 %v898, %v898
      %926 = vrot.lane.b32.xlu0 %v917, 96
      %v927 = vpop.permute.xlu0 %926
      %vm928 = vcmask 64512
      %v930 = vsel %vm928, %v909, 0
      %v933 = vsel %vm928, %v927, 0
      %935 = vmatprep.subr.bf16.mxu0 0
      %936 = vmatpush1.bf16.xpose.msra.mxu0 0
      %937 = vmatprep.subr.bf16.mxu0 0
      %938 = vmatpush1.bf16.xpose.msra.mxu0 0
      %939 = vmatprep.subr.bf16.mxu0 0
      %940 = vmatpush1.bf16.xpose.msra.mxu0 0
      %941 = vmatprep.subr.bf16.mxu0 0
      %942 = vmatpush1.bf16.xpose.msra.mxu0 0
      %943 = vmatprep.subr.bf16.mxu0 0
      %944 = vmatpush1.bf16.xpose.msra.mxu0 0
      %945 = vmatprep.subr.bf16.mxu0 0
      %946 = vmatpush1.bf16.xpose.msra.mxu0 0
      %947 = vmatprep.subr.bf16.mxu0 0
      %948 = vmatpush1.bf16.xpose.msra.mxu0 0
      %949 = vmatprep.subr.bf16.mxu0 0
      %950 = vmatpush1.bf16.xpose.msra.mxu0 %v933
      %951 = vmatprep.subr.bf16.mxu0 0
      %952 = vmatpush2.bf16.xpose.msra.mxu0 0
      %953 = vmatprep.subr.bf16.mxu0 0
      %954 = vmatpush2.bf16.xpose.msra.mxu0 0
      %955 = vmatprep.subr.bf16.mxu0 0
      %956 = vmatpush2.bf16.xpose.msra.mxu0 0
      %957 = vmatprep.subr.bf16.mxu0 0
      %958 = vmatpush2.bf16.xpose.msra.mxu0 0
      %959 = vmatprep.subr.bf16.mxu0 0
      %960 = vmatpush2.bf16.xpose.msra.mxu0 0
      %961 = vmatprep.subr.bf16.mxu0 0
      %962 = vmatpush2.bf16.xpose.msra.mxu0 0
      %963 = vmatprep.subr.bf16.mxu0 0
      %964 = vmatpush2.bf16.xpose.msra.mxu0 0
      %965 = vmatprep.subr.bf16.mxu0 0
      %966 = vmatpush2.bf16.xpose.msra.mxu0 0
      %967 = vmatprep.mubr.bf16.mxu0 0
      %968 = vmatmul.mubr.bf16.gmra.mxu0 %v930
      %v969 = vpop.f32.mrf.mxu0
      %v970 = vadd.f32 0.0, %v969
      %v971 = vpop.f32.mrf.mxu0
      %v972 = vpop.f32.mrf.mxu0
      %v973 = vpop.f32.mrf.mxu0
      %974 = vdwg.mxu0
      %976 = vrot.lane.b32.xlu0 %v918, 96
      %v977 = vpop.permute.xlu0 %976
      %v979 = vsel %vm928, %v910, 0
      %v982 = vsel %vm928, %v977, 0
      %984 = vmatprep.subr.bf16.mxu0 0
      %985 = vmatpush1.bf16.xpose.msra.mxu0 0
      %986 = vmatprep.subr.bf16.mxu0 0
      %987 = vmatpush1.bf16.xpose.msra.mxu0 0
      %988 = vmatprep.subr.bf16.mxu0 0
      %989 = vmatpush1.bf16.xpose.msra.mxu0 0
      %990 = vmatprep.subr.bf16.mxu0 0
      %991 = vmatpush1.bf16.xpose.msra.mxu0 0
      %992 = vmatprep.subr.bf16.mxu0 0
      %993 = vmatpush1.bf16.xpose.msra.mxu0 0
      %994 = vmatprep.subr.bf16.mxu0 0
      %995 = vmatpush1.bf16.xpose.msra.mxu0 0
      %996 = vmatprep.subr.bf16.mxu0 0
      %997 = vmatpush1.bf16.xpose.msra.mxu0 0
      %998 = vmatprep.subr.bf16.mxu0 0
      %999 = vmatpush1.bf16.xpose.msra.mxu0 %v982
      %1000 = vmatprep.subr.bf16.mxu0 0
      %1001 = vmatpush2.bf16.xpose.msra.mxu0 0
      %1002 = vmatprep.subr.bf16.mxu0 0
      %1003 = vmatpush2.bf16.xpose.msra.mxu0 0
      %1004 = vmatprep.subr.bf16.mxu0 0
      %1005 = vmatpush2.bf16.xpose.msra.mxu0 0
      %1006 = vmatprep.subr.bf16.mxu0 0
      %1007 = vmatpush2.bf16.xpose.msra.mxu0 0
      %1008 = vmatprep.subr.bf16.mxu0 0
      %1009 = vmatpush2.bf16.xpose.msra.mxu0 0
      %1010 = vmatprep.subr.bf16.mxu0 0
      %1011 = vmatpush2.bf16.xpose.msra.mxu0 0
      %1012 = vmatprep.subr.bf16.mxu0 0
      %1013 = vmatpush2.bf16.xpose.msra.mxu0 0
      %1014 = vmatprep.subr.bf16.mxu0 0
      %1015 = vmatpush2.bf16.xpose.msra.mxu0 0
      %1016 = vmatprep.mubr.bf16.mxu0 0
      %1017 = vmatmul.mubr.bf16.gmra.mxu0 %v979
      %v1018 = vpop.f32.mrf.mxu0
      %v1019 = vadd.f32 0.0, %v1018
      %v1020 = vpop.f32.mrf.mxu0
      %v1021 = vpop.f32.mrf.mxu0
      %v1022 = vpop.f32.mrf.mxu0
      %1023 = vdwg.mxu0
      %1025 = vrot.lane.b32.xlu0 %v919, 96
      %v1026 = vpop.permute.xlu0 %1025
      %v1028 = vsel %vm928, %v911, 0
      %v1031 = vsel %vm928, %v1026, 0
      %1033 = vmatprep.subr.bf16.mxu0 0
      %1034 = vmatpush1.bf16.xpose.msra.mxu0 0
      %1035 = vmatprep.subr.bf16.mxu0 0
      %1036 = vmatpush1.bf16.xpose.msra.mxu0 0
      %1037 = vmatprep.subr.bf16.mxu0 0
      %1038 = vmatpush1.bf16.xpose.msra.mxu0 0
      %1039 = vmatprep.subr.bf16.mxu0 0
      %1040 = vmatpush1.bf16.xpose.msra.mxu0 0
      %1041 = vmatprep.subr.bf16.mxu0 0
      %1042 = vmatpush1.bf16.xpose.msra.mxu0 0
      %1043 = vmatprep.subr.bf16.mxu0 0
      %1044 = vmatpush1.bf16.xpose.msra.mxu0 0
      %1045 = vmatprep.subr.bf16.mxu0 0
      %1046 = vmatpush1.bf16.xpose.msra.mxu0 0
      %1047 = vmatprep.subr.bf16.mxu0 0
      %1048 = vmatpush1.bf16.xpose.msra.mxu0 %v1031
      %1049 = vmatprep.subr.bf16.mxu0 0
      %1050 = vmatpush2.bf16.xpose.msra.mxu0 0
      %1051 = vmatprep.subr.bf16.mxu0 0
      %1052 = vmatpush2.bf16.xpose.msra.mxu0 0
      %1053 = vmatprep.subr.bf16.mxu0 0
      %1054 = vmatpush2.bf16.xpose.msra.mxu0 0
      %1055 = vmatprep.subr.bf16.mxu0 0
      %1056 = vmatpush2.bf16.xpose.msra.mxu0 0
      %1057 = vmatprep.subr.bf16.mxu0 0
      %1058 = vmatpush2.bf16.xpose.msra.mxu0 0
      %1059 = vmatprep.subr.bf16.mxu0 0
      %1060 = vmatpush2.bf16.xpose.msra.mxu0 0
      %1061 = vmatprep.subr.bf16.mxu0 0
      %1062 = vmatpush2.bf16.xpose.msra.mxu0 0
      %1063 = vmatprep.subr.bf16.mxu0 0
      %1064 = vmatpush2.bf16.xpose.msra.mxu0 0
      %1065 = vmatprep.mubr.bf16.mxu0 0
      %1066 = vmatmul.mubr.bf16.gmra.mxu0 %v1028
      %v1067 = vpop.f32.mrf.mxu0
      %v1068 = vadd.f32 0.0, %v1067
      %v1069 = vpop.f32.mrf.mxu0
      %v1070 = vpop.f32.mrf.mxu0
      %v1071 = vpop.f32.mrf.mxu0
      %1072 = vdwg.mxu0
      %1074 = vrot.lane.b32.xlu0 %v920, 96
      %v1075 = vpop.permute.xlu0 %1074
      %v1077 = vsel %vm928, %v912, 0
      %v1080 = vsel %vm928, %v1075, 0
      %1082 = vmatprep.subr.bf16.mxu0 0
      %1083 = vmatpush1.bf16.xpose.msra.mxu0 0
      %1084 = vmatprep.subr.bf16.mxu0 0
      %1085 = vmatpush1.bf16.xpose.msra.mxu0 0
      %1086 = vmatprep.subr.bf16.mxu0 0
      %1087 = vmatpush1.bf16.xpose.msra.mxu0 0
      %1088 = vmatprep.subr.bf16.mxu0 0
      %1089 = vmatpush1.bf16.xpose.msra.mxu0 0
      %1090 = vmatprep.subr.bf16.mxu0 0
      %1091 = vmatpush1.bf16.xpose.msra.mxu0 0
      %1092 = vmatprep.subr.bf16.mxu0 0
      %1093 = vmatpush1.bf16.xpose.msra.mxu0 0
      %1094 = vmatprep.subr.bf16.mxu0 0
      %1095 = vmatpush1.bf16.xpose.msra.mxu0 0
      %1096 = vmatprep.subr.bf16.mxu0 0
      %1097 = vmatpush1.bf16.xpose.msra.mxu0 %v1080
      %1098 = vmatprep.subr.bf16.mxu0 0
      %1099 = vmatpush2.bf16.xpose.msra.mxu0 0
      %1100 = vmatprep.subr.bf16.mxu0 0
      %1101 = vmatpush2.bf16.xpose.msra.mxu0 0
      %1102 = vmatprep.subr.bf16.mxu0 0
      %1103 = vmatpush2.bf16.xpose.msra.mxu0 0
      %1104 = vmatprep.subr.bf16.mxu0 0
      %1105 = vmatpush2.bf16.xpose.msra.mxu0 0
      %1106 = vmatprep.subr.bf16.mxu0 0
      %1107 = vmatpush2.bf16.xpose.msra.mxu0 0
      %1108 = vmatprep.subr.bf16.mxu0 0
      %1109 = vmatpush2.bf16.xpose.msra.mxu0 0
      %1110 = vmatprep.subr.bf16.mxu0 0
      %1111 = vmatpush2.bf16.xpose.msra.mxu0 0
      %1112 = vmatprep.subr.bf16.mxu0 0
      %1113 = vmatpush2.bf16.xpose.msra.mxu0 0
      %1114 = vmatprep.mubr.bf16.mxu0 0
      %1115 = vmatmul.mubr.bf16.gmra.mxu0 %v1077
      %v1116 = vpop.f32.mrf.mxu0
      %v1117 = vadd.f32 0.0, %v1116
      %v1118 = vpop.f32.mrf.mxu0
      %v1119 = vpop.f32.mrf.mxu0
      %v1120 = vpop.f32.mrf.mxu0
      %1121 = vdwg.mxu0
      %1123 = vrot.lane.b32.xlu0 %v921, 96
      %v1124 = vpop.permute.xlu0 %1123
      %v1126 = vsel %vm928, %v913, 0
      %v1129 = vsel %vm928, %v1124, 0
      %1131 = vmatprep.subr.bf16.mxu0 0
      %1132 = vmatpush1.bf16.xpose.msra.mxu0 0
      %1133 = vmatprep.subr.bf16.mxu0 0
      %1134 = vmatpush1.bf16.xpose.msra.mxu0 0
      %1135 = vmatprep.subr.bf16.mxu0 0
      %1136 = vmatpush1.bf16.xpose.msra.mxu0 0
      %1137 = vmatprep.subr.bf16.mxu0 0
      %1138 = vmatpush1.bf16.xpose.msra.mxu0 0
      %1139 = vmatprep.subr.bf16.mxu0 0
      %1140 = vmatpush1.bf16.xpose.msra.mxu0 0
      %1141 = vmatprep.subr.bf16.mxu0 0
      %1142 = vmatpush1.bf16.xpose.msra.mxu0 0
      %1143 = vmatprep.subr.bf16.mxu0 0
      %1144 = vmatpush1.bf16.xpose.msra.mxu0 0
      %1145 = vmatprep.subr.bf16.mxu0 0
      %1146 = vmatpush1.bf16.xpose.msra.mxu0 %v1129
      %1147 = vmatprep.subr.bf16.mxu0 0
      %1148 = vmatpush2.bf16.xpose.msra.mxu0 0
      %1149 = vmatprep.subr.bf16.mxu0 0
      %1150 = vmatpush2.bf16.xpose.msra.mxu0 0
      %1151 = vmatprep.subr.bf16.mxu0 0
      %1152 = vmatpush2.bf16.xpose.msra.mxu0 0
      %1153 = vmatprep.subr.bf16.mxu0 0
      %1154 = vmatpush2.bf16.xpose.msra.mxu0 0
      %1155 = vmatprep.subr.bf16.mxu0 0
      %1156 = vmatpush2.bf16.xpose.msra.mxu0 0
      %1157 = vmatprep.subr.bf16.mxu0 0
      %1158 = vmatpush2.bf16.xpose.msra.mxu0 0
      %1159 = vmatprep.subr.bf16.mxu0 0
      %1160 = vmatpush2.bf16.xpose.msra.mxu0 0
      %1161 = vmatprep.subr.bf16.mxu0 0
      %1162 = vmatpush2.bf16.xpose.msra.mxu0 0
      %1163 = vmatprep.mubr.bf16.mxu0 0
      %1164 = vmatmul.mubr.bf16.gmra.mxu0 %v1126
      %v1165 = vpop.f32.mrf.mxu0
      %v1166 = vadd.f32 0.0, %v1165
      %v1167 = vpop.f32.mrf.mxu0
      %v1168 = vpop.f32.mrf.mxu0
      %v1169 = vpop.f32.mrf.mxu0
      %1170 = vdwg.mxu0
      %1172 = vrot.lane.b32.xlu0 %v922, 96
      %v1173 = vpop.permute.xlu0 %1172
      %v1175 = vsel %vm928, %v914, 0
      %v1178 = vsel %vm928, %v1173, 0
      %1180 = vmatprep.subr.bf16.mxu0 0
      %1181 = vmatpush1.bf16.xpose.msra.mxu0 0
      %1182 = vmatprep.subr.bf16.mxu0 0
      %1183 = vmatpush1.bf16.xpose.msra.mxu0 0
      %1184 = vmatprep.subr.bf16.mxu0 0
      %1185 = vmatpush1.bf16.xpose.msra.mxu0 0
      %1186 = vmatprep.subr.bf16.mxu0 0
      %1187 = vmatpush1.bf16.xpose.msra.mxu0 0
      %1188 = vmatprep.subr.bf16.mxu0 0
      %1189 = vmatpush1.bf16.xpose.msra.mxu0 0
      %1190 = vmatprep.subr.bf16.mxu0 0
      %1191 = vmatpush1.bf16.xpose.msra.mxu0 0
      %1192 = vmatprep.subr.bf16.mxu0 0
      %1193 = vmatpush1.bf16.xpose.msra.mxu0 0
      %1194 = vmatprep.subr.bf16.mxu0 0
      %1195 = vmatpush1.bf16.xpose.msra.mxu0 %v1178
      %1196 = vmatprep.subr.bf16.mxu0 0
      %1197 = vmatpush2.bf16.xpose.msra.mxu0 0
      %1198 = vmatprep.subr.bf16.mxu0 0
      %1199 = vmatpush2.bf16.xpose.msra.mxu0 0
      %1200 = vmatprep.subr.bf16.mxu0 0
      %1201 = vmatpush2.bf16.xpose.msra.mxu0 0
      %1202 = vmatprep.subr.bf16.mxu0 0
      %1203 = vmatpush2.bf16.xpose.msra.mxu0 0
      %1204 = vmatprep.subr.bf16.mxu0 0
      %1205 = vmatpush2.bf16.xpose.msra.mxu0 0
      %1206 = vmatprep.subr.bf16.mxu0 0
      %1207 = vmatpush2.bf16.xpose.msra.mxu0 0
      %1208 = vmatprep.subr.bf16.mxu0 0
      %1209 = vmatpush2.bf16.xpose.msra.mxu0 0
      %1210 = vmatprep.subr.bf16.mxu0 0
      %1211 = vmatpush2.bf16.xpose.msra.mxu0 0
      %1212 = vmatprep.mubr.bf16.mxu0 0
      %1213 = vmatmul.mubr.bf16.gmra.mxu0 %v1175
      %v1214 = vpop.f32.mrf.mxu0
      %v1215 = vadd.f32 0.0, %v1214
      %v1216 = vpop.f32.mrf.mxu0
      %v1217 = vpop.f32.mrf.mxu0
      %v1218 = vpop.f32.mrf.mxu0
      %1219 = vdwg.mxu0
      %1221 = vrot.lane.b32.xlu0 %v923, 96
      %v1222 = vpop.permute.xlu0 %1221
      %v1224 = vsel %vm928, %v915, 0
      %v1227 = vsel %vm928, %v1222, 0
      %1229 = vmatprep.subr.bf16.mxu0 0
      %1230 = vmatpush1.bf16.xpose.msra.mxu0 0
      %1231 = vmatprep.subr.bf16.mxu0 0
      %1232 = vmatpush1.bf16.xpose.msra.mxu0 0
      %1233 = vmatprep.subr.bf16.mxu0 0
      %1234 = vmatpush1.bf16.xpose.msra.mxu0 0
      %1235 = vmatprep.subr.bf16.mxu0 0
      %1236 = vmatpush1.bf16.xpose.msra.mxu0 0
      %1237 = vmatprep.subr.bf16.mxu0 0
      %1238 = vmatpush1.bf16.xpose.msra.mxu0 0
      %1239 = vmatprep.subr.bf16.mxu0 0
      %1240 = vmatpush1.bf16.xpose.msra.mxu0 0
      %1241 = vmatprep.subr.bf16.mxu0 0
      %1242 = vmatpush1.bf16.xpose.msra.mxu0 0
      %1243 = vmatprep.subr.bf16.mxu0 0
      %1244 = vmatpush1.bf16.xpose.msra.mxu0 %v1227
      %1245 = vmatprep.subr.bf16.mxu0 0
      %1246 = vmatpush2.bf16.xpose.msra.mxu0 0
      %1247 = vmatprep.subr.bf16.mxu0 0
      %1248 = vmatpush2.bf16.xpose.msra.mxu0 0
      %1249 = vmatprep.subr.bf16.mxu0 0
      %1250 = vmatpush2.bf16.xpose.msra.mxu0 0
      %1251 = vmatprep.subr.bf16.mxu0 0
      %1252 = vmatpush2.bf16.xpose.msra.mxu0 0
      %1253 = vmatprep.subr.bf16.mxu0 0
      %1254 = vmatpush2.bf16.xpose.msra.mxu0 0
      %1255 = vmatprep.subr.bf16.mxu0 0
      %1256 = vmatpush2.bf16.xpose.msra.mxu0 0
      %1257 = vmatprep.subr.bf16.mxu0 0
      %1258 = vmatpush2.bf16.xpose.msra.mxu0 0
      %1259 = vmatprep.subr.bf16.mxu0 0
      %1260 = vmatpush2.bf16.xpose.msra.mxu0 0
      %1261 = vmatprep.mubr.bf16.mxu0 0
      %1262 = vmatmul.mubr.bf16.gmra.mxu0 %v1224
      %v1263 = vpop.f32.mrf.mxu0
      %v1264 = vadd.f32 0.0, %v1263
      %v1265 = vpop.f32.mrf.mxu0
      %v1266 = vpop.f32.mrf.mxu0
      %v1267 = vpop.f32.mrf.mxu0
      %1268 = vdwg.mxu0
      %1270 = vrot.lane.b32.xlu0 %v924, 96
      %v1271 = vpop.permute.xlu0 %1270
      %v1273 = vsel %vm928, %v916, 0
      %v1276 = vsel %vm928, %v1271, 0
      %1278 = vmatprep.subr.bf16.mxu0 0
      %1279 = vmatpush1.bf16.xpose.msra.mxu0 0
      %1280 = vmatprep.subr.bf16.mxu0 0
      %1281 = vmatpush1.bf16.xpose.msra.mxu0 0
      %1282 = vmatprep.subr.bf16.mxu0 0
      %1283 = vmatpush1.bf16.xpose.msra.mxu0 0
      %1284 = vmatprep.subr.bf16.mxu0 0
      %1285 = vmatpush1.bf16.xpose.msra.mxu0 0
      %1286 = vmatprep.subr.bf16.mxu0 0
      %1287 = vmatpush1.bf16.xpose.msra.mxu0 0
      %1288 = vmatprep.subr.bf16.mxu0 0
      %1289 = vmatpush1.bf16.xpose.msra.mxu0 0
      %1290 = vmatprep.subr.bf16.mxu0 0
      %1291 = vmatpush1.bf16.xpose.msra.mxu0 0
      %1292 = vmatprep.subr.bf16.mxu0 0
      %1293 = vmatpush1.bf16.xpose.msra.mxu0 %v1276
      %1294 = vmatprep.subr.bf16.mxu0 0
      %1295 = vmatpush2.bf16.xpose.msra.mxu0 0
      %1296 = vmatprep.subr.bf16.mxu0 0
      %1297 = vmatpush2.bf16.xpose.msra.mxu0 0
      %1298 = vmatprep.subr.bf16.mxu0 0
      %1299 = vmatpush2.bf16.xpose.msra.mxu0 0
      %1300 = vmatprep.subr.bf16.mxu0 0
      %1301 = vmatpush2.bf16.xpose.msra.mxu0 0
      %1302 = vmatprep.subr.bf16.mxu0 0
      %1303 = vmatpush2.bf16.xpose.msra.mxu0 0
      %1304 = vmatprep.subr.bf16.mxu0 0
      %1305 = vmatpush2.bf16.xpose.msra.mxu0 0
      %1306 = vmatprep.subr.bf16.mxu0 0
      %1307 = vmatpush2.bf16.xpose.msra.mxu0 0
      %1308 = vmatprep.subr.bf16.mxu0 0
      %1309 = vmatpush2.bf16.xpose.msra.mxu0 0
      %1310 = vmatprep.mubr.bf16.mxu0 0
      %1311 = vmatmul.mubr.bf16.gmra.mxu0 %v1273
      %v1312 = vpop.f32.mrf.mxu0
      %v1313 = vadd.f32 0.0, %v1312
      %v1314 = vpop.f32.mrf.mxu0
      %v1315 = vpop.f32.mrf.mxu0
      %v1316 = vpop.f32.mrf.mxu0
      %1317 = vdwg.mxu0
      %v1318 = vsel %vm928, %v970, -inf
      %1319 = vmax.xlane.f32.xlu0 %v1318
      %v1320 = vpop.xlane.xlu0 %1319
      %v1321 = vsel %vm928, %v1019, -inf
      %1322 = vmax.xlane.f32.xlu0 %v1321
      %v1323 = vpop.xlane.xlu0 %1322
      %v1324 = vsel %vm928, %v1068, -inf
      %1325 = vmax.xlane.f32.xlu0 %v1324
      %v1326 = vpop.xlane.xlu0 %1325
      %v1327 = vsel %vm928, %v1117, -inf
      %1328 = vmax.xlane.f32.xlu0 %v1327
      %v1329 = vpop.xlane.xlu0 %1328
      %v1330 = vsel %vm928, %v1166, -inf
      %1331 = vmax.xlane.f32.xlu0 %v1330
      %v1332 = vpop.xlane.xlu0 %1331
      %v1333 = vsel %vm928, %v1215, -inf
      %1334 = vmax.xlane.f32.xlu0 %v1333
      %v1335 = vpop.xlane.xlu0 %1334
      %v1336 = vsel %vm928, %v1264, -inf
      %1337 = vmax.xlane.f32.xlu0 %v1336
      %v1338 = vpop.xlane.xlu0 %1337
      %v1339 = vsel %vm928, %v1313, -inf
      %1340 = vmax.xlane.f32.xlu0 %v1339
      %v1341 = vpop.xlane.xlu0 %1340
      %v1342 = vsub.f32 %v970, %v1320
      %v1343 = vsub.f32 %v1019, %v1323
      %v1344 = vsub.f32 %v1068, %v1326
      %v1345 = vsub.f32 %v1117, %v1329
      %v1346 = vsub.f32 %v1166, %v1332
      %v1347 = vsub.f32 %v1215, %v1335
      %v1348 = vsub.f32 %v1264, %v1338
      %v1349 = vsub.f32 %v1313, %v1341
      %v1350 = vmul.f32 %v1342, 1.442695
      %v1351 = vpow.pop %v1350
      %v1352 = vmul.f32 %v1343, 1.442695
      %v1353 = vpow.pop %v1352
      %v1354 = vmul.f32 %v1344, 1.442695
      %v1355 = vpow.pop %v1354
      %v1356 = vmul.f32 %v1345, 1.442695
      %v1357 = vpow.pop %v1356
      %v1358 = vmul.f32 %v1346, 1.442695
      %v1359 = vpow.pop %v1358
      %v1360 = vmul.f32 %v1347, 1.442695
      %v1361 = vpow.pop %v1360
      %v1362 = vmul.f32 %v1348, 1.442695
      %v1363 = vpow.pop %v1362
      %v1364 = vmul.f32 %v1349, 1.442695
      %v1365 = vpow.pop %v1364
      %v1366 = vsel %vm928, %v1351, 0.0
      %1367 = vadd.xlane.f32.xlu0 %v1366
      %v1368 = vpop.xlane.xlu0 %1367
      %v1369 = vsel %vm928, %v1353, 0.0
      %1370 = vadd.xlane.f32.xlu0 %v1369
      %v1371 = vpop.xlane.xlu0 %1370
      %v1372 = vsel %vm928, %v1355, 0.0
      %1373 = vadd.xlane.f32.xlu0 %v1372
      %v1374 = vpop.xlane.xlu0 %1373
      %v1375 = vsel %vm928, %v1357, 0.0
      %1376 = vadd.xlane.f32.xlu0 %v1375
      %v1377 = vpop.xlane.xlu0 %1376
      %v1378 = vsel %vm928, %v1359, 0.0
      %1379 = vadd.xlane.f32.xlu0 %v1378
      %v1380 = vpop.xlane.xlu0 %1379
      %v1381 = vsel %vm928, %v1361, 0.0
      %1382 = vadd.xlane.f32.xlu0 %v1381
      %v1383 = vpop.xlane.xlu0 %1382
      %v1384 = vsel %vm928, %v1363, 0.0
      %1385 = vadd.xlane.f32.xlu0 %v1384
      %v1386 = vpop.xlane.xlu0 %1385
      %v1387 = vsel %vm928, %v1365, 0.0
      %1388 = vadd.xlane.f32.xlu0 %v1387
      %v1389 = vpop.xlane.xlu0 %1388
      %v1390 = vrcp.pop %v1368
      %v1391 = vrcp.pop %v1371
      %v1392 = vrcp.pop %v1374
      %v1393 = vrcp.pop %v1377
      %v1394 = vrcp.pop %v1380
      %v1395 = vrcp.pop %v1383
      %v1396 = vrcp.pop %v1386
      %v1397 = vrcp.pop %v1389
      %v1398 = vmul.f32 %v1351, %v1390
      %v1399 = vmul.f32 %v1353, %v1391
      %v1400 = vmul.f32 %v1355, %v1392
      %v1401 = vmul.f32 %v1357, %v1393
      %v1402 = vmul.f32 %v1359, %v1394
      %v1403 = vmul.f32 %v1361, %v1395
      %v1404 = vmul.f32 %v1363, %v1396
      %v1405 = vmul.f32 %v1365, %v1397
      %v1406 = vpack.c.bf16 %v1398, %v1398
      %v1407 = vpack.c.bf16 %v1399, %v1399
      %v1408 = vpack.c.bf16 %v1400, %v1400
      %v1409 = vpack.c.bf16 %v1401, %v1401
      %v1410 = vpack.c.bf16 %v1402, %v1402
      %v1411 = vpack.c.bf16 %v1403, %v1403
      %v1412 = vpack.c.bf16 %v1404, %v1404
      %v1413 = vpack.c.bf16 %v1405, %v1405
      %1414 = vrot.lane.b32.xlu0 %v917, 64
      %v1415 = vpop.permute.xlu0 %1414
      %v1417 = vsel %vm928, %v1406, 0
      %vm1419 = vcmask 1043456
      %v1421 = vsel %vm1419, %v1415, 0
      %1423 = vmatprep.subr.bf16.mxu0 0
      %1424 = vmatpush1.bf16.msra.mxu0 0
      %1425 = vmatprep.subr.bf16.mxu0 0
      %1426 = vmatpush1.bf16.msra.mxu0 0
      %1427 = vmatprep.subr.bf16.mxu0 0
      %1428 = vmatpush1.bf16.msra.mxu0 0
      %1429 = vmatprep.subr.bf16.mxu0 0
      %1430 = vmatpush1.bf16.msra.mxu0 0
      %1431 = vmatprep.subr.bf16.mxu0 0
      %1432 = vmatpush1.bf16.msra.mxu0 0
      %1433 = vmatprep.subr.bf16.mxu0 0
      %1434 = vmatpush1.bf16.msra.mxu0 0
      %1435 = vmatprep.subr.bf16.mxu0 0
      %1436 = vmatpush1.bf16.msra.mxu0 0
      %1437 = vmatprep.subr.bf16.mxu0 0
      %1438 = vmatpush1.bf16.msra.mxu0 %v1421
      %1439 = vmatprep.subr.bf16.mxu0 0
      %1440 = vmatpush2.bf16.msra.mxu0 0
      %1441 = vmatprep.subr.bf16.mxu0 0
      %1442 = vmatpush2.bf16.msra.mxu0 0
      %1443 = vmatprep.subr.bf16.mxu0 0
      %1444 = vmatpush2.bf16.msra.mxu0 0
      %1445 = vmatprep.subr.bf16.mxu0 0
      %1446 = vmatpush2.bf16.msra.mxu0 0
      %1447 = vmatprep.subr.bf16.mxu0 0
      %1448 = vmatpush2.bf16.msra.mxu0 0
      %1449 = vmatprep.subr.bf16.mxu0 0
      %1450 = vmatpush2.bf16.msra.mxu0 0
      %1451 = vmatprep.subr.bf16.mxu0 0
      %1452 = vmatpush2.bf16.msra.mxu0 0
      %1453 = vmatprep.subr.bf16.mxu0 0
      %1454 = vmatpush2.bf16.msra.mxu0 0
      %1455 = vmatprep.mubr.bf16.mxu0 0
      %1456 = vmatmul.mubr.bf16.gmra.mxu0 %v1417
      %v1457 = vpop.f32.mrf.mxu0
      %v1458 = vadd.f32 0.0, %v1457
      %v1459 = vpop.f32.mrf.mxu0
      %v1460 = vpop.f32.mrf.mxu0
      %v1461 = vpop.f32.mrf.mxu0
      %1462 = vdwg.mxu0
      %1463 = vrot.lane.b32.xlu0 %v918, 64
      %v1464 = vpop.permute.xlu0 %1463
      %v1466 = vsel %vm928, %v1407, 0
      %v1469 = vsel %vm1419, %v1464, 0
      %1471 = vmatprep.subr.bf16.mxu0 0
      %1472 = vmatpush1.bf16.msra.mxu0 0
      %1473 = vmatprep.subr.bf16.mxu0 0
      %1474 = vmatpush1.bf16.msra.mxu0 0
      %1475 = vmatprep.subr.bf16.mxu0 0
      %1476 = vmatpush1.bf16.msra.mxu0 0
      %1477 = vmatprep.subr.bf16.mxu0 0
      %1478 = vmatpush1.bf16.msra.mxu0 0
      %1479 = vmatprep.subr.bf16.mxu0 0
      %1480 = vmatpush1.bf16.msra.mxu0 0
      %1481 = vmatprep.subr.bf16.mxu0 0
      %1482 = vmatpush1.bf16.msra.mxu0 0
      %1483 = vmatprep.subr.bf16.mxu0 0
      %1484 = vmatpush1.bf16.msra.mxu0 0
      %1485 = vmatprep.subr.bf16.mxu0 0
      %1486 = vmatpush1.bf16.msra.mxu0 %v1469
      %1487 = vmatprep.subr.bf16.mxu0 0
      %1488 = vmatpush2.bf16.msra.mxu0 0
      %1489 = vmatprep.subr.bf16.mxu0 0
      %1490 = vmatpush2.bf16.msra.mxu0 0
      %1491 = vmatprep.subr.bf16.mxu0 0
      %1492 = vmatpush2.bf16.msra.mxu0 0
      %1493 = vmatprep.subr.bf16.mxu0 0
      %1494 = vmatpush2.bf16.msra.mxu0 0
      %1495 = vmatprep.subr.bf16.mxu0 0
      %1496 = vmatpush2.bf16.msra.mxu0 0
      %1497 = vmatprep.subr.bf16.mxu0 0
      %1498 = vmatpush2.bf16.msra.mxu0 0
      %1499 = vmatprep.subr.bf16.mxu0 0
      %1500 = vmatpush2.bf16.msra.mxu0 0
      %1501 = vmatprep.subr.bf16.mxu0 0
      %1502 = vmatpush2.bf16.msra.mxu0 0
      %1503 = vmatprep.mubr.bf16.mxu0 0
      %1504 = vmatmul.mubr.bf16.gmra.mxu0 %v1466
      %v1505 = vpop.f32.mrf.mxu0
      %v1506 = vadd.f32 0.0, %v1505
      %v1507 = vpop.f32.mrf.mxu0
      %v1508 = vpop.f32.mrf.mxu0
      %v1509 = vpop.f32.mrf.mxu0
      %1510 = vdwg.mxu0
      %1511 = vrot.lane.b32.xlu0 %v919, 64
      %v1512 = vpop.permute.xlu0 %1511
      %v1514 = vsel %vm928, %v1408, 0
      %v1517 = vsel %vm1419, %v1512, 0
      %1519 = vmatprep.subr.bf16.mxu0 0
      %1520 = vmatpush1.bf16.msra.mxu0 0
      %1521 = vmatprep.subr.bf16.mxu0 0
      %1522 = vmatpush1.bf16.msra.mxu0 0
      %1523 = vmatprep.subr.bf16.mxu0 0
      %1524 = vmatpush1.bf16.msra.mxu0 0
      %1525 = vmatprep.subr.bf16.mxu0 0
      %1526 = vmatpush1.bf16.msra.mxu0 0
      %1527 = vmatprep.subr.bf16.mxu0 0
      %1528 = vmatpush1.bf16.msra.mxu0 0
      %1529 = vmatprep.subr.bf16.mxu0 0
      %1530 = vmatpush1.bf16.msra.mxu0 0
      %1531 = vmatprep.subr.bf16.mxu0 0
      %1532 = vmatpush1.bf16.msra.mxu0 0
      %1533 = vmatprep.subr.bf16.mxu0 0
      %1534 = vmatpush1.bf16.msra.mxu0 %v1517
      %1535 = vmatprep.subr.bf16.mxu0 0
      %1536 = vmatpush2.bf16.msra.mxu0 0
      %1537 = vmatprep.subr.bf16.mxu0 0
      %1538 = vmatpush2.bf16.msra.mxu0 0
      %1539 = vmatprep.subr.bf16.mxu0 0
      %1540 = vmatpush2.bf16.msra.mxu0 0
      %1541 = vmatprep.subr.bf16.mxu0 0
      %1542 = vmatpush2.bf16.msra.mxu0 0
      %1543 = vmatprep.subr.bf16.mxu0 0
      %1544 = vmatpush2.bf16.msra.mxu0 0
      %1545 = vmatprep.subr.bf16.mxu0 0
      %1546 = vmatpush2.bf16.msra.mxu0 0
      %1547 = vmatprep.subr.bf16.mxu0 0
      %1548 = vmatpush2.bf16.msra.mxu0 0
      %1549 = vmatprep.subr.bf16.mxu0 0
      %1550 = vmatpush2.bf16.msra.mxu0 0
      %1551 = vmatprep.mubr.bf16.mxu0 0
      %1552 = vmatmul.mubr.bf16.gmra.mxu0 %v1514
      %v1553 = vpop.f32.mrf.mxu0
      %v1554 = vadd.f32 0.0, %v1553
      %v1555 = vpop.f32.mrf.mxu0
      %v1556 = vpop.f32.mrf.mxu0
      %v1557 = vpop.f32.mrf.mxu0
      %1558 = vdwg.mxu0
      %1559 = vrot.lane.b32.xlu0 %v920, 64
      %v1560 = vpop.permute.xlu0 %1559
      %v1562 = vsel %vm928, %v1409, 0
      %v1565 = vsel %vm1419, %v1560, 0
      %1567 = vmatprep.subr.bf16.mxu0 0
      %1568 = vmatpush1.bf16.msra.mxu0 0
      %1569 = vmatprep.subr.bf16.mxu0 0
      %1570 = vmatpush1.bf16.msra.mxu0 0
      %1571 = vmatprep.subr.bf16.mxu0 0
      %1572 = vmatpush1.bf16.msra.mxu0 0
      %1573 = vmatprep.subr.bf16.mxu0 0
      %1574 = vmatpush1.bf16.msra.mxu0 0
      %1575 = vmatprep.subr.bf16.mxu0 0
      %1576 = vmatpush1.bf16.msra.mxu0 0
      %1577 = vmatprep.subr.bf16.mxu0 0
      %1578 = vmatpush1.bf16.msra.mxu0 0
      %1579 = vmatprep.subr.bf16.mxu0 0
      %1580 = vmatpush1.bf16.msra.mxu0 0
      %1581 = vmatprep.subr.bf16.mxu0 0
      %1582 = vmatpush1.bf16.msra.mxu0 %v1565
      %1583 = vmatprep.subr.bf16.mxu0 0
      %1584 = vmatpush2.bf16.msra.mxu0 0
      %1585 = vmatprep.subr.bf16.mxu0 0
      %1586 = vmatpush2.bf16.msra.mxu0 0
      %1587 = vmatprep.subr.bf16.mxu0 0
      %1588 = vmatpush2.bf16.msra.mxu0 0
      %1589 = vmatprep.subr.bf16.mxu0 0
      %1590 = vmatpush2.bf16.msra.mxu0 0
      %1591 = vmatprep.subr.bf16.mxu0 0
      %1592 = vmatpush2.bf16.msra.mxu0 0
      %1593 = vmatprep.subr.bf16.mxu0 0
      %1594 = vmatpush2.bf16.msra.mxu0 0
      %1595 = vmatprep.subr.bf16.mxu0 0
      %1596 = vmatpush2.bf16.msra.mxu0 0
      %1597 = vmatprep.subr.bf16.mxu0 0
      %1598 = vmatpush2.bf16.msra.mxu0 0
      %1599 = vmatprep.mubr.bf16.mxu0 0
      %1600 = vmatmul.mubr.bf16.gmra.mxu0 %v1562
      %v1601 = vpop.f32.mrf.mxu0
      %v1602 = vadd.f32 0.0, %v1601
      %v1603 = vpop.f32.mrf.mxu0
      %v1604 = vpop.f32.mrf.mxu0
      %v1605 = vpop.f32.mrf.mxu0
      %1606 = vdwg.mxu0
      %1607 = vrot.lane.b32.xlu0 %v921, 64
      %v1608 = vpop.permute.xlu0 %1607
      %v1610 = vsel %vm928, %v1410, 0
      %v1613 = vsel %vm1419, %v1608, 0
      %1615 = vmatprep.subr.bf16.mxu0 0
      %1616 = vmatpush1.bf16.msra.mxu0 0
      %1617 = vmatprep.subr.bf16.mxu0 0
      %1618 = vmatpush1.bf16.msra.mxu0 0
      %1619 = vmatprep.subr.bf16.mxu0 0
      %1620 = vmatpush1.bf16.msra.mxu0 0
      %1621 = vmatprep.subr.bf16.mxu0 0
      %1622 = vmatpush1.bf16.msra.mxu0 0
      %1623 = vmatprep.subr.bf16.mxu0 0
      %1624 = vmatpush1.bf16.msra.mxu0 0
      %1625 = vmatprep.subr.bf16.mxu0 0
      %1626 = vmatpush1.bf16.msra.mxu0 0
      %1627 = vmatprep.subr.bf16.mxu0 0
      %1628 = vmatpush1.bf16.msra.mxu0 0
      %1629 = vmatprep.subr.bf16.mxu0 0
      %1630 = vmatpush1.bf16.msra.mxu0 %v1613
      %1631 = vmatprep.subr.bf16.mxu0 0
      %1632 = vmatpush2.bf16.msra.mxu0 0
      %1633 = vmatprep.subr.bf16.mxu0 0
      %1634 = vmatpush2.bf16.msra.mxu0 0
      %1635 = vmatprep.subr.bf16.mxu0 0
      %1636 = vmatpush2.bf16.msra.mxu0 0
      %1637 = vmatprep.subr.bf16.mxu0 0
      %1638 = vmatpush2.bf16.msra.mxu0 0
      %1639 = vmatprep.subr.bf16.mxu0 0
      %1640 = vmatpush2.bf16.msra.mxu0 0
      %1641 = vmatprep.subr.bf16.mxu0 0
      %1642 = vmatpush2.bf16.msra.mxu0 0
      %1643 = vmatprep.subr.bf16.mxu0 0
      %1644 = vmatpush2.bf16.msra.mxu0 0
      %1645 = vmatprep.subr.bf16.mxu0 0
      %1646 = vmatpush2.bf16.msra.mxu0 0
      %1647 = vmatprep.mubr.bf16.mxu0 0
      %1648 = vmatmul.mubr.bf16.gmra.mxu0 %v1610
      %v1649 = vpop.f32.mrf.mxu0
      %v1650 = vadd.f32 0.0, %v1649
      %v1651 = vpop.f32.mrf.mxu0
      %v1652 = vpop.f32.mrf.mxu0
      %v1653 = vpop.f32.mrf.mxu0
      %1654 = vdwg.mxu0
      %1655 = vrot.lane.b32.xlu0 %v922, 64
      %v1656 = vpop.permute.xlu0 %1655
      %v1658 = vsel %vm928, %v1411, 0
      %v1661 = vsel %vm1419, %v1656, 0
      %1663 = vmatprep.subr.bf16.mxu0 0
      %1664 = vmatpush1.bf16.msra.mxu0 0
      %1665 = vmatprep.subr.bf16.mxu0 0
      %1666 = vmatpush1.bf16.msra.mxu0 0
      %1667 = vmatprep.subr.bf16.mxu0 0
      %1668 = vmatpush1.bf16.msra.mxu0 0
      %1669 = vmatprep.subr.bf16.mxu0 0
      %1670 = vmatpush1.bf16.msra.mxu0 0
      %1671 = vmatprep.subr.bf16.mxu0 0
      %1672 = vmatpush1.bf16.msra.mxu0 0
      %1673 = vmatprep.subr.bf16.mxu0 0
      %1674 = vmatpush1.bf16.msra.mxu0 0
      %1675 = vmatprep.subr.bf16.mxu0 0
      %1676 = vmatpush1.bf16.msra.mxu0 0
      %1677 = vmatprep.subr.bf16.mxu0 0
      %1678 = vmatpush1.bf16.msra.mxu0 %v1661
      %1679 = vmatprep.subr.bf16.mxu0 0
      %1680 = vmatpush2.bf16.msra.mxu0 0
      %1681 = vmatprep.subr.bf16.mxu0 0
      %1682 = vmatpush2.bf16.msra.mxu0 0
      %1683 = vmatprep.subr.bf16.mxu0 0
      %1684 = vmatpush2.bf16.msra.mxu0 0
      %1685 = vmatprep.subr.bf16.mxu0 0
      %1686 = vmatpush2.bf16.msra.mxu0 0
      %1687 = vmatprep.subr.bf16.mxu0 0
      %1688 = vmatpush2.bf16.msra.mxu0 0
      %1689 = vmatprep.subr.bf16.mxu0 0
      %1690 = vmatpush2.bf16.msra.mxu0 0
      %1691 = vmatprep.subr.bf16.mxu0 0
      %1692 = vmatpush2.bf16.msra.mxu0 0
      %1693 = vmatprep.subr.bf16.mxu0 0
      %1694 = vmatpush2.bf16.msra.mxu0 0
      %1695 = vmatprep.mubr.bf16.mxu0 0
      %1696 = vmatmul.mubr.bf16.gmra.mxu0 %v1658
      %v1697 = vpop.f32.mrf.mxu0
      %v1698 = vadd.f32 0.0, %v1697
      %v1699 = vpop.f32.mrf.mxu0
      %v1700 = vpop.f32.mrf.mxu0
      %v1701 = vpop.f32.mrf.mxu0
      %1702 = vdwg.mxu0
      %1703 = vrot.lane.b32.xlu0 %v923, 64
      %v1704 = vpop.permute.xlu0 %1703
      %v1706 = vsel %vm928, %v1412, 0
      %v1709 = vsel %vm1419, %v1704, 0
      %1711 = vmatprep.subr.bf16.mxu0 0
      %1712 = vmatpush1.bf16.msra.mxu0 0
      %1713 = vmatprep.subr.bf16.mxu0 0
      %1714 = vmatpush1.bf16.msra.mxu0 0
      %1715 = vmatprep.subr.bf16.mxu0 0
      %1716 = vmatpush1.bf16.msra.mxu0 0
      %1717 = vmatprep.subr.bf16.mxu0 0
      %1718 = vmatpush1.bf16.msra.mxu0 0
      %1719 = vmatprep.subr.bf16.mxu0 0
      %1720 = vmatpush1.bf16.msra.mxu0 0
      %1721 = vmatprep.subr.bf16.mxu0 0
      %1722 = vmatpush1.bf16.msra.mxu0 0
      %1723 = vmatprep.subr.bf16.mxu0 0
      %1724 = vmatpush1.bf16.msra.mxu0 0
      %1725 = vmatprep.subr.bf16.mxu0 0
      %1726 = vmatpush1.bf16.msra.mxu0 %v1709
      %1727 = vmatprep.subr.bf16.mxu0 0
      %1728 = vmatpush2.bf16.msra.mxu0 0
      %1729 = vmatprep.subr.bf16.mxu0 0
      %1730 = vmatpush2.bf16.msra.mxu0 0
      %1731 = vmatprep.subr.bf16.mxu0 0
      %1732 = vmatpush2.bf16.msra.mxu0 0
      %1733 = vmatprep.subr.bf16.mxu0 0
      %1734 = vmatpush2.bf16.msra.mxu0 0
      %1735 = vmatprep.subr.bf16.mxu0 0
      %1736 = vmatpush2.bf16.msra.mxu0 0
      %1737 = vmatprep.subr.bf16.mxu0 0
      %1738 = vmatpush2.bf16.msra.mxu0 0
      %1739 = vmatprep.subr.bf16.mxu0 0
      %1740 = vmatpush2.bf16.msra.mxu0 0
      %1741 = vmatprep.subr.bf16.mxu0 0
      %1742 = vmatpush2.bf16.msra.mxu0 0
      %1743 = vmatprep.mubr.bf16.mxu0 0
      %1744 = vmatmul.mubr.bf16.gmra.mxu0 %v1706
      %v1745 = vpop.f32.mrf.mxu0
      %v1746 = vadd.f32 0.0, %v1745
      %v1747 = vpop.f32.mrf.mxu0
      %v1748 = vpop.f32.mrf.mxu0
      %v1749 = vpop.f32.mrf.mxu0
      %1750 = vdwg.mxu0
      %1751 = vrot.lane.b32.xlu0 %v924, 64
      %v1752 = vpop.permute.xlu0 %1751
      %v1754 = vsel %vm928, %v1413, 0
      %v1757 = vsel %vm1419, %v1752, 0
      %1759 = vmatprep.subr.bf16.mxu0 0
      %1760 = vmatpush1.bf16.msra.mxu0 0
      %1761 = vmatprep.subr.bf16.mxu0 0
      %1762 = vmatpush1.bf16.msra.mxu0 0
      %1763 = vmatprep.subr.bf16.mxu0 0
      %1764 = vmatpush1.bf16.msra.mxu0 0
      %1765 = vmatprep.subr.bf16.mxu0 0
      %1766 = vmatpush1.bf16.msra.mxu0 0
      %1767 = vmatprep.subr.bf16.mxu0 0
      %1768 = vmatpush1.bf16.msra.mxu0 0
      %1769 = vmatprep.subr.bf16.mxu0 0
      %1770 = vmatpush1.bf16.msra.mxu0 0
      %1771 = vmatprep.subr.bf16.mxu0 0
      %1772 = vmatpush1.bf16.msra.mxu0 0
      %1773 = vmatprep.subr.bf16.mxu0 0
      %1774 = vmatpush1.bf16.msra.mxu0 %v1757
      %1775 = vmatprep.subr.bf16.mxu0 0
      %1776 = vmatpush2.bf16.msra.mxu0 0
      %1777 = vmatprep.subr.bf16.mxu0 0
      %1778 = vmatpush2.bf16.msra.mxu0 0
      %1779 = vmatprep.subr.bf16.mxu0 0
      %1780 = vmatpush2.bf16.msra.mxu0 0
      %1781 = vmatprep.subr.bf16.mxu0 0
      %1782 = vmatpush2.bf16.msra.mxu0 0
      %1783 = vmatprep.subr.bf16.mxu0 0
      %1784 = vmatpush2.bf16.msra.mxu0 0
      %1785 = vmatprep.subr.bf16.mxu0 0
      %1786 = vmatpush2.bf16.msra.mxu0 0
      %1787 = vmatprep.subr.bf16.mxu0 0
      %1788 = vmatpush2.bf16.msra.mxu0 0
      %1789 = vmatprep.subr.bf16.mxu0 0
      %1790 = vmatpush2.bf16.msra.mxu0 0
      %1791 = vmatprep.mubr.bf16.mxu0 0
      %1792 = vmatmul.mubr.bf16.gmra.mxu0 %v1754
      %v1793 = vpop.f32.mrf.mxu0
      %v1794 = vadd.f32 0.0, %v1793
      %v1795 = vpop.f32.mrf.mxu0
      %v1796 = vpop.f32.mrf.mxu0
      %v1797 = vpop.f32.mrf.mxu0
      %1798 = vdwg.mxu0
      %1800 = vrot.lane.b32.xlu0 %v909, 120
      %v1801 = vpop.permute.xlu0 %1800
      %1802 = vrot.lane.b32.xlu0 %v917, 88
      %v1803 = vpop.permute.xlu0 %1802
      %v1805 = vsel %vm928, %v1801, 0
      %v1808 = vsel %vm928, %v1803, 0
      %1810 = vmatprep.subr.bf16.mxu0 0
      %1811 = vmatpush1.bf16.xpose.msra.mxu0 0
      %1812 = vmatprep.subr.bf16.mxu0 0
      %1813 = vmatpush1.bf16.xpose.msra.mxu0 0
      %1814 = vmatprep.subr.bf16.mxu0 0
      %1815 = vmatpush1.bf16.xpose.msra.mxu0 0
      %1816 = vmatprep.subr.bf16.mxu0 0
      %1817 = vmatpush1.bf16.xpose.msra.mxu0 0
      %1818 = vmatprep.subr.bf16.mxu0 0
      %1819 = vmatpush1.bf16.xpose.msra.mxu0 0
      %1820 = vmatprep.subr.bf16.mxu0 0
      %1821 = vmatpush1.bf16.xpose.msra.mxu0 0
      %1822 = vmatprep.subr.bf16.mxu0 0
      %1823 = vmatpush1.bf16.xpose.msra.mxu0 0
      %1824 = vmatprep.subr.bf16.mxu0 0
      %1825 = vmatpush1.bf16.xpose.msra.mxu0 %v1808
      %1826 = vmatprep.subr.bf16.mxu0 0
      %1827 = vmatpush2.bf16.xpose.msra.mxu0 0
      %1828 = vmatprep.subr.bf16.mxu0 0
      %1829 = vmatpush2.bf16.xpose.msra.mxu0 0
      %1830 = vmatprep.subr.bf16.mxu0 0
      %1831 = vmatpush2.bf16.xpose.msra.mxu0 0
      %1832 = vmatprep.subr.bf16.mxu0 0
      %1833 = vmatpush2.bf16.xpose.msra.mxu0 0
      %1834 = vmatprep.subr.bf16.mxu0 0
      %1835 = vmatpush2.bf16.xpose.msra.mxu0 0
      %1836 = vmatprep.subr.bf16.mxu0 0
      %1837 = vmatpush2.bf16.xpose.msra.mxu0 0
      %1838 = vmatprep.subr.bf16.mxu0 0
      %1839 = vmatpush2.bf16.xpose.msra.mxu0 0
      %1840 = vmatprep.subr.bf16.mxu0 0
      %1841 = vmatpush2.bf16.xpose.msra.mxu0 0
      %1842 = vmatprep.mubr.bf16.mxu0 0
      %1843 = vmatmul.mubr.bf16.gmra.mxu0 %v1805
      %v1844 = vpop.f32.mrf.mxu0
      %v1845 = vadd.f32 0.0, %v1844
      %v1846 = vpop.f32.mrf.mxu0
      %v1847 = vpop.f32.mrf.mxu0
      %v1848 = vpop.f32.mrf.mxu0
      %1849 = vdwg.mxu0
      %1851 = vrot.lane.b32.xlu0 %v910, 120
      %v1852 = vpop.permute.xlu0 %1851
      %1853 = vrot.lane.b32.xlu0 %v918, 88
      %v1854 = vpop.permute.xlu0 %1853
      %v1856 = vsel %vm928, %v1852, 0
      %v1859 = vsel %vm928, %v1854, 0
      %1861 = vmatprep.subr.bf16.mxu0 0
      %1862 = vmatpush1.bf16.xpose.msra.mxu0 0
      %1863 = vmatprep.subr.bf16.mxu0 0
      %1864 = vmatpush1.bf16.xpose.msra.mxu0 0
      %1865 = vmatprep.subr.bf16.mxu0 0
      %1866 = vmatpush1.bf16.xpose.msra.mxu0 0
      %1867 = vmatprep.subr.bf16.mxu0 0
      %1868 = vmatpush1.bf16.xpose.msra.mxu0 0
      %1869 = vmatprep.subr.bf16.mxu0 0
      %1870 = vmatpush1.bf16.xpose.msra.mxu0 0
      %1871 = vmatprep.subr.bf16.mxu0 0
      %1872 = vmatpush1.bf16.xpose.msra.mxu0 0
      %1873 = vmatprep.subr.bf16.mxu0 0
      %1874 = vmatpush1.bf16.xpose.msra.mxu0 0
      %1875 = vmatprep.subr.bf16.mxu0 0
      %1876 = vmatpush1.bf16.xpose.msra.mxu0 %v1859
      %1877 = vmatprep.subr.bf16.mxu0 0
      %1878 = vmatpush2.bf16.xpose.msra.mxu0 0
      %1879 = vmatprep.subr.bf16.mxu0 0
      %1880 = vmatpush2.bf16.xpose.msra.mxu0 0
      %1881 = vmatprep.subr.bf16.mxu0 0
      %1882 = vmatpush2.bf16.xpose.msra.mxu0 0
      %1883 = vmatprep.subr.bf16.mxu0 0
      %1884 = vmatpush2.bf16.xpose.msra.mxu0 0
      %1885 = vmatprep.subr.bf16.mxu0 0
      %1886 = vmatpush2.bf16.xpose.msra.mxu0 0
      %1887 = vmatprep.subr.bf16.mxu0 0
      %1888 = vmatpush2.bf16.xpose.msra.mxu0 0
      %1889 = vmatprep.subr.bf16.mxu0 0
      %1890 = vmatpush2.bf16.xpose.msra.mxu0 0
      %1891 = vmatprep.subr.bf16.mxu0 0
      %1892 = vmatpush2.bf16.xpose.msra.mxu0 0
      %1893 = vmatprep.mubr.bf16.mxu0 0
      %1894 = vmatmul.mubr.bf16.gmra.mxu0 %v1856
      %v1895 = vpop.f32.mrf.mxu0
      %v1896 = vadd.f32 0.0, %v1895
      %v1897 = vpop.f32.mrf.mxu0
      %v1898 = vpop.f32.mrf.mxu0
      %v1899 = vpop.f32.mrf.mxu0
      %1900 = vdwg.mxu0
      %1902 = vrot.lane.b32.xlu0 %v911, 120
      %v1903 = vpop.permute.xlu0 %1902
      %1904 = vrot.lane.b32.xlu0 %v919, 88
      %v1905 = vpop.permute.xlu0 %1904
      %v1907 = vsel %vm928, %v1903, 0
      %v1910 = vsel %vm928, %v1905, 0
      %1912 = vmatprep.subr.bf16.mxu0 0
      %1913 = vmatpush1.bf16.xpose.msra.mxu0 0
      %1914 = vmatprep.subr.bf16.mxu0 0
      %1915 = vmatpush1.bf16.xpose.msra.mxu0 0
      %1916 = vmatprep.subr.bf16.mxu0 0
      %1917 = vmatpush1.bf16.xpose.msra.mxu0 0
      %1918 = vmatprep.subr.bf16.mxu0 0
      %1919 = vmatpush1.bf16.xpose.msra.mxu0 0
      %1920 = vmatprep.subr.bf16.mxu0 0
      %1921 = vmatpush1.bf16.xpose.msra.mxu0 0
      %1922 = vmatprep.subr.bf16.mxu0 0
      %1923 = vmatpush1.bf16.xpose.msra.mxu0 0
      %1924 = vmatprep.subr.bf16.mxu0 0
      %1925 = vmatpush1.bf16.xpose.msra.mxu0 0
      %1926 = vmatprep.subr.bf16.mxu0 0
      %1927 = vmatpush1.bf16.xpose.msra.mxu0 %v1910
      %1928 = vmatprep.subr.bf16.mxu0 0
      %1929 = vmatpush2.bf16.xpose.msra.mxu0 0
      %1930 = vmatprep.subr.bf16.mxu0 0
      %1931 = vmatpush2.bf16.xpose.msra.mxu0 0
      %1932 = vmatprep.subr.bf16.mxu0 0
      %1933 = vmatpush2.bf16.xpose.msra.mxu0 0
      %1934 = vmatprep.subr.bf16.mxu0 0
      %1935 = vmatpush2.bf16.xpose.msra.mxu0 0
      %1936 = vmatprep.subr.bf16.mxu0 0
      %1937 = vmatpush2.bf16.xpose.msra.mxu0 0
      %1938 = vmatprep.subr.bf16.mxu0 0
      %1939 = vmatpush2.bf16.xpose.msra.mxu0 0
      %1940 = vmatprep.subr.bf16.mxu0 0
      %1941 = vmatpush2.bf16.xpose.msra.mxu0 0
      %1942 = vmatprep.subr.bf16.mxu0 0
      %1943 = vmatpush2.bf16.xpose.msra.mxu0 0
      %1944 = vmatprep.mubr.bf16.mxu0 0
      %1945 = vmatmul.mubr.bf16.gmra.mxu0 %v1907
      %v1946 = vpop.f32.mrf.mxu0
      %v1947 = vadd.f32 0.0, %v1946
      %v1948 = vpop.f32.mrf.mxu0
      %v1949 = vpop.f32.mrf.mxu0
      %v1950 = vpop.f32.mrf.mxu0
      %1951 = vdwg.mxu0
      %1953 = vrot.lane.b32.xlu0 %v912, 120
      %v1954 = vpop.permute.xlu0 %1953
      %1955 = vrot.lane.b32.xlu0 %v920, 88
      %v1956 = vpop.permute.xlu0 %1955
      %v1958 = vsel %vm928, %v1954, 0
      %v1961 = vsel %vm928, %v1956, 0
      %1963 = vmatprep.subr.bf16.mxu0 0
      %1964 = vmatpush1.bf16.xpose.msra.mxu0 0
      %1965 = vmatprep.subr.bf16.mxu0 0
      %1966 = vmatpush1.bf16.xpose.msra.mxu0 0
      %1967 = vmatprep.subr.bf16.mxu0 0
      %1968 = vmatpush1.bf16.xpose.msra.mxu0 0
      %1969 = vmatprep.subr.bf16.mxu0 0
      %1970 = vmatpush1.bf16.xpose.msra.mxu0 0
      %1971 = vmatprep.subr.bf16.mxu0 0
      %1972 = vmatpush1.bf16.xpose.msra.mxu0 0
      %1973 = vmatprep.subr.bf16.mxu0 0
      %1974 = vmatpush1.bf16.xpose.msra.mxu0 0
      %1975 = vmatprep.subr.bf16.mxu0 0
      %1976 = vmatpush1.bf16.xpose.msra.mxu0 0
      %1977 = vmatprep.subr.bf16.mxu0 0
      %1978 = vmatpush1.bf16.xpose.msra.mxu0 %v1961
      %1979 = vmatprep.subr.bf16.mxu0 0
      %1980 = vmatpush2.bf16.xpose.msra.mxu0 0
      %1981 = vmatprep.subr.bf16.mxu0 0
      %1982 = vmatpush2.bf16.xpose.msra.mxu0 0
      %1983 = vmatprep.subr.bf16.mxu0 0
      %1984 = vmatpush2.bf16.xpose.msra.mxu0 0
      %1985 = vmatprep.subr.bf16.mxu0 0
      %1986 = vmatpush2.bf16.xpose.msra.mxu0 0
      %1987 = vmatprep.subr.bf16.mxu0 0
      %1988 = vmatpush2.bf16.xpose.msra.mxu0 0
      %1989 = vmatprep.subr.bf16.mxu0 0
      %1990 = vmatpush2.bf16.xpose.msra.mxu0 0
      %1991 = vmatprep.subr.bf16.mxu0 0
      %1992 = vmatpush2.bf16.xpose.msra.mxu0 0
      %1993 = vmatprep.subr.bf16.mxu0 0
      %1994 = vmatpush2.bf16.xpose.msra.mxu0 0
      %1995 = vmatprep.mubr.bf16.mxu0 0
      %1996 = vmatmul.mubr.bf16.gmra.mxu0 %v1958
      %v1997 = vpop.f32.mrf.mxu0
      %v1998 = vadd.f32 0.0, %v1997
      %v1999 = vpop.f32.mrf.mxu0
      %v2000 = vpop.f32.mrf.mxu0
      %v2001 = vpop.f32.mrf.mxu0
      %2002 = vdwg.mxu0
      %2004 = vrot.lane.b32.xlu0 %v913, 120
      %v2005 = vpop.permute.xlu0 %2004
      %2006 = vrot.lane.b32.xlu0 %v921, 88
      %v2007 = vpop.permute.xlu0 %2006
      %v2009 = vsel %vm928, %v2005, 0
      %v2012 = vsel %vm928, %v2007, 0
      %2014 = vmatprep.subr.bf16.mxu0 0
      %2015 = vmatpush1.bf16.xpose.msra.mxu0 0
      %2016 = vmatprep.subr.bf16.mxu0 0
      %2017 = vmatpush1.bf16.xpose.msra.mxu0 0
      %2018 = vmatprep.subr.bf16.mxu0 0
      %2019 = vmatpush1.bf16.xpose.msra.mxu0 0
      %2020 = vmatprep.subr.bf16.mxu0 0
      %2021 = vmatpush1.bf16.xpose.msra.mxu0 0
      %2022 = vmatprep.subr.bf16.mxu0 0
      %2023 = vmatpush1.bf16.xpose.msra.mxu0 0
      %2024 = vmatprep.subr.bf16.mxu0 0
      %2025 = vmatpush1.bf16.xpose.msra.mxu0 0
      %2026 = vmatprep.subr.bf16.mxu0 0
      %2027 = vmatpush1.bf16.xpose.msra.mxu0 0
      %2028 = vmatprep.subr.bf16.mxu0 0
      %2029 = vmatpush1.bf16.xpose.msra.mxu0 %v2012
      %2030 = vmatprep.subr.bf16.mxu0 0
      %2031 = vmatpush2.bf16.xpose.msra.mxu0 0
      %2032 = vmatprep.subr.bf16.mxu0 0
      %2033 = vmatpush2.bf16.xpose.msra.mxu0 0
      %2034 = vmatprep.subr.bf16.mxu0 0
      %2035 = vmatpush2.bf16.xpose.msra.mxu0 0
      %2036 = vmatprep.subr.bf16.mxu0 0
      %2037 = vmatpush2.bf16.xpose.msra.mxu0 0
      %2038 = vmatprep.subr.bf16.mxu0 0
      %2039 = vmatpush2.bf16.xpose.msra.mxu0 0
      %2040 = vmatprep.subr.bf16.mxu0 0
      %2041 = vmatpush2.bf16.xpose.msra.mxu0 0
      %2042 = vmatprep.subr.bf16.mxu0 0
      %2043 = vmatpush2.bf16.xpose.msra.mxu0 0
      %2044 = vmatprep.subr.bf16.mxu0 0
      %2045 = vmatpush2.bf16.xpose.msra.mxu0 0
      %2046 = vmatprep.mubr.bf16.mxu0 0
      %2047 = vmatmul.mubr.bf16.gmra.mxu0 %v2009
      %v2048 = vpop.f32.mrf.mxu0
      %v2049 = vadd.f32 0.0, %v2048
      %v2050 = vpop.f32.mrf.mxu0
      %v2051 = vpop.f32.mrf.mxu0
      %v2052 = vpop.f32.mrf.mxu0
      %2053 = vdwg.mxu0
      %2055 = vrot.lane.b32.xlu0 %v914, 120
      %v2056 = vpop.permute.xlu0 %2055
      %2057 = vrot.lane.b32.xlu0 %v922, 88
      %v2058 = vpop.permute.xlu0 %2057
      %v2060 = vsel %vm928, %v2056, 0
      %v2063 = vsel %vm928, %v2058, 0
      %2065 = vmatprep.subr.bf16.mxu0 0
      %2066 = vmatpush1.bf16.xpose.msra.mxu0 0
      %2067 = vmatprep.subr.bf16.mxu0 0
      %2068 = vmatpush1.bf16.xpose.msra.mxu0 0
      %2069 = vmatprep.subr.bf16.mxu0 0
      %2070 = vmatpush1.bf16.xpose.msra.mxu0 0
      %2071 = vmatprep.subr.bf16.mxu0 0
      %2072 = vmatpush1.bf16.xpose.msra.mxu0 0
      %2073 = vmatprep.subr.bf16.mxu0 0
      %2074 = vmatpush1.bf16.xpose.msra.mxu0 0
      %2075 = vmatprep.subr.bf16.mxu0 0
      %2076 = vmatpush1.bf16.xpose.msra.mxu0 0
      %2077 = vmatprep.subr.bf16.mxu0 0
      %2078 = vmatpush1.bf16.xpose.msra.mxu0 0
      %2079 = vmatprep.subr.bf16.mxu0 0
      %2080 = vmatpush1.bf16.xpose.msra.mxu0 %v2063
      %2081 = vmatprep.subr.bf16.mxu0 0
      %2082 = vmatpush2.bf16.xpose.msra.mxu0 0
      %2083 = vmatprep.subr.bf16.mxu0 0
      %2084 = vmatpush2.bf16.xpose.msra.mxu0 0
      %2085 = vmatprep.subr.bf16.mxu0 0
      %2086 = vmatpush2.bf16.xpose.msra.mxu0 0
      %2087 = vmatprep.subr.bf16.mxu0 0
      %2088 = vmatpush2.bf16.xpose.msra.mxu0 0
      %2089 = vmatprep.subr.bf16.mxu0 0
      %2090 = vmatpush2.bf16.xpose.msra.mxu0 0
      %2091 = vmatprep.subr.bf16.mxu0 0
      %2092 = vmatpush2.bf16.xpose.msra.mxu0 0
      %2093 = vmatprep.subr.bf16.mxu0 0
      %2094 = vmatpush2.bf16.xpose.msra.mxu0 0
      %2095 = vmatprep.subr.bf16.mxu0 0
      %2096 = vmatpush2.bf16.xpose.msra.mxu0 0
      %2097 = vmatprep.mubr.bf16.mxu0 0
      %2098 = vmatmul.mubr.bf16.gmra.mxu0 %v2060
      %v2099 = vpop.f32.mrf.mxu0
      %v2100 = vadd.f32 0.0, %v2099
      %v2101 = vpop.f32.mrf.mxu0
      %v2102 = vpop.f32.mrf.mxu0
      %v2103 = vpop.f32.mrf.mxu0
      %2104 = vdwg.mxu0
      %2106 = vrot.lane.b32.xlu0 %v915, 120
      %v2107 = vpop.permute.xlu0 %2106
      %2108 = vrot.lane.b32.xlu0 %v923, 88
      %v2109 = vpop.permute.xlu0 %2108
      %v2111 = vsel %vm928, %v2107, 0
      %v2114 = vsel %vm928, %v2109, 0
      %2116 = vmatprep.subr.bf16.mxu0 0
      %2117 = vmatpush1.bf16.xpose.msra.mxu0 0
      %2118 = vmatprep.subr.bf16.mxu0 0
      %2119 = vmatpush1.bf16.xpose.msra.mxu0 0
      %2120 = vmatprep.subr.bf16.mxu0 0
      %2121 = vmatpush1.bf16.xpose.msra.mxu0 0
      %2122 = vmatprep.subr.bf16.mxu0 0
      %2123 = vmatpush1.bf16.xpose.msra.mxu0 0
      %2124 = vmatprep.subr.bf16.mxu0 0
      %2125 = vmatpush1.bf16.xpose.msra.mxu0 0
      %2126 = vmatprep.subr.bf16.mxu0 0
      %2127 = vmatpush1.bf16.xpose.msra.mxu0 0
      %2128 = vmatprep.subr.bf16.mxu0 0
      %2129 = vmatpush1.bf16.xpose.msra.mxu0 0
      %2130 = vmatprep.subr.bf16.mxu0 0
      %2131 = vmatpush1.bf16.xpose.msra.mxu0 %v2114
      %2132 = vmatprep.subr.bf16.mxu0 0
      %2133 = vmatpush2.bf16.xpose.msra.mxu0 0
      %2134 = vmatprep.subr.bf16.mxu0 0
      %2135 = vmatpush2.bf16.xpose.msra.mxu0 0
      %2136 = vmatprep.subr.bf16.mxu0 0
      %2137 = vmatpush2.bf16.xpose.msra.mxu0 0
      %2138 = vmatprep.subr.bf16.mxu0 0
      %2139 = vmatpush2.bf16.xpose.msra.mxu0 0
      %2140 = vmatprep.subr.bf16.mxu0 0
      %2141 = vmatpush2.bf16.xpose.msra.mxu0 0
      %2142 = vmatprep.subr.bf16.mxu0 0
      %2143 = vmatpush2.bf16.xpose.msra.mxu0 0
      %2144 = vmatprep.subr.bf16.mxu0 0
      %2145 = vmatpush2.bf16.xpose.msra.mxu0 0
      %2146 = vmatprep.subr.bf16.mxu0 0
      %2147 = vmatpush2.bf16.xpose.msra.mxu0 0
      %2148 = vmatprep.mubr.bf16.mxu0 0
      %2149 = vmatmul.mubr.bf16.gmra.mxu0 %v2111
      %v2150 = vpop.f32.mrf.mxu0
      %v2151 = vadd.f32 0.0, %v2150
      %v2152 = vpop.f32.mrf.mxu0
      %v2153 = vpop.f32.mrf.mxu0
      %v2154 = vpop.f32.mrf.mxu0
      %2155 = vdwg.mxu0
      %2157 = vrot.lane.b32.xlu0 %v916, 120
      %v2158 = vpop.permute.xlu0 %2157
      %2159 = vrot.lane.b32.xlu0 %v924, 88
      %v2160 = vpop.permute.xlu0 %2159
      %v2162 = vsel %vm928, %v2158, 0
      %v2165 = vsel %vm928, %v2160, 0
      %2167 = vmatprep.subr.bf16.mxu0 0
      %2168 = vmatpush1.bf16.xpose.msra.mxu0 0
      %2169 = vmatprep.subr.bf16.mxu0 0
      %2170 = vmatpush1.bf16.xpose.msra.mxu0 0
      %2171 = vmatprep.subr.bf16.mxu0 0
      %2172 = vmatpush1.bf16.xpose.msra.mxu0 0
      %2173 = vmatprep.subr.bf16.mxu0 0
      %2174 = vmatpush1.bf16.xpose.msra.mxu0 0
      %2175 = vmatprep.subr.bf16.mxu0 0
      %2176 = vmatpush1.bf16.xpose.msra.mxu0 0
      %2177 = vmatprep.subr.bf16.mxu0 0
      %2178 = vmatpush1.bf16.xpose.msra.mxu0 0
      %2179 = vmatprep.subr.bf16.mxu0 0
      %2180 = vmatpush1.bf16.xpose.msra.mxu0 0
      %2181 = vmatprep.subr.bf16.mxu0 0
      %2182 = vmatpush1.bf16.xpose.msra.mxu0 %v2165
      %2183 = vmatprep.subr.bf16.mxu0 0
      %2184 = vmatpush2.bf16.xpose.msra.mxu0 0
      %2185 = vmatprep.subr.bf16.mxu0 0
      %2186 = vmatpush2.bf16.xpose.msra.mxu0 0
      %2187 = vmatprep.subr.bf16.mxu0 0
      %2188 = vmatpush2.bf16.xpose.msra.mxu0 0
      %2189 = vmatprep.subr.bf16.mxu0 0
      %2190 = vmatpush2.bf16.xpose.msra.mxu0 0
      %2191 = vmatprep.subr.bf16.mxu0 0
      %2192 = vmatpush2.bf16.xpose.msra.mxu0 0
      %2193 = vmatprep.subr.bf16.mxu0 0
      %2194 = vmatpush2.bf16.xpose.msra.mxu0 0
      %2195 = vmatprep.subr.bf16.mxu0 0
      %2196 = vmatpush2.bf16.xpose.msra.mxu0 0
      %2197 = vmatprep.subr.bf16.mxu0 0
      %2198 = vmatpush2.bf16.xpose.msra.mxu0 0
      %2199 = vmatprep.mubr.bf16.mxu0 0
      %2200 = vmatmul.mubr.bf16.gmra.mxu0 %v2162
      %v2201 = vpop.f32.mrf.mxu0
      %v2202 = vadd.f32 0.0, %v2201
      %v2203 = vpop.f32.mrf.mxu0
      %v2204 = vpop.f32.mrf.mxu0
      %v2205 = vpop.f32.mrf.mxu0
      %2206 = vdwg.mxu0
      %v2207 = vsel %vm928, %v1845, -inf
      %2208 = vmax.xlane.f32.xlu0 %v2207
      %v2209 = vpop.xlane.xlu0 %2208
      %v2210 = vsel %vm928, %v1896, -inf
      %2211 = vmax.xlane.f32.xlu0 %v2210
      %v2212 = vpop.xlane.xlu0 %2211
      %v2213 = vsel %vm928, %v1947, -inf
      %2214 = vmax.xlane.f32.xlu0 %v2213
      %v2215 = vpop.xlane.xlu0 %2214
      %v2216 = vsel %vm928, %v1998, -inf
      %2217 = vmax.xlane.f32.xlu0 %v2216
      %v2218 = vpop.xlane.xlu0 %2217
      %v2219 = vsel %vm928, %v2049, -inf
      %2220 = vmax.xlane.f32.xlu0 %v2219
      %v2221 = vpop.xlane.xlu0 %2220
      %v2222 = vsel %vm928, %v2100, -inf
      %2223 = vmax.xlane.f32.xlu0 %v2222
      %v2224 = vpop.xlane.xlu0 %2223
      %v2225 = vsel %vm928, %v2151, -inf
      %2226 = vmax.xlane.f32.xlu0 %v2225
      %v2227 = vpop.xlane.xlu0 %2226
      %v2228 = vsel %vm928, %v2202, -inf
      %2229 = vmax.xlane.f32.xlu0 %v2228
      %v2230 = vpop.xlane.xlu0 %2229
      %v2231 = vsub.f32 %v1845, %v2209
      %v2232 = vsub.f32 %v1896, %v2212
      %v2233 = vsub.f32 %v1947, %v2215
      %v2234 = vsub.f32 %v1998, %v2218
      %v2235 = vsub.f32 %v2049, %v2221
      %v2236 = vsub.f32 %v2100, %v2224
      %v2237 = vsub.f32 %v2151, %v2227
      %v2238 = vsub.f32 %v2202, %v2230
      %v2239 = vmul.f32 %v2231, 1.442695
      %v2240 = vpow.pop %v2239
      %v2241 = vmul.f32 %v2232, 1.442695
      %v2242 = vpow.pop %v2241
      %v2243 = vmul.f32 %v2233, 1.442695
      %v2244 = vpow.pop %v2243
      %v2245 = vmul.f32 %v2234, 1.442695
      %v2246 = vpow.pop %v2245
      %v2247 = vmul.f32 %v2235, 1.442695
      %v2248 = vpow.pop %v2247
      %v2249 = vmul.f32 %v2236, 1.442695
      %v2250 = vpow.pop %v2249
      %v2251 = vmul.f32 %v2237, 1.442695
      %v2252 = vpow.pop %v2251
      %v2253 = vmul.f32 %v2238, 1.442695
      %v2254 = vpow.pop %v2253
      %v2255 = vsel %vm928, %v2240, 0.0
      %2256 = vadd.xlane.f32.xlu0 %v2255
      %v2257 = vpop.xlane.xlu0 %2256
      %v2258 = vsel %vm928, %v2242, 0.0
      %2259 = vadd.xlane.f32.xlu0 %v2258
      %v2260 = vpop.xlane.xlu0 %2259
      %v2261 = vsel %vm928, %v2244, 0.0
      %2262 = vadd.xlane.f32.xlu0 %v2261
      %v2263 = vpop.xlane.xlu0 %2262
      %v2264 = vsel %vm928, %v2246, 0.0
      %2265 = vadd.xlane.f32.xlu0 %v2264
      %v2266 = vpop.xlane.xlu0 %2265
      %v2267 = vsel %vm928, %v2248, 0.0
      %2268 = vadd.xlane.f32.xlu0 %v2267
      %v2269 = vpop.xlane.xlu0 %2268
      %v2270 = vsel %vm928, %v2250, 0.0
      %2271 = vadd.xlane.f32.xlu0 %v2270
      %v2272 = vpop.xlane.xlu0 %2271
      %v2273 = vsel %vm928, %v2252, 0.0
      %2274 = vadd.xlane.f32.xlu0 %v2273
      %v2275 = vpop.xlane.xlu0 %2274
      %v2276 = vsel %vm928, %v2254, 0.0
      %2277 = vadd.xlane.f32.xlu0 %v2276
      %v2278 = vpop.xlane.xlu0 %2277
      %v2279 = vrcp.pop %v2257
      %v2280 = vrcp.pop %v2260
      %v2281 = vrcp.pop %v2263
      %v2282 = vrcp.pop %v2266
      %v2283 = vrcp.pop %v2269
      %v2284 = vrcp.pop %v2272
      %v2285 = vrcp.pop %v2275
      %v2286 = vrcp.pop %v2278
      %v2287 = vmul.f32 %v2240, %v2279
      %v2288 = vmul.f32 %v2242, %v2280
      %v2289 = vmul.f32 %v2244, %v2281
      %v2290 = vmul.f32 %v2246, %v2282
      %v2291 = vmul.f32 %v2248, %v2283
      %v2292 = vmul.f32 %v2250, %v2284
      %v2293 = vmul.f32 %v2252, %v2285
      %v2294 = vmul.f32 %v2254, %v2286
      %v2295 = vpack.c.bf16 %v2287, %v2287
      %v2296 = vpack.c.bf16 %v2288, %v2288
      %v2297 = vpack.c.bf16 %v2289, %v2289
      %v2298 = vpack.c.bf16 %v2290, %v2290
      %v2299 = vpack.c.bf16 %v2291, %v2291
      %v2300 = vpack.c.bf16 %v2292, %v2292
      %v2301 = vpack.c.bf16 %v2293, %v2293
      %v2302 = vpack.c.bf16 %v2294, %v2294
      %2303 = vrot.lane.b32.xlu0 %v917, 56
      %v2304 = vpop.permute.xlu0 %2303
      %v2306 = vsel %vm928, %v2295, 0
      %v2309 = vsel %vm1419, %v2304, 0
      %2311 = vmatprep.subr.bf16.mxu0 0
      %2312 = vmatpush1.bf16.msra.mxu0 0
      %2313 = vmatprep.subr.bf16.mxu0 0
      %2314 = vmatpush1.bf16.msra.mxu0 0
      %2315 = vmatprep.subr.bf16.mxu0 0
      %2316 = vmatpush1.bf16.msra.mxu0 0
      %2317 = vmatprep.subr.bf16.mxu0 0
      %2318 = vmatpush1.bf16.msra.mxu0 0
      %2319 = vmatprep.subr.bf16.mxu0 0
      %2320 = vmatpush1.bf16.msra.mxu0 0
      %2321 = vmatprep.subr.bf16.mxu0 0
      %2322 = vmatpush1.bf16.msra.mxu0 0
      %2323 = vmatprep.subr.bf16.mxu0 0
      %2324 = vmatpush1.bf16.msra.mxu0 0
      %2325 = vmatprep.subr.bf16.mxu0 0
      %2326 = vmatpush1.bf16.msra.mxu0 %v2309
      %2327 = vmatprep.subr.bf16.mxu0 0
      %2328 = vmatpush2.bf16.msra.mxu0 0
      %2329 = vmatprep.subr.bf16.mxu0 0
      %2330 = vmatpush2.bf16.msra.mxu0 0
      %2331 = vmatprep.subr.bf16.mxu0 0
      %2332 = vmatpush2.bf16.msra.mxu0 0
      %2333 = vmatprep.subr.bf16.mxu0 0
      %2334 = vmatpush2.bf16.msra.mxu0 0
      %2335 = vmatprep.subr.bf16.mxu0 0
      %2336 = vmatpush2.bf16.msra.mxu0 0
      %2337 = vmatprep.subr.bf16.mxu0 0
      %2338 = vmatpush2.bf16.msra.mxu0 0
      %2339 = vmatprep.subr.bf16.mxu0 0
      %2340 = vmatpush2.bf16.msra.mxu0 0
      %2341 = vmatprep.subr.bf16.mxu0 0
      %2342 = vmatpush2.bf16.msra.mxu0 0
      %2343 = vmatprep.mubr.bf16.mxu0 0
      %2344 = vmatmul.mubr.bf16.gmra.mxu0 %v2306
      %v2345 = vpop.f32.mrf.mxu0
      %v2346 = vadd.f32 0.0, %v2345
      %v2347 = vpop.f32.mrf.mxu0
      %v2348 = vpop.f32.mrf.mxu0
      %v2349 = vpop.f32.mrf.mxu0
      %2350 = vdwg.mxu0
      %2351 = vrot.lane.b32.xlu0 %v918, 56
      %v2352 = vpop.permute.xlu0 %2351
      %v2354 = vsel %vm928, %v2296, 0
      %v2357 = vsel %vm1419, %v2352, 0
      %2359 = vmatprep.subr.bf16.mxu0 0
      %2360 = vmatpush1.bf16.msra.mxu0 0
      %2361 = vmatprep.subr.bf16.mxu0 0
      %2362 = vmatpush1.bf16.msra.mxu0 0
      %2363 = vmatprep.subr.bf16.mxu0 0
      %2364 = vmatpush1.bf16.msra.mxu0 0
      %2365 = vmatprep.subr.bf16.mxu0 0
      %2366 = vmatpush1.bf16.msra.mxu0 0
      %2367 = vmatprep.subr.bf16.mxu0 0
      %2368 = vmatpush1.bf16.msra.mxu0 0
      %2369 = vmatprep.subr.bf16.mxu0 0
      %2370 = vmatpush1.bf16.msra.mxu0 0
      %2371 = vmatprep.subr.bf16.mxu0 0
      %2372 = vmatpush1.bf16.msra.mxu0 0
      %2373 = vmatprep.subr.bf16.mxu0 0
      %2374 = vmatpush1.bf16.msra.mxu0 %v2357
      %2375 = vmatprep.subr.bf16.mxu0 0
      %2376 = vmatpush2.bf16.msra.mxu0 0
      %2377 = vmatprep.subr.bf16.mxu0 0
      %2378 = vmatpush2.bf16.msra.mxu0 0
      %2379 = vmatprep.subr.bf16.mxu0 0
      %2380 = vmatpush2.bf16.msra.mxu0 0
      %2381 = vmatprep.subr.bf16.mxu0 0
      %2382 = vmatpush2.bf16.msra.mxu0 0
      %2383 = vmatprep.subr.bf16.mxu0 0
      %2384 = vmatpush2.bf16.msra.mxu0 0
      %2385 = vmatprep.subr.bf16.mxu0 0
      %2386 = vmatpush2.bf16.msra.mxu0 0
      %2387 = vmatprep.subr.bf16.mxu0 0
      %2388 = vmatpush2.bf16.msra.mxu0 0
      %2389 = vmatprep.subr.bf16.mxu0 0
      %2390 = vmatpush2.bf16.msra.mxu0 0
      %2391 = vmatprep.mubr.bf16.mxu0 0
      %2392 = vmatmul.mubr.bf16.gmra.mxu0 %v2354
      %v2393 = vpop.f32.mrf.mxu0
      %v2394 = vadd.f32 0.0, %v2393
      %v2395 = vpop.f32.mrf.mxu0
      %v2396 = vpop.f32.mrf.mxu0
      %v2397 = vpop.f32.mrf.mxu0
      %2398 = vdwg.mxu0
      %2399 = vrot.lane.b32.xlu0 %v919, 56
      %v2400 = vpop.permute.xlu0 %2399
      %v2402 = vsel %vm928, %v2297, 0
      %v2405 = vsel %vm1419, %v2400, 0
      %2407 = vmatprep.subr.bf16.mxu0 0
      %2408 = vmatpush1.bf16.msra.mxu0 0
      %2409 = vmatprep.subr.bf16.mxu0 0
      %2410 = vmatpush1.bf16.msra.mxu0 0
      %2411 = vmatprep.subr.bf16.mxu0 0
      %2412 = vmatpush1.bf16.msra.mxu0 0
      %2413 = vmatprep.subr.bf16.mxu0 0
      %2414 = vmatpush1.bf16.msra.mxu0 0
      %2415 = vmatprep.subr.bf16.mxu0 0
      %2416 = vmatpush1.bf16.msra.mxu0 0
      %2417 = vmatprep.subr.bf16.mxu0 0
      %2418 = vmatpush1.bf16.msra.mxu0 0
      %2419 = vmatprep.subr.bf16.mxu0 0
      %2420 = vmatpush1.bf16.msra.mxu0 0
      %2421 = vmatprep.subr.bf16.mxu0 0
      %2422 = vmatpush1.bf16.msra.mxu0 %v2405
      %2423 = vmatprep.subr.bf16.mxu0 0
      %2424 = vmatpush2.bf16.msra.mxu0 0
      %2425 = vmatprep.subr.bf16.mxu0 0
      %2426 = vmatpush2.bf16.msra.mxu0 0
      %2427 = vmatprep.subr.bf16.mxu0 0
      %2428 = vmatpush2.bf16.msra.mxu0 0
      %2429 = vmatprep.subr.bf16.mxu0 0
      %2430 = vmatpush2.bf16.msra.mxu0 0
      %2431 = vmatprep.subr.bf16.mxu0 0
      %2432 = vmatpush2.bf16.msra.mxu0 0
      %2433 = vmatprep.subr.bf16.mxu0 0
      %2434 = vmatpush2.bf16.msra.mxu0 0
      %2435 = vmatprep.subr.bf16.mxu0 0
      %2436 = vmatpush2.bf16.msra.mxu0 0
      %2437 = vmatprep.subr.bf16.mxu0 0
      %2438 = vmatpush2.bf16.msra.mxu0 0
      %2439 = vmatprep.mubr.bf16.mxu0 0
      %2440 = vmatmul.mubr.bf16.gmra.mxu0 %v2402
      %v2441 = vpop.f32.mrf.mxu0
      %v2442 = vadd.f32 0.0, %v2441
      %v2443 = vpop.f32.mrf.mxu0
      %v2444 = vpop.f32.mrf.mxu0
      %v2445 = vpop.f32.mrf.mxu0
      %2446 = vdwg.mxu0
      %2447 = vrot.lane.b32.xlu0 %v920, 56
      %v2448 = vpop.permute.xlu0 %2447
      %v2450 = vsel %vm928, %v2298, 0
      %v2453 = vsel %vm1419, %v2448, 0
      %2455 = vmatprep.subr.bf16.mxu0 0
      %2456 = vmatpush1.bf16.msra.mxu0 0
      %2457 = vmatprep.subr.bf16.mxu0 0
      %2458 = vmatpush1.bf16.msra.mxu0 0
      %2459 = vmatprep.subr.bf16.mxu0 0
      %2460 = vmatpush1.bf16.msra.mxu0 0
      %2461 = vmatprep.subr.bf16.mxu0 0
      %2462 = vmatpush1.bf16.msra.mxu0 0
      %2463 = vmatprep.subr.bf16.mxu0 0
      %2464 = vmatpush1.bf16.msra.mxu0 0
      %2465 = vmatprep.subr.bf16.mxu0 0
      %2466 = vmatpush1.bf16.msra.mxu0 0
      %2467 = vmatprep.subr.bf16.mxu0 0
      %2468 = vmatpush1.bf16.msra.mxu0 0
      %2469 = vmatprep.subr.bf16.mxu0 0
      %2470 = vmatpush1.bf16.msra.mxu0 %v2453
      %2471 = vmatprep.subr.bf16.mxu0 0
      %2472 = vmatpush2.bf16.msra.mxu0 0
      %2473 = vmatprep.subr.bf16.mxu0 0
      %2474 = vmatpush2.bf16.msra.mxu0 0
      %2475 = vmatprep.subr.bf16.mxu0 0
      %2476 = vmatpush2.bf16.msra.mxu0 0
      %2477 = vmatprep.subr.bf16.mxu0 0
      %2478 = vmatpush2.bf16.msra.mxu0 0
      %2479 = vmatprep.subr.bf16.mxu0 0
      %2480 = vmatpush2.bf16.msra.mxu0 0
      %2481 = vmatprep.subr.bf16.mxu0 0
      %2482 = vmatpush2.bf16.msra.mxu0 0
      %2483 = vmatprep.subr.bf16.mxu0 0
      %2484 = vmatpush2.bf16.msra.mxu0 0
      %2485 = vmatprep.subr.bf16.mxu0 0
      %2486 = vmatpush2.bf16.msra.mxu0 0
      %2487 = vmatprep.mubr.bf16.mxu0 0
      %2488 = vmatmul.mubr.bf16.gmra.mxu0 %v2450
      %v2489 = vpop.f32.mrf.mxu0
      %v2490 = vadd.f32 0.0, %v2489
      %v2491 = vpop.f32.mrf.mxu0
      %v2492 = vpop.f32.mrf.mxu0
      %v2493 = vpop.f32.mrf.mxu0
      %2494 = vdwg.mxu0
      %2495 = vrot.lane.b32.xlu0 %v921, 56
      %v2496 = vpop.permute.xlu0 %2495
      %v2498 = vsel %vm928, %v2299, 0
      %v2501 = vsel %vm1419, %v2496, 0
      %2503 = vmatprep.subr.bf16.mxu0 0
      %2504 = vmatpush1.bf16.msra.mxu0 0
      %2505 = vmatprep.subr.bf16.mxu0 0
      %2506 = vmatpush1.bf16.msra.mxu0 0
      %2507 = vmatprep.subr.bf16.mxu0 0
      %2508 = vmatpush1.bf16.msra.mxu0 0
      %2509 = vmatprep.subr.bf16.mxu0 0
      %2510 = vmatpush1.bf16.msra.mxu0 0
      %2511 = vmatprep.subr.bf16.mxu0 0
      %2512 = vmatpush1.bf16.msra.mxu0 0
      %2513 = vmatprep.subr.bf16.mxu0 0
      %2514 = vmatpush1.bf16.msra.mxu0 0
      %2515 = vmatprep.subr.bf16.mxu0 0
      %2516 = vmatpush1.bf16.msra.mxu0 0
      %2517 = vmatprep.subr.bf16.mxu0 0
      %2518 = vmatpush1.bf16.msra.mxu0 %v2501
      %2519 = vmatprep.subr.bf16.mxu0 0
      %2520 = vmatpush2.bf16.msra.mxu0 0
      %2521 = vmatprep.subr.bf16.mxu0 0
      %2522 = vmatpush2.bf16.msra.mxu0 0
      %2523 = vmatprep.subr.bf16.mxu0 0
      %2524 = vmatpush2.bf16.msra.mxu0 0
      %2525 = vmatprep.subr.bf16.mxu0 0
      %2526 = vmatpush2.bf16.msra.mxu0 0
      %2527 = vmatprep.subr.bf16.mxu0 0
      %2528 = vmatpush2.bf16.msra.mxu0 0
      %2529 = vmatprep.subr.bf16.mxu0 0
      %2530 = vmatpush2.bf16.msra.mxu0 0
      %2531 = vmatprep.subr.bf16.mxu0 0
      %2532 = vmatpush2.bf16.msra.mxu0 0
      %2533 = vmatprep.subr.bf16.mxu0 0
      %2534 = vmatpush2.bf16.msra.mxu0 0
      %2535 = vmatprep.mubr.bf16.mxu0 0
      %2536 = vmatmul.mubr.bf16.gmra.mxu0 %v2498
      %v2537 = vpop.f32.mrf.mxu0
      %v2538 = vadd.f32 0.0, %v2537
      %v2539 = vpop.f32.mrf.mxu0
      %v2540 = vpop.f32.mrf.mxu0
      %v2541 = vpop.f32.mrf.mxu0
      %2542 = vdwg.mxu0
      %2543 = vrot.lane.b32.xlu0 %v922, 56
      %v2544 = vpop.permute.xlu0 %2543
      %v2546 = vsel %vm928, %v2300, 0
      %v2549 = vsel %vm1419, %v2544, 0
      %2551 = vmatprep.subr.bf16.mxu0 0
      %2552 = vmatpush1.bf16.msra.mxu0 0
      %2553 = vmatprep.subr.bf16.mxu0 0
      %2554 = vmatpush1.bf16.msra.mxu0 0
      %2555 = vmatprep.subr.bf16.mxu0 0
      %2556 = vmatpush1.bf16.msra.mxu0 0
      %2557 = vmatprep.subr.bf16.mxu0 0
      %2558 = vmatpush1.bf16.msra.mxu0 0
      %2559 = vmatprep.subr.bf16.mxu0 0
      %2560 = vmatpush1.bf16.msra.mxu0 0
      %2561 = vmatprep.subr.bf16.mxu0 0
      %2562 = vmatpush1.bf16.msra.mxu0 0
      %2563 = vmatprep.subr.bf16.mxu0 0
      %2564 = vmatpush1.bf16.msra.mxu0 0
      %2565 = vmatprep.subr.bf16.mxu0 0
      %2566 = vmatpush1.bf16.msra.mxu0 %v2549
      %2567 = vmatprep.subr.bf16.mxu0 0
      %2568 = vmatpush2.bf16.msra.mxu0 0
      %2569 = vmatprep.subr.bf16.mxu0 0
      %2570 = vmatpush2.bf16.msra.mxu0 0
      %2571 = vmatprep.subr.bf16.mxu0 0
      %2572 = vmatpush2.bf16.msra.mxu0 0
      %2573 = vmatprep.subr.bf16.mxu0 0
      %2574 = vmatpush2.bf16.msra.mxu0 0
      %2575 = vmatprep.subr.bf16.mxu0 0
      %2576 = vmatpush2.bf16.msra.mxu0 0
      %2577 = vmatprep.subr.bf16.mxu0 0
      %2578 = vmatpush2.bf16.msra.mxu0 0
      %2579 = vmatprep.subr.bf16.mxu0 0
      %2580 = vmatpush2.bf16.msra.mxu0 0
      %2581 = vmatprep.subr.bf16.mxu0 0
      %2582 = vmatpush2.bf16.msra.mxu0 0
      %2583 = vmatprep.mubr.bf16.mxu0 0
      %2584 = vmatmul.mubr.bf16.gmra.mxu0 %v2546
      %v2585 = vpop.f32.mrf.mxu0
      %v2586 = vadd.f32 0.0, %v2585
      %v2587 = vpop.f32.mrf.mxu0
      %v2588 = vpop.f32.mrf.mxu0
      %v2589 = vpop.f32.mrf.mxu0
      %2590 = vdwg.mxu0
      %2591 = vrot.lane.b32.xlu0 %v923, 56
      %v2592 = vpop.permute.xlu0 %2591
      %v2594 = vsel %vm928, %v2301, 0
      %v2597 = vsel %vm1419, %v2592, 0
      %2599 = vmatprep.subr.bf16.mxu0 0
      %2600 = vmatpush1.bf16.msra.mxu0 0
      %2601 = vmatprep.subr.bf16.mxu0 0
      %2602 = vmatpush1.bf16.msra.mxu0 0
      %2603 = vmatprep.subr.bf16.mxu0 0
      %2604 = vmatpush1.bf16.msra.mxu0 0
      %2605 = vmatprep.subr.bf16.mxu0 0
      %2606 = vmatpush1.bf16.msra.mxu0 0
      %2607 = vmatprep.subr.bf16.mxu0 0
      %2608 = vmatpush1.bf16.msra.mxu0 0
      %2609 = vmatprep.subr.bf16.mxu0 0
      %2610 = vmatpush1.bf16.msra.mxu0 0
      %2611 = vmatprep.subr.bf16.mxu0 0
      %2612 = vmatpush1.bf16.msra.mxu0 0
      %2613 = vmatprep.subr.bf16.mxu0 0
      %2614 = vmatpush1.bf16.msra.mxu0 %v2597
      %2615 = vmatprep.subr.bf16.mxu0 0
      %2616 = vmatpush2.bf16.msra.mxu0 0
      %2617 = vmatprep.subr.bf16.mxu0 0
      %2618 = vmatpush2.bf16.msra.mxu0 0
      %2619 = vmatprep.subr.bf16.mxu0 0
      %2620 = vmatpush2.bf16.msra.mxu0 0
      %2621 = vmatprep.subr.bf16.mxu0 0
      %2622 = vmatpush2.bf16.msra.mxu0 0
      %2623 = vmatprep.subr.bf16.mxu0 0
      %2624 = vmatpush2.bf16.msra.mxu0 0
      %2625 = vmatprep.subr.bf16.mxu0 0
      %2626 = vmatpush2.bf16.msra.mxu0 0
      %2627 = vmatprep.subr.bf16.mxu0 0
      %2628 = vmatpush2.bf16.msra.mxu0 0
      %2629 = vmatprep.subr.bf16.mxu0 0
      %2630 = vmatpush2.bf16.msra.mxu0 0
      %2631 = vmatprep.mubr.bf16.mxu0 0
      %2632 = vmatmul.mubr.bf16.gmra.mxu0 %v2594
      %v2633 = vpop.f32.mrf.mxu0
      %v2634 = vadd.f32 0.0, %v2633
      %v2635 = vpop.f32.mrf.mxu0
      %v2636 = vpop.f32.mrf.mxu0
      %v2637 = vpop.f32.mrf.mxu0
      %2638 = vdwg.mxu0
      %2639 = vrot.lane.b32.xlu0 %v924, 56
      %v2640 = vpop.permute.xlu0 %2639
      %v2642 = vsel %vm928, %v2302, 0
      %v2645 = vsel %vm1419, %v2640, 0
      %2647 = vmatprep.subr.bf16.mxu0 0
      %2648 = vmatpush1.bf16.msra.mxu0 0
      %2649 = vmatprep.subr.bf16.mxu0 0
      %2650 = vmatpush1.bf16.msra.mxu0 0
      %2651 = vmatprep.subr.bf16.mxu0 0
      %2652 = vmatpush1.bf16.msra.mxu0 0
      %2653 = vmatprep.subr.bf16.mxu0 0
      %2654 = vmatpush1.bf16.msra.mxu0 0
      %2655 = vmatprep.subr.bf16.mxu0 0
      %2656 = vmatpush1.bf16.msra.mxu0 0
      %2657 = vmatprep.subr.bf16.mxu0 0
      %2658 = vmatpush1.bf16.msra.mxu0 0
      %2659 = vmatprep.subr.bf16.mxu0 0
      %2660 = vmatpush1.bf16.msra.mxu0 0
      %2661 = vmatprep.subr.bf16.mxu0 0
      %2662 = vmatpush1.bf16.msra.mxu0 %v2645
      %2663 = vmatprep.subr.bf16.mxu0 0
      %2664 = vmatpush2.bf16.msra.mxu0 0
      %2665 = vmatprep.subr.bf16.mxu0 0
      %2666 = vmatpush2.bf16.msra.mxu0 0
      %2667 = vmatprep.subr.bf16.mxu0 0
      %2668 = vmatpush2.bf16.msra.mxu0 0
      %2669 = vmatprep.subr.bf16.mxu0 0
      %2670 = vmatpush2.bf16.msra.mxu0 0
      %2671 = vmatprep.subr.bf16.mxu0 0
      %2672 = vmatpush2.bf16.msra.mxu0 0
      %2673 = vmatprep.subr.bf16.mxu0 0
      %2674 = vmatpush2.bf16.msra.mxu0 0
      %2675 = vmatprep.subr.bf16.mxu0 0
      %2676 = vmatpush2.bf16.msra.mxu0 0
      %2677 = vmatprep.subr.bf16.mxu0 0
      %2678 = vmatpush2.bf16.msra.mxu0 0
      %2679 = vmatprep.mubr.bf16.mxu0 0
      %2680 = vmatmul.mubr.bf16.gmra.mxu0 %v2642
      %v2681 = vpop.f32.mrf.mxu0
      %v2682 = vadd.f32 0.0, %v2681
      %v2683 = vpop.f32.mrf.mxu0
      %v2684 = vpop.f32.mrf.mxu0
      %v2685 = vpop.f32.mrf.mxu0
      %2686 = vdwg.mxu0
      %2687 = vrot.lane.b32.xlu0 %v909, 112
      %v2688 = vpop.permute.xlu0 %2687
      %2689 = vrot.lane.b32.xlu0 %v917, 80
      %v2690 = vpop.permute.xlu0 %2689
      %v2692 = vsel %vm928, %v2688, 0
      %v2695 = vsel %vm928, %v2690, 0
      %2697 = vmatprep.subr.bf16.mxu0 0
      %2698 = vmatpush1.bf16.xpose.msra.mxu0 0
      %2699 = vmatprep.subr.bf16.mxu0 0
      %2700 = vmatpush1.bf16.xpose.msra.mxu0 0
      %2701 = vmatprep.subr.bf16.mxu0 0
      %2702 = vmatpush1.bf16.xpose.msra.mxu0 0
      %2703 = vmatprep.subr.bf16.mxu0 0
      %2704 = vmatpush1.bf16.xpose.msra.mxu0 0
      %2705 = vmatprep.subr.bf16.mxu0 0
      %2706 = vmatpush1.bf16.xpose.msra.mxu0 0
      %2707 = vmatprep.subr.bf16.mxu0 0
      %2708 = vmatpush1.bf16.xpose.msra.mxu0 0
      %2709 = vmatprep.subr.bf16.mxu0 0
      %2710 = vmatpush1.bf16.xpose.msra.mxu0 0
      %2711 = vmatprep.subr.bf16.mxu0 0
      %2712 = vmatpush1.bf16.xpose.msra.mxu0 %v2695
      %2713 = vmatprep.subr.bf16.mxu0 0
      %2714 = vmatpush2.bf16.xpose.msra.mxu0 0
      %2715 = vmatprep.subr.bf16.mxu0 0
      %2716 = vmatpush2.bf16.xpose.msra.mxu0 0
      %2717 = vmatprep.subr.bf16.mxu0 0
      %2718 = vmatpush2.bf16.xpose.msra.mxu0 0
      %2719 = vmatprep.subr.bf16.mxu0 0
      %2720 = vmatpush2.bf16.xpose.msra.mxu0 0
      %2721 = vmatprep.subr.bf16.mxu0 0
      %2722 = vmatpush2.bf16.xpose.msra.mxu0 0
      %2723 = vmatprep.subr.bf16.mxu0 0
      %2724 = vmatpush2.bf16.xpose.msra.mxu0 0
      %2725 = vmatprep.subr.bf16.mxu0 0
      %2726 = vmatpush2.bf16.xpose.msra.mxu0 0
      %2727 = vmatprep.subr.bf16.mxu0 0
      %2728 = vmatpush2.bf16.xpose.msra.mxu0 0
      %2729 = vmatprep.mubr.bf16.mxu0 0
      %2730 = vmatmul.mubr.bf16.gmra.mxu0 %v2692
      %v2731 = vpop.f32.mrf.mxu0
      %v2732 = vadd.f32 0.0, %v2731
      %v2733 = vpop.f32.mrf.mxu0
      %v2734 = vpop.f32.mrf.mxu0
      %v2735 = vpop.f32.mrf.mxu0
      %2736 = vdwg.mxu0
      %2737 = vrot.lane.b32.xlu0 %v910, 112
      %v2738 = vpop.permute.xlu0 %2737
      %2739 = vrot.lane.b32.xlu0 %v918, 80
      %v2740 = vpop.permute.xlu0 %2739
      %v2742 = vsel %vm928, %v2738, 0
      %v2745 = vsel %vm928, %v2740, 0
      %2747 = vmatprep.subr.bf16.mxu0 0
      %2748 = vmatpush1.bf16.xpose.msra.mxu0 0
      %2749 = vmatprep.subr.bf16.mxu0 0
      %2750 = vmatpush1.bf16.xpose.msra.mxu0 0
      %2751 = vmatprep.subr.bf16.mxu0 0
      %2752 = vmatpush1.bf16.xpose.msra.mxu0 0
      %2753 = vmatprep.subr.bf16.mxu0 0
      %2754 = vmatpush1.bf16.xpose.msra.mxu0 0
      %2755 = vmatprep.subr.bf16.mxu0 0
      %2756 = vmatpush1.bf16.xpose.msra.mxu0 0
      %2757 = vmatprep.subr.bf16.mxu0 0
      %2758 = vmatpush1.bf16.xpose.msra.mxu0 0
      %2759 = vmatprep.subr.bf16.mxu0 0
      %2760 = vmatpush1.bf16.xpose.msra.mxu0 0
      %2761 = vmatprep.subr.bf16.mxu0 0
      %2762 = vmatpush1.bf16.xpose.msra.mxu0 %v2745
      %2763 = vmatprep.subr.bf16.mxu0 0
      %2764 = vmatpush2.bf16.xpose.msra.mxu0 0
      %2765 = vmatprep.subr.bf16.mxu0 0
      %2766 = vmatpush2.bf16.xpose.msra.mxu0 0
      %2767 = vmatprep.subr.bf16.mxu0 0
      %2768 = vmatpush2.bf16.xpose.msra.mxu0 0
      %2769 = vmatprep.subr.bf16.mxu0 0
      %2770 = vmatpush2.bf16.xpose.msra.mxu0 0
      %2771 = vmatprep.subr.bf16.mxu0 0
      %2772 = vmatpush2.bf16.xpose.msra.mxu0 0
      %2773 = vmatprep.subr.bf16.mxu0 0
      %2774 = vmatpush2.bf16.xpose.msra.mxu0 0
      %2775 = vmatprep.subr.bf16.mxu0 0
      %2776 = vmatpush2.bf16.xpose.msra.mxu0 0
      %2777 = vmatprep.subr.bf16.mxu0 0
      %2778 = vmatpush2.bf16.xpose.msra.mxu0 0
      %2779 = vmatprep.mubr.bf16.mxu0 0
      %2780 = vmatmul.mubr.bf16.gmra.mxu0 %v2742
      %v2781 = vpop.f32.mrf.mxu0
      %v2782 = vadd.f32 0.0, %v2781
      %v2783 = vpop.f32.mrf.mxu0
      %v2784 = vpop.f32.mrf.mxu0
      %v2785 = vpop.f32.mrf.mxu0
      %2786 = vdwg.mxu0
      %2787 = vrot.lane.b32.xlu0 %v911, 112
      %v2788 = vpop.permute.xlu0 %2787
      %2789 = vrot.lane.b32.xlu0 %v919, 80
      %v2790 = vpop.permute.xlu0 %2789
      %v2792 = vsel %vm928, %v2788, 0
      %v2795 = vsel %vm928, %v2790, 0
      %2797 = vmatprep.subr.bf16.mxu0 0
      %2798 = vmatpush1.bf16.xpose.msra.mxu0 0
      %2799 = vmatprep.subr.bf16.mxu0 0
      %2800 = vmatpush1.bf16.xpose.msra.mxu0 0
      %2801 = vmatprep.subr.bf16.mxu0 0
      %2802 = vmatpush1.bf16.xpose.msra.mxu0 0
      %2803 = vmatprep.subr.bf16.mxu0 0
      %2804 = vmatpush1.bf16.xpose.msra.mxu0 0
      %2805 = vmatprep.subr.bf16.mxu0 0
      %2806 = vmatpush1.bf16.xpose.msra.mxu0 0
      %2807 = vmatprep.subr.bf16.mxu0 0
      %2808 = vmatpush1.bf16.xpose.msra.mxu0 0
      %2809 = vmatprep.subr.bf16.mxu0 0
      %2810 = vmatpush1.bf16.xpose.msra.mxu0 0
      %2811 = vmatprep.subr.bf16.mxu0 0
      %2812 = vmatpush1.bf16.xpose.msra.mxu0 %v2795
      %2813 = vmatprep.subr.bf16.mxu0 0
      %2814 = vmatpush2.bf16.xpose.msra.mxu0 0
      %2815 = vmatprep.subr.bf16.mxu0 0
      %2816 = vmatpush2.bf16.xpose.msra.mxu0 0
      %2817 = vmatprep.subr.bf16.mxu0 0
      %2818 = vmatpush2.bf16.xpose.msra.mxu0 0
      %2819 = vmatprep.subr.bf16.mxu0 0
      %2820 = vmatpush2.bf16.xpose.msra.mxu0 0
      %2821 = vmatprep.subr.bf16.mxu0 0
      %2822 = vmatpush2.bf16.xpose.msra.mxu0 0
      %2823 = vmatprep.subr.bf16.mxu0 0
      %2824 = vmatpush2.bf16.xpose.msra.mxu0 0
      %2825 = vmatprep.subr.bf16.mxu0 0
      %2826 = vmatpush2.bf16.xpose.msra.mxu0 0
      %2827 = vmatprep.subr.bf16.mxu0 0
      %2828 = vmatpush2.bf16.xpose.msra.mxu0 0
      %2829 = vmatprep.mubr.bf16.mxu0 0
      %2830 = vmatmul.mubr.bf16.gmra.mxu0 %v2792
      %v2831 = vpop.f32.mrf.mxu0
      %v2832 = vadd.f32 0.0, %v2831
      %v2833 = vpop.f32.mrf.mxu0
      %v2834 = vpop.f32.mrf.mxu0
      %v2835 = vpop.f32.mrf.mxu0
      %2836 = vdwg.mxu0
      %2837 = vrot.lane.b32.xlu0 %v912, 112
      %v2838 = vpop.permute.xlu0 %2837
      %2839 = vrot.lane.b32.xlu0 %v920, 80
      %v2840 = vpop.permute.xlu0 %2839
      %v2842 = vsel %vm928, %v2838, 0
      %v2845 = vsel %vm928, %v2840, 0
      %2847 = vmatprep.subr.bf16.mxu0 0
      %2848 = vmatpush1.bf16.xpose.msra.mxu0 0
      %2849 = vmatprep.subr.bf16.mxu0 0
      %2850 = vmatpush1.bf16.xpose.msra.mxu0 0
      %2851 = vmatprep.subr.bf16.mxu0 0
      %2852 = vmatpush1.bf16.xpose.msra.mxu0 0
      %2853 = vmatprep.subr.bf16.mxu0 0
      %2854 = vmatpush1.bf16.xpose.msra.mxu0 0
      %2855 = vmatprep.subr.bf16.mxu0 0
      %2856 = vmatpush1.bf16.xpose.msra.mxu0 0
      %2857 = vmatprep.subr.bf16.mxu0 0
      %2858 = vmatpush1.bf16.xpose.msra.mxu0 0
      %2859 = vmatprep.subr.bf16.mxu0 0
      %2860 = vmatpush1.bf16.xpose.msra.mxu0 0
      %2861 = vmatprep.subr.bf16.mxu0 0
      %2862 = vmatpush1.bf16.xpose.msra.mxu0 %v2845
      %2863 = vmatprep.subr.bf16.mxu0 0
      %2864 = vmatpush2.bf16.xpose.msra.mxu0 0
      %2865 = vmatprep.subr.bf16.mxu0 0
      %2866 = vmatpush2.bf16.xpose.msra.mxu0 0
      %2867 = vmatprep.subr.bf16.mxu0 0
      %2868 = vmatpush2.bf16.xpose.msra.mxu0 0
      %2869 = vmatprep.subr.bf16.mxu0 0
      %2870 = vmatpush2.bf16.xpose.msra.mxu0 0
      %2871 = vmatprep.subr.bf16.mxu0 0
      %2872 = vmatpush2.bf16.xpose.msra.mxu0 0
      %2873 = vmatprep.subr.bf16.mxu0 0
      %2874 = vmatpush2.bf16.xpose.msra.mxu0 0
      %2875 = vmatprep.subr.bf16.mxu0 0
      %2876 = vmatpush2.bf16.xpose.msra.mxu0 0
      %2877 = vmatprep.subr.bf16.mxu0 0
      %2878 = vmatpush2.bf16.xpose.msra.mxu0 0
      %2879 = vmatprep.mubr.bf16.mxu0 0
      %2880 = vmatmul.mubr.bf16.gmra.mxu0 %v2842
      %v2881 = vpop.f32.mrf.mxu0
      %v2882 = vadd.f32 0.0, %v2881
      %v2883 = vpop.f32.mrf.mxu0
      %v2884 = vpop.f32.mrf.mxu0
      %v2885 = vpop.f32.mrf.mxu0
      %2886 = vdwg.mxu0
      %2887 = vrot.lane.b32.xlu0 %v913, 112
      %v2888 = vpop.permute.xlu0 %2887
      %2889 = vrot.lane.b32.xlu0 %v921, 80
      %v2890 = vpop.permute.xlu0 %2889
      %v2892 = vsel %vm928, %v2888, 0
      %v2895 = vsel %vm928, %v2890, 0
      %2897 = vmatprep.subr.bf16.mxu0 0
      %2898 = vmatpush1.bf16.xpose.msra.mxu0 0
      %2899 = vmatprep.subr.bf16.mxu0 0
      %2900 = vmatpush1.bf16.xpose.msra.mxu0 0
      %2901 = vmatprep.subr.bf16.mxu0 0
      %2902 = vmatpush1.bf16.xpose.msra.mxu0 0
      %2903 = vmatprep.subr.bf16.mxu0 0
      %2904 = vmatpush1.bf16.xpose.msra.mxu0 0
      %2905 = vmatprep.subr.bf16.mxu0 0
      %2906 = vmatpush1.bf16.xpose.msra.mxu0 0
      %2907 = vmatprep.subr.bf16.mxu0 0
      %2908 = vmatpush1.bf16.xpose.msra.mxu0 0
      %2909 = vmatprep.subr.bf16.mxu0 0
      %2910 = vmatpush1.bf16.xpose.msra.mxu0 0
      %2911 = vmatprep.subr.bf16.mxu0 0
      %2912 = vmatpush1.bf16.xpose.msra.mxu0 %v2895
      %2913 = vmatprep.subr.bf16.mxu0 0
      %2914 = vmatpush2.bf16.xpose.msra.mxu0 0
      %2915 = vmatprep.subr.bf16.mxu0 0
      %2916 = vmatpush2.bf16.xpose.msra.mxu0 0
      %2917 = vmatprep.subr.bf16.mxu0 0
      %2918 = vmatpush2.bf16.xpose.msra.mxu0 0
      %2919 = vmatprep.subr.bf16.mxu0 0
      %2920 = vmatpush2.bf16.xpose.msra.mxu0 0
      %2921 = vmatprep.subr.bf16.mxu0 0
      %2922 = vmatpush2.bf16.xpose.msra.mxu0 0
      %2923 = vmatprep.subr.bf16.mxu0 0
      %2924 = vmatpush2.bf16.xpose.msra.mxu0 0
      %2925 = vmatprep.subr.bf16.mxu0 0
      %2926 = vmatpush2.bf16.xpose.msra.mxu0 0
      %2927 = vmatprep.subr.bf16.mxu0 0
      %2928 = vmatpush2.bf16.xpose.msra.mxu0 0
      %2929 = vmatprep.mubr.bf16.mxu0 0
      %2930 = vmatmul.mubr.bf16.gmra.mxu0 %v2892
      %v2931 = vpop.f32.mrf.mxu0
      %v2932 = vadd.f32 0.0, %v2931
      %v2933 = vpop.f32.mrf.mxu0
      %v2934 = vpop.f32.mrf.mxu0
      %v2935 = vpop.f32.mrf.mxu0
      %2936 = vdwg.mxu0
      %2937 = vrot.lane.b32.xlu0 %v914, 112
      %v2938 = vpop.permute.xlu0 %2937
      %2939 = vrot.lane.b32.xlu0 %v922, 80
      %v2940 = vpop.permute.xlu0 %2939
      %v2942 = vsel %vm928, %v2938, 0
      %v2945 = vsel %vm928, %v2940, 0
      %2947 = vmatprep.subr.bf16.mxu0 0
      %2948 = vmatpush1.bf16.xpose.msra.mxu0 0
      %2949 = vmatprep.subr.bf16.mxu0 0
      %2950 = vmatpush1.bf16.xpose.msra.mxu0 0
      %2951 = vmatprep.subr.bf16.mxu0 0
      %2952 = vmatpush1.bf16.xpose.msra.mxu0 0
      %2953 = vmatprep.subr.bf16.mxu0 0
      %2954 = vmatpush1.bf16.xpose.msra.mxu0 0
      %2955 = vmatprep.subr.bf16.mxu0 0
      %2956 = vmatpush1.bf16.xpose.msra.mxu0 0
      %2957 = vmatprep.subr.bf16.mxu0 0
      %2958 = vmatpush1.bf16.xpose.msra.mxu0 0
      %2959 = vmatprep.subr.bf16.mxu0 0
      %2960 = vmatpush1.bf16.xpose.msra.mxu0 0
      %2961 = vmatprep.subr.bf16.mxu0 0
      %2962 = vmatpush1.bf16.xpose.msra.mxu0 %v2945
      %2963 = vmatprep.subr.bf16.mxu0 0
      %2964 = vmatpush2.bf16.xpose.msra.mxu0 0
      %2965 = vmatprep.subr.bf16.mxu0 0
      %2966 = vmatpush2.bf16.xpose.msra.mxu0 0
      %2967 = vmatprep.subr.bf16.mxu0 0
      %2968 = vmatpush2.bf16.xpose.msra.mxu0 0
      %2969 = vmatprep.subr.bf16.mxu0 0
      %2970 = vmatpush2.bf16.xpose.msra.mxu0 0
      %2971 = vmatprep.subr.bf16.mxu0 0
      %2972 = vmatpush2.bf16.xpose.msra.mxu0 0
      %2973 = vmatprep.subr.bf16.mxu0 0
      %2974 = vmatpush2.bf16.xpose.msra.mxu0 0
      %2975 = vmatprep.subr.bf16.mxu0 0
      %2976 = vmatpush2.bf16.xpose.msra.mxu0 0
      %2977 = vmatprep.subr.bf16.mxu0 0
      %2978 = vmatpush2.bf16.xpose.msra.mxu0 0
      %2979 = vmatprep.mubr.bf16.mxu0 0
      %2980 = vmatmul.mubr.bf16.gmra.mxu0 %v2942
      %v2981 = vpop.f32.mrf.mxu0
      %v2982 = vadd.f32 0.0, %v2981
      %v2983 = vpop.f32.mrf.mxu0
      %v2984 = vpop.f32.mrf.mxu0
      %v2985 = vpop.f32.mrf.mxu0
      %2986 = vdwg.mxu0
      %2987 = vrot.lane.b32.xlu0 %v915, 112
      %v2988 = vpop.permute.xlu0 %2987
      %2989 = vrot.lane.b32.xlu0 %v923, 80
      %v2990 = vpop.permute.xlu0 %2989
      %v2992 = vsel %vm928, %v2988, 0
      %v2995 = vsel %vm928, %v2990, 0
      %2997 = vmatprep.subr.bf16.mxu0 0
      %2998 = vmatpush1.bf16.xpose.msra.mxu0 0
      %2999 = vmatprep.subr.bf16.mxu0 0
      %3000 = vmatpush1.bf16.xpose.msra.mxu0 0
      %3001 = vmatprep.subr.bf16.mxu0 0
      %3002 = vmatpush1.bf16.xpose.msra.mxu0 0
      %3003 = vmatprep.subr.bf16.mxu0 0
      %3004 = vmatpush1.bf16.xpose.msra.mxu0 0
      %3005 = vmatprep.subr.bf16.mxu0 0
      %3006 = vmatpush1.bf16.xpose.msra.mxu0 0
      %3007 = vmatprep.subr.bf16.mxu0 0
      %3008 = vmatpush1.bf16.xpose.msra.mxu0 0
      %3009 = vmatprep.subr.bf16.mxu0 0
      %3010 = vmatpush1.bf16.xpose.msra.mxu0 0
      %3011 = vmatprep.subr.bf16.mxu0 0
      %3012 = vmatpush1.bf16.xpose.msra.mxu0 %v2995
      %3013 = vmatprep.subr.bf16.mxu0 0
      %3014 = vmatpush2.bf16.xpose.msra.mxu0 0
      %3015 = vmatprep.subr.bf16.mxu0 0
      %3016 = vmatpush2.bf16.xpose.msra.mxu0 0
      %3017 = vmatprep.subr.bf16.mxu0 0
      %3018 = vmatpush2.bf16.xpose.msra.mxu0 0
      %3019 = vmatprep.subr.bf16.mxu0 0
      %3020 = vmatpush2.bf16.xpose.msra.mxu0 0
      %3021 = vmatprep.subr.bf16.mxu0 0
      %3022 = vmatpush2.bf16.xpose.msra.mxu0 0
      %3023 = vmatprep.subr.bf16.mxu0 0
      %3024 = vmatpush2.bf16.xpose.msra.mxu0 0
      %3025 = vmatprep.subr.bf16.mxu0 0
      %3026 = vmatpush2.bf16.xpose.msra.mxu0 0
      %3027 = vmatprep.subr.bf16.mxu0 0
      %3028 = vmatpush2.bf16.xpose.msra.mxu0 0
      %3029 = vmatprep.mubr.bf16.mxu0 0
      %3030 = vmatmul.mubr.bf16.gmra.mxu0 %v2992
      %v3031 = vpop.f32.mrf.mxu0
      %v3032 = vadd.f32 0.0, %v3031
      %v3033 = vpop.f32.mrf.mxu0
      %v3034 = vpop.f32.mrf.mxu0
      %v3035 = vpop.f32.mrf.mxu0
      %3036 = vdwg.mxu0
      %3037 = vrot.lane.b32.xlu0 %v916, 112
      %v3038 = vpop.permute.xlu0 %3037
      %3039 = vrot.lane.b32.xlu0 %v924, 80
      %v3040 = vpop.permute.xlu0 %3039
      %v3042 = vsel %vm928, %v3038, 0
      %v3045 = vsel %vm928, %v3040, 0
      %3047 = vmatprep.subr.bf16.mxu0 0
      %3048 = vmatpush1.bf16.xpose.msra.mxu0 0
      %3049 = vmatprep.subr.bf16.mxu0 0
      %3050 = vmatpush1.bf16.xpose.msra.mxu0 0
      %3051 = vmatprep.subr.bf16.mxu0 0
      %3052 = vmatpush1.bf16.xpose.msra.mxu0 0
      %3053 = vmatprep.subr.bf16.mxu0 0
      %3054 = vmatpush1.bf16.xpose.msra.mxu0 0
      %3055 = vmatprep.subr.bf16.mxu0 0
      %3056 = vmatpush1.bf16.xpose.msra.mxu0 0
      %3057 = vmatprep.subr.bf16.mxu0 0
      %3058 = vmatpush1.bf16.xpose.msra.mxu0 0
      %3059 = vmatprep.subr.bf16.mxu0 0
      %3060 = vmatpush1.bf16.xpose.msra.mxu0 0
      %3061 = vmatprep.subr.bf16.mxu0 0
      %3062 = vmatpush1.bf16.xpose.msra.mxu0 %v3045
      %3063 = vmatprep.subr.bf16.mxu0 0
      %3064 = vmatpush2.bf16.xpose.msra.mxu0 0
      %3065 = vmatprep.subr.bf16.mxu0 0
      %3066 = vmatpush2.bf16.xpose.msra.mxu0 0
      %3067 = vmatprep.subr.bf16.mxu0 0
      %3068 = vmatpush2.bf16.xpose.msra.mxu0 0
      %3069 = vmatprep.subr.bf16.mxu0 0
      %3070 = vmatpush2.bf16.xpose.msra.mxu0 0
      %3071 = vmatprep.subr.bf16.mxu0 0
      %3072 = vmatpush2.bf16.xpose.msra.mxu0 0
      %3073 = vmatprep.subr.bf16.mxu0 0
      %3074 = vmatpush2.bf16.xpose.msra.mxu0 0
      %3075 = vmatprep.subr.bf16.mxu0 0
      %3076 = vmatpush2.bf16.xpose.msra.mxu0 0
      %3077 = vmatprep.subr.bf16.mxu0 0
      %3078 = vmatpush2.bf16.xpose.msra.mxu0 0
      %3079 = vmatprep.mubr.bf16.mxu0 0
      %3080 = vmatmul.mubr.bf16.gmra.mxu0 %v3042
      %v3081 = vpop.f32.mrf.mxu0
      %v3082 = vadd.f32 0.0, %v3081
      %v3083 = vpop.f32.mrf.mxu0
      %v3084 = vpop.f32.mrf.mxu0
      %v3085 = vpop.f32.mrf.mxu0
      %3086 = vdwg.mxu0
      %v3087 = vsel %vm928, %v2732, -inf
      %3088 = vmax.xlane.f32.xlu0 %v3087
      %v3089 = vpop.xlane.xlu0 %3088
      %v3090 = vsel %vm928, %v2782, -inf
      %3091 = vmax.xlane.f32.xlu0 %v3090
      %v3092 = vpop.xlane.xlu0 %3091
      %v3093 = vsel %vm928, %v2832, -inf
      %3094 = vmax.xlane.f32.xlu0 %v3093
      %v3095 = vpop.xlane.xlu0 %3094
      %v3096 = vsel %vm928, %v2882, -inf
      %3097 = vmax.xlane.f32.xlu0 %v3096
      %v3098 = vpop.xlane.xlu0 %3097
      %v3099 = vsel %vm928, %v2932, -inf
      %3100 = vmax.xlane.f32.xlu0 %v3099
      %v3101 = vpop.xlane.xlu0 %3100
      %v3102 = vsel %vm928, %v2982, -inf
      %3103 = vmax.xlane.f32.xlu0 %v3102
      %v3104 = vpop.xlane.xlu0 %3103
      %v3105 = vsel %vm928, %v3032, -inf
      %3106 = vmax.xlane.f32.xlu0 %v3105
      %v3107 = vpop.xlane.xlu0 %3106
      %v3108 = vsel %vm928, %v3082, -inf
      %3109 = vmax.xlane.f32.xlu0 %v3108
      %v3110 = vpop.xlane.xlu0 %3109
      %v3111 = vsub.f32 %v2732, %v3089
      %v3112 = vsub.f32 %v2782, %v3092
      %v3113 = vsub.f32 %v2832, %v3095
      %v3114 = vsub.f32 %v2882, %v3098
      %v3115 = vsub.f32 %v2932, %v3101
      %v3116 = vsub.f32 %v2982, %v3104
      %v3117 = vsub.f32 %v3032, %v3107
      %v3118 = vsub.f32 %v3082, %v3110
      %v3119 = vmul.f32 %v3111, 1.442695
      %v3120 = vpow.pop %v3119
      %v3121 = vmul.f32 %v3112, 1.442695
      %v3122 = vpow.pop %v3121
      %v3123 = vmul.f32 %v3113, 1.442695
      %v3124 = vpow.pop %v3123
      %v3125 = vmul.f32 %v3114, 1.442695
      %v3126 = vpow.pop %v3125
      %v3127 = vmul.f32 %v3115, 1.442695
      %v3128 = vpow.pop %v3127
      %v3129 = vmul.f32 %v3116, 1.442695
      %v3130 = vpow.pop %v3129
      %v3131 = vmul.f32 %v3117, 1.442695
      %v3132 = vpow.pop %v3131
      %v3133 = vmul.f32 %v3118, 1.442695
      %v3134 = vpow.pop %v3133
      %v3135 = vsel %vm928, %v3120, 0.0
      %3136 = vadd.xlane.f32.xlu0 %v3135
      %v3137 = vpop.xlane.xlu0 %3136
      %v3138 = vsel %vm928, %v3122, 0.0
      %3139 = vadd.xlane.f32.xlu0 %v3138
      %v3140 = vpop.xlane.xlu0 %3139
      %v3141 = vsel %vm928, %v3124, 0.0
      %3142 = vadd.xlane.f32.xlu0 %v3141
      %v3143 = vpop.xlane.xlu0 %3142
      %v3144 = vsel %vm928, %v3126, 0.0
      %3145 = vadd.xlane.f32.xlu0 %v3144
      %v3146 = vpop.xlane.xlu0 %3145
      %v3147 = vsel %vm928, %v3128, 0.0
      %3148 = vadd.xlane.f32.xlu0 %v3147
      %v3149 = vpop.xlane.xlu0 %3148
      %v3150 = vsel %vm928, %v3130, 0.0
      %3151 = vadd.xlane.f32.xlu0 %v3150
      %v3152 = vpop.xlane.xlu0 %3151
      %v3153 = vsel %vm928, %v3132, 0.0
      %3154 = vadd.xlane.f32.xlu0 %v3153
      %v3155 = vpop.xlane.xlu0 %3154
      %v3156 = vsel %vm928, %v3134, 0.0
      %3157 = vadd.xlane.f32.xlu0 %v3156
      %v3158 = vpop.xlane.xlu0 %3157
      %v3159 = vrcp.pop %v3137
      %v3160 = vrcp.pop %v3140
      %v3161 = vrcp.pop %v3143
      %v3162 = vrcp.pop %v3146
      %v3163 = vrcp.pop %v3149
      %v3164 = vrcp.pop %v3152
      %v3165 = vrcp.pop %v3155
      %v3166 = vrcp.pop %v3158
      %v3167 = vmul.f32 %v3120, %v3159
      %v3168 = vmul.f32 %v3122, %v3160
      %v3169 = vmul.f32 %v3124, %v3161
      %v3170 = vmul.f32 %v3126, %v3162
      %v3171 = vmul.f32 %v3128, %v3163
      %v3172 = vmul.f32 %v3130, %v3164
      %v3173 = vmul.f32 %v3132, %v3165
      %v3174 = vmul.f32 %v3134, %v3166
      %v3175 = vpack.c.bf16 %v3167, %v3167
      %v3176 = vpack.c.bf16 %v3168, %v3168
      %v3177 = vpack.c.bf16 %v3169, %v3169
      %v3178 = vpack.c.bf16 %v3170, %v3170
      %v3179 = vpack.c.bf16 %v3171, %v3171
      %v3180 = vpack.c.bf16 %v3172, %v3172
      %v3181 = vpack.c.bf16 %v3173, %v3173
      %v3182 = vpack.c.bf16 %v3174, %v3174
      %3183 = vrot.lane.b32.xlu0 %v917, 48
      %v3184 = vpop.permute.xlu0 %3183
      %v3186 = vsel %vm928, %v3175, 0
      %v3189 = vsel %vm1419, %v3184, 0
      %3191 = vmatprep.subr.bf16.mxu0 0
      %3192 = vmatpush1.bf16.msra.mxu0 0
      %3193 = vmatprep.subr.bf16.mxu0 0
      %3194 = vmatpush1.bf16.msra.mxu0 0
      %3195 = vmatprep.subr.bf16.mxu0 0
      %3196 = vmatpush1.bf16.msra.mxu0 0
      %3197 = vmatprep.subr.bf16.mxu0 0
      %3198 = vmatpush1.bf16.msra.mxu0 0
      %3199 = vmatprep.subr.bf16.mxu0 0
      %3200 = vmatpush1.bf16.msra.mxu0 0
      %3201 = vmatprep.subr.bf16.mxu0 0
      %3202 = vmatpush1.bf16.msra.mxu0 0
      %3203 = vmatprep.subr.bf16.mxu0 0
      %3204 = vmatpush1.bf16.msra.mxu0 0
      %3205 = vmatprep.subr.bf16.mxu0 0
      %3206 = vmatpush1.bf16.msra.mxu0 %v3189
      %3207 = vmatprep.subr.bf16.mxu0 0
      %3208 = vmatpush2.bf16.msra.mxu0 0
      %3209 = vmatprep.subr.bf16.mxu0 0
      %3210 = vmatpush2.bf16.msra.mxu0 0
      %3211 = vmatprep.subr.bf16.mxu0 0
      %3212 = vmatpush2.bf16.msra.mxu0 0
      %3213 = vmatprep.subr.bf16.mxu0 0
      %3214 = vmatpush2.bf16.msra.mxu0 0
      %3215 = vmatprep.subr.bf16.mxu0 0
      %3216 = vmatpush2.bf16.msra.mxu0 0
      %3217 = vmatprep.subr.bf16.mxu0 0
      %3218 = vmatpush2.bf16.msra.mxu0 0
      %3219 = vmatprep.subr.bf16.mxu0 0
      %3220 = vmatpush2.bf16.msra.mxu0 0
      %3221 = vmatprep.subr.bf16.mxu0 0
      %3222 = vmatpush2.bf16.msra.mxu0 0
      %3223 = vmatprep.mubr.bf16.mxu0 0
      %3224 = vmatmul.mubr.bf16.gmra.mxu0 %v3186
      %v3225 = vpop.f32.mrf.mxu0
      %v3226 = vadd.f32 0.0, %v3225
      %v3227 = vpop.f32.mrf.mxu0
      %v3228 = vpop.f32.mrf.mxu0
      %v3229 = vpop.f32.mrf.mxu0
      %3230 = vdwg.mxu0
      %3231 = vrot.lane.b32.xlu0 %v918, 48
      %v3232 = vpop.permute.xlu0 %3231
      %v3234 = vsel %vm928, %v3176, 0
      %v3237 = vsel %vm1419, %v3232, 0
      %3239 = vmatprep.subr.bf16.mxu0 0
      %3240 = vmatpush1.bf16.msra.mxu0 0
      %3241 = vmatprep.subr.bf16.mxu0 0
      %3242 = vmatpush1.bf16.msra.mxu0 0
      %3243 = vmatprep.subr.bf16.mxu0 0
      %3244 = vmatpush1.bf16.msra.mxu0 0
      %3245 = vmatprep.subr.bf16.mxu0 0
      %3246 = vmatpush1.bf16.msra.mxu0 0
      %3247 = vmatprep.subr.bf16.mxu0 0
      %3248 = vmatpush1.bf16.msra.mxu0 0
      %3249 = vmatprep.subr.bf16.mxu0 0
      %3250 = vmatpush1.bf16.msra.mxu0 0
      %3251 = vmatprep.subr.bf16.mxu0 0
      %3252 = vmatpush1.bf16.msra.mxu0 0
      %3253 = vmatprep.subr.bf16.mxu0 0
      %3254 = vmatpush1.bf16.msra.mxu0 %v3237
      %3255 = vmatprep.subr.bf16.mxu0 0
      %3256 = vmatpush2.bf16.msra.mxu0 0
      %3257 = vmatprep.subr.bf16.mxu0 0
      %3258 = vmatpush2.bf16.msra.mxu0 0
      %3259 = vmatprep.subr.bf16.mxu0 0
      %3260 = vmatpush2.bf16.msra.mxu0 0
      %3261 = vmatprep.subr.bf16.mxu0 0
      %3262 = vmatpush2.bf16.msra.mxu0 0
      %3263 = vmatprep.subr.bf16.mxu0 0
      %3264 = vmatpush2.bf16.msra.mxu0 0
      %3265 = vmatprep.subr.bf16.mxu0 0
      %3266 = vmatpush2.bf16.msra.mxu0 0
      %3267 = vmatprep.subr.bf16.mxu0 0
      %3268 = vmatpush2.bf16.msra.mxu0 0
      %3269 = vmatprep.subr.bf16.mxu0 0
      %3270 = vmatpush2.bf16.msra.mxu0 0
      %3271 = vmatprep.mubr.bf16.mxu0 0
      %3272 = vmatmul.mubr.bf16.gmra.mxu0 %v3234
      %v3273 = vpop.f32.mrf.mxu0
      %v3274 = vadd.f32 0.0, %v3273
      %v3275 = vpop.f32.mrf.mxu0
      %v3276 = vpop.f32.mrf.mxu0
      %v3277 = vpop.f32.mrf.mxu0
      %3278 = vdwg.mxu0
      %3279 = vrot.lane.b32.xlu0 %v919, 48
      %v3280 = vpop.permute.xlu0 %3279
      %v3282 = vsel %vm928, %v3177, 0
      %v3285 = vsel %vm1419, %v3280, 0
      %3287 = vmatprep.subr.bf16.mxu0 0
      %3288 = vmatpush1.bf16.msra.mxu0 0
      %3289 = vmatprep.subr.bf16.mxu0 0
      %3290 = vmatpush1.bf16.msra.mxu0 0
      %3291 = vmatprep.subr.bf16.mxu0 0
      %3292 = vmatpush1.bf16.msra.mxu0 0
      %3293 = vmatprep.subr.bf16.mxu0 0
      %3294 = vmatpush1.bf16.msra.mxu0 0
      %3295 = vmatprep.subr.bf16.mxu0 0
      %3296 = vmatpush1.bf16.msra.mxu0 0
      %3297 = vmatprep.subr.bf16.mxu0 0
      %3298 = vmatpush1.bf16.msra.mxu0 0
      %3299 = vmatprep.subr.bf16.mxu0 0
      %3300 = vmatpush1.bf16.msra.mxu0 0
      %3301 = vmatprep.subr.bf16.mxu0 0
      %3302 = vmatpush1.bf16.msra.mxu0 %v3285
      %3303 = vmatprep.subr.bf16.mxu0 0
      %3304 = vmatpush2.bf16.msra.mxu0 0
      %3305 = vmatprep.subr.bf16.mxu0 0
      %3306 = vmatpush2.bf16.msra.mxu0 0
      %3307 = vmatprep.subr.bf16.mxu0 0
      %3308 = vmatpush2.bf16.msra.mxu0 0
      %3309 = vmatprep.subr.bf16.mxu0 0
      %3310 = vmatpush2.bf16.msra.mxu0 0
      %3311 = vmatprep.subr.bf16.mxu0 0
      %3312 = vmatpush2.bf16.msra.mxu0 0
      %3313 = vmatprep.subr.bf16.mxu0 0
      %3314 = vmatpush2.bf16.msra.mxu0 0
      %3315 = vmatprep.subr.bf16.mxu0 0
      %3316 = vmatpush2.bf16.msra.mxu0 0
      %3317 = vmatprep.subr.bf16.mxu0 0
      %3318 = vmatpush2.bf16.msra.mxu0 0
      %3319 = vmatprep.mubr.bf16.mxu0 0
      %3320 = vmatmul.mubr.bf16.gmra.mxu0 %v3282
      %v3321 = vpop.f32.mrf.mxu0
      %v3322 = vadd.f32 0.0, %v3321
      %v3323 = vpop.f32.mrf.mxu0
      %v3324 = vpop.f32.mrf.mxu0
      %v3325 = vpop.f32.mrf.mxu0
      %3326 = vdwg.mxu0
      %3327 = vrot.lane.b32.xlu0 %v920, 48
      %v3328 = vpop.permute.xlu0 %3327
      %v3330 = vsel %vm928, %v3178, 0
      %v3333 = vsel %vm1419, %v3328, 0
      %3335 = vmatprep.subr.bf16.mxu0 0
      %3336 = vmatpush1.bf16.msra.mxu0 0
      %3337 = vmatprep.subr.bf16.mxu0 0
      %3338 = vmatpush1.bf16.msra.mxu0 0
      %3339 = vmatprep.subr.bf16.mxu0 0
      %3340 = vmatpush1.bf16.msra.mxu0 0
      %3341 = vmatprep.subr.bf16.mxu0 0
      %3342 = vmatpush1.bf16.msra.mxu0 0
      %3343 = vmatprep.subr.bf16.mxu0 0
      %3344 = vmatpush1.bf16.msra.mxu0 0
      %3345 = vmatprep.subr.bf16.mxu0 0
      %3346 = vmatpush1.bf16.msra.mxu0 0
      %3347 = vmatprep.subr.bf16.mxu0 0
      %3348 = vmatpush1.bf16.msra.mxu0 0
      %3349 = vmatprep.subr.bf16.mxu0 0
      %3350 = vmatpush1.bf16.msra.mxu0 %v3333
      %3351 = vmatprep.subr.bf16.mxu0 0
      %3352 = vmatpush2.bf16.msra.mxu0 0
      %3353 = vmatprep.subr.bf16.mxu0 0
      %3354 = vmatpush2.bf16.msra.mxu0 0
      %3355 = vmatprep.subr.bf16.mxu0 0
      %3356 = vmatpush2.bf16.msra.mxu0 0
      %3357 = vmatprep.subr.bf16.mxu0 0
      %3358 = vmatpush2.bf16.msra.mxu0 0
      %3359 = vmatprep.subr.bf16.mxu0 0
      %3360 = vmatpush2.bf16.msra.mxu0 0
      %3361 = vmatprep.subr.bf16.mxu0 0
      %3362 = vmatpush2.bf16.msra.mxu0 0
      %3363 = vmatprep.subr.bf16.mxu0 0
      %3364 = vmatpush2.bf16.msra.mxu0 0
      %3365 = vmatprep.subr.bf16.mxu0 0
      %3366 = vmatpush2.bf16.msra.mxu0 0
      %3367 = vmatprep.mubr.bf16.mxu0 0
      %3368 = vmatmul.mubr.bf16.gmra.mxu0 %v3330
      %v3369 = vpop.f32.mrf.mxu0
      %v3370 = vadd.f32 0.0, %v3369
      %v3371 = vpop.f32.mrf.mxu0
      %v3372 = vpop.f32.mrf.mxu0
      %v3373 = vpop.f32.mrf.mxu0
      %3374 = vdwg.mxu0
      %3375 = vrot.lane.b32.xlu0 %v921, 48
      %v3376 = vpop.permute.xlu0 %3375
      %v3378 = vsel %vm928, %v3179, 0
      %v3381 = vsel %vm1419, %v3376, 0
      %3383 = vmatprep.subr.bf16.mxu0 0
      %3384 = vmatpush1.bf16.msra.mxu0 0
      %3385 = vmatprep.subr.bf16.mxu0 0
      %3386 = vmatpush1.bf16.msra.mxu0 0
      %3387 = vmatprep.subr.bf16.mxu0 0
      %3388 = vmatpush1.bf16.msra.mxu0 0
      %3389 = vmatprep.subr.bf16.mxu0 0
      %3390 = vmatpush1.bf16.msra.mxu0 0
      %3391 = vmatprep.subr.bf16.mxu0 0
      %3392 = vmatpush1.bf16.msra.mxu0 0
      %3393 = vmatprep.subr.bf16.mxu0 0
      %3394 = vmatpush1.bf16.msra.mxu0 0
      %3395 = vmatprep.subr.bf16.mxu0 0
      %3396 = vmatpush1.bf16.msra.mxu0 0
      %3397 = vmatprep.subr.bf16.mxu0 0
      %3398 = vmatpush1.bf16.msra.mxu0 %v3381
      %3399 = vmatprep.subr.bf16.mxu0 0
      %3400 = vmatpush2.bf16.msra.mxu0 0
      %3401 = vmatprep.subr.bf16.mxu0 0
      %3402 = vmatpush2.bf16.msra.mxu0 0
      %3403 = vmatprep.subr.bf16.mxu0 0
      %3404 = vmatpush2.bf16.msra.mxu0 0
      %3405 = vmatprep.subr.bf16.mxu0 0
      %3406 = vmatpush2.bf16.msra.mxu0 0
      %3407 = vmatprep.subr.bf16.mxu0 0
      %3408 = vmatpush2.bf16.msra.mxu0 0
      %3409 = vmatprep.subr.bf16.mxu0 0
      %3410 = vmatpush2.bf16.msra.mxu0 0
      %3411 = vmatprep.subr.bf16.mxu0 0
      %3412 = vmatpush2.bf16.msra.mxu0 0
      %3413 = vmatprep.subr.bf16.mxu0 0
      %3414 = vmatpush2.bf16.msra.mxu0 0
      %3415 = vmatprep.mubr.bf16.mxu0 0
      %3416 = vmatmul.mubr.bf16.gmra.mxu0 %v3378
      %v3417 = vpop.f32.mrf.mxu0
      %v3418 = vadd.f32 0.0, %v3417
      %v3419 = vpop.f32.mrf.mxu0
      %v3420 = vpop.f32.mrf.mxu0
      %v3421 = vpop.f32.mrf.mxu0
      %3422 = vdwg.mxu0
      %3423 = vrot.lane.b32.xlu0 %v922, 48
      %v3424 = vpop.permute.xlu0 %3423
      %v3426 = vsel %vm928, %v3180, 0
      %v3429 = vsel %vm1419, %v3424, 0
      %3431 = vmatprep.subr.bf16.mxu0 0
      %3432 = vmatpush1.bf16.msra.mxu0 0
      %3433 = vmatprep.subr.bf16.mxu0 0
      %3434 = vmatpush1.bf16.msra.mxu0 0
      %3435 = vmatprep.subr.bf16.mxu0 0
      %3436 = vmatpush1.bf16.msra.mxu0 0
      %3437 = vmatprep.subr.bf16.mxu0 0
      %3438 = vmatpush1.bf16.msra.mxu0 0
      %3439 = vmatprep.subr.bf16.mxu0 0
      %3440 = vmatpush1.bf16.msra.mxu0 0
      %3441 = vmatprep.subr.bf16.mxu0 0
      %3442 = vmatpush1.bf16.msra.mxu0 0
      %3443 = vmatprep.subr.bf16.mxu0 0
      %3444 = vmatpush1.bf16.msra.mxu0 0
      %3445 = vmatprep.subr.bf16.mxu0 0
      %3446 = vmatpush1.bf16.msra.mxu0 %v3429
      %3447 = vmatprep.subr.bf16.mxu0 0
      %3448 = vmatpush2.bf16.msra.mxu0 0
      %3449 = vmatprep.subr.bf16.mxu0 0
      %3450 = vmatpush2.bf16.msra.mxu0 0
      %3451 = vmatprep.subr.bf16.mxu0 0
      %3452 = vmatpush2.bf16.msra.mxu0 0
      %3453 = vmatprep.subr.bf16.mxu0 0
      %3454 = vmatpush2.bf16.msra.mxu0 0
      %3455 = vmatprep.subr.bf16.mxu0 0
      %3456 = vmatpush2.bf16.msra.mxu0 0
      %3457 = vmatprep.subr.bf16.mxu0 0
      %3458 = vmatpush2.bf16.msra.mxu0 0
      %3459 = vmatprep.subr.bf16.mxu0 0
      %3460 = vmatpush2.bf16.msra.mxu0 0
      %3461 = vmatprep.subr.bf16.mxu0 0
      %3462 = vmatpush2.bf16.msra.mxu0 0
      %3463 = vmatprep.mubr.bf16.mxu0 0
      %3464 = vmatmul.mubr.bf16.gmra.mxu0 %v3426
      %v3465 = vpop.f32.mrf.mxu0
      %v3466 = vadd.f32 0.0, %v3465
      %v3467 = vpop.f32.mrf.mxu0
      %v3468 = vpop.f32.mrf.mxu0
      %v3469 = vpop.f32.mrf.mxu0
      %3470 = vdwg.mxu0
      %3471 = vrot.lane.b32.xlu0 %v923, 48
      %v3472 = vpop.permute.xlu0 %3471
      %v3474 = vsel %vm928, %v3181, 0
      %v3477 = vsel %vm1419, %v3472, 0
      %3479 = vmatprep.subr.bf16.mxu0 0
      %3480 = vmatpush1.bf16.msra.mxu0 0
      %3481 = vmatprep.subr.bf16.mxu0 0
      %3482 = vmatpush1.bf16.msra.mxu0 0
      %3483 = vmatprep.subr.bf16.mxu0 0
      %3484 = vmatpush1.bf16.msra.mxu0 0
      %3485 = vmatprep.subr.bf16.mxu0 0
      %3486 = vmatpush1.bf16.msra.mxu0 0
      %3487 = vmatprep.subr.bf16.mxu0 0
      %3488 = vmatpush1.bf16.msra.mxu0 0
      %3489 = vmatprep.subr.bf16.mxu0 0
      %3490 = vmatpush1.bf16.msra.mxu0 0
      %3491 = vmatprep.subr.bf16.mxu0 0
      %3492 = vmatpush1.bf16.msra.mxu0 0
      %3493 = vmatprep.subr.bf16.mxu0 0
      %3494 = vmatpush1.bf16.msra.mxu0 %v3477
      %3495 = vmatprep.subr.bf16.mxu0 0
      %3496 = vmatpush2.bf16.msra.mxu0 0
      %3497 = vmatprep.subr.bf16.mxu0 0
      %3498 = vmatpush2.bf16.msra.mxu0 0
      %3499 = vmatprep.subr.bf16.mxu0 0
      %3500 = vmatpush2.bf16.msra.mxu0 0
      %3501 = vmatprep.subr.bf16.mxu0 0
      %3502 = vmatpush2.bf16.msra.mxu0 0
      %3503 = vmatprep.subr.bf16.mxu0 0
      %3504 = vmatpush2.bf16.msra.mxu0 0
      %3505 = vmatprep.subr.bf16.mxu0 0
      %3506 = vmatpush2.bf16.msra.mxu0 0
      %3507 = vmatprep.subr.bf16.mxu0 0
      %3508 = vmatpush2.bf16.msra.mxu0 0
      %3509 = vmatprep.subr.bf16.mxu0 0
      %3510 = vmatpush2.bf16.msra.mxu0 0
      %3511 = vmatprep.mubr.bf16.mxu0 0
      %3512 = vmatmul.mubr.bf16.gmra.mxu0 %v3474
      %v3513 = vpop.f32.mrf.mxu0
      %v3514 = vadd.f32 0.0, %v3513
      %v3515 = vpop.f32.mrf.mxu0
      %v3516 = vpop.f32.mrf.mxu0
      %v3517 = vpop.f32.mrf.mxu0
      %3518 = vdwg.mxu0
      %3519 = vrot.lane.b32.xlu0 %v924, 48
      %v3520 = vpop.permute.xlu0 %3519
      %v3522 = vsel %vm928, %v3182, 0
      %v3525 = vsel %vm1419, %v3520, 0
      %3527 = vmatprep.subr.bf16.mxu0 0
      %3528 = vmatpush1.bf16.msra.mxu0 0
      %3529 = vmatprep.subr.bf16.mxu0 0
      %3530 = vmatpush1.bf16.msra.mxu0 0
      %3531 = vmatprep.subr.bf16.mxu0 0
      %3532 = vmatpush1.bf16.msra.mxu0 0
      %3533 = vmatprep.subr.bf16.mxu0 0
      %3534 = vmatpush1.bf16.msra.mxu0 0
      %3535 = vmatprep.subr.bf16.mxu0 0
      %3536 = vmatpush1.bf16.msra.mxu0 0
      %3537 = vmatprep.subr.bf16.mxu0 0
      %3538 = vmatpush1.bf16.msra.mxu0 0
      %3539 = vmatprep.subr.bf16.mxu0 0
      %3540 = vmatpush1.bf16.msra.mxu0 0
      %3541 = vmatprep.subr.bf16.mxu0 0
      %3542 = vmatpush1.bf16.msra.mxu0 %v3525
      %3543 = vmatprep.subr.bf16.mxu0 0
      %3544 = vmatpush2.bf16.msra.mxu0 0
      %3545 = vmatprep.subr.bf16.mxu0 0
      %3546 = vmatpush2.bf16.msra.mxu0 0
      %3547 = vmatprep.subr.bf16.mxu0 0
      %3548 = vmatpush2.bf16.msra.mxu0 0
      %3549 = vmatprep.subr.bf16.mxu0 0
      %3550 = vmatpush2.bf16.msra.mxu0 0
      %3551 = vmatprep.subr.bf16.mxu0 0
      %3552 = vmatpush2.bf16.msra.mxu0 0
      %3553 = vmatprep.subr.bf16.mxu0 0
      %3554 = vmatpush2.bf16.msra.mxu0 0
      %3555 = vmatprep.subr.bf16.mxu0 0
      %3556 = vmatpush2.bf16.msra.mxu0 0
      %3557 = vmatprep.subr.bf16.mxu0 0
      %3558 = vmatpush2.bf16.msra.mxu0 0
      %3559 = vmatprep.mubr.bf16.mxu0 0
      %3560 = vmatmul.mubr.bf16.gmra.mxu0 %v3522
      %v3561 = vpop.f32.mrf.mxu0
      %v3562 = vadd.f32 0.0, %v3561
      %v3563 = vpop.f32.mrf.mxu0
      %v3564 = vpop.f32.mrf.mxu0
      %v3565 = vpop.f32.mrf.mxu0
      %3566 = vdwg.mxu0
      %3567 = vrot.lane.b32.xlu0 %v909, 104
      %v3568 = vpop.permute.xlu0 %3567
      %3569 = vrot.lane.b32.xlu0 %v917, 72
      %v3570 = vpop.permute.xlu0 %3569
      %v3572 = vsel %vm928, %v3568, 0
      %v3575 = vsel %vm928, %v3570, 0
      %3577 = vmatprep.subr.bf16.mxu0 0
      %3578 = vmatpush1.bf16.xpose.msra.mxu0 0
      %3579 = vmatprep.subr.bf16.mxu0 0
      %3580 = vmatpush1.bf16.xpose.msra.mxu0 0
      %3581 = vmatprep.subr.bf16.mxu0 0
      %3582 = vmatpush1.bf16.xpose.msra.mxu0 0
      %3583 = vmatprep.subr.bf16.mxu0 0
      %3584 = vmatpush1.bf16.xpose.msra.mxu0 0
      %3585 = vmatprep.subr.bf16.mxu0 0
      %3586 = vmatpush1.bf16.xpose.msra.mxu0 0
      %3587 = vmatprep.subr.bf16.mxu0 0
      %3588 = vmatpush1.bf16.xpose.msra.mxu0 0
      %3589 = vmatprep.subr.bf16.mxu0 0
      %3590 = vmatpush1.bf16.xpose.msra.mxu0 0
      %3591 = vmatprep.subr.bf16.mxu0 0
      %3592 = vmatpush1.bf16.xpose.msra.mxu0 %v3575
      %3593 = vmatprep.subr.bf16.mxu0 0
      %3594 = vmatpush2.bf16.xpose.msra.mxu0 0
      %3595 = vmatprep.subr.bf16.mxu0 0
      %3596 = vmatpush2.bf16.xpose.msra.mxu0 0
      %3597 = vmatprep.subr.bf16.mxu0 0
      %3598 = vmatpush2.bf16.xpose.msra.mxu0 0
      %3599 = vmatprep.subr.bf16.mxu0 0
      %3600 = vmatpush2.bf16.xpose.msra.mxu0 0
      %3601 = vmatprep.subr.bf16.mxu0 0
      %3602 = vmatpush2.bf16.xpose.msra.mxu0 0
      %3603 = vmatprep.subr.bf16.mxu0 0
      %3604 = vmatpush2.bf16.xpose.msra.mxu0 0
      %3605 = vmatprep.subr.bf16.mxu0 0
      %3606 = vmatpush2.bf16.xpose.msra.mxu0 0
      %3607 = vmatprep.subr.bf16.mxu0 0
      %3608 = vmatpush2.bf16.xpose.msra.mxu0 0
      %3609 = vmatprep.mubr.bf16.mxu0 0
      %3610 = vmatmul.mubr.bf16.gmra.mxu0 %v3572
      %v3611 = vpop.f32.mrf.mxu0
      %v3612 = vadd.f32 0.0, %v3611
      %v3613 = vpop.f32.mrf.mxu0
      %v3614 = vpop.f32.mrf.mxu0
      %v3615 = vpop.f32.mrf.mxu0
      %3616 = vdwg.mxu0
      %3617 = vrot.lane.b32.xlu0 %v910, 104
      %v3618 = vpop.permute.xlu0 %3617
      %3619 = vrot.lane.b32.xlu0 %v918, 72
      %v3620 = vpop.permute.xlu0 %3619
      %v3622 = vsel %vm928, %v3618, 0
      %v3625 = vsel %vm928, %v3620, 0
      %3627 = vmatprep.subr.bf16.mxu0 0
      %3628 = vmatpush1.bf16.xpose.msra.mxu0 0
      %3629 = vmatprep.subr.bf16.mxu0 0
      %3630 = vmatpush1.bf16.xpose.msra.mxu0 0
      %3631 = vmatprep.subr.bf16.mxu0 0
      %3632 = vmatpush1.bf16.xpose.msra.mxu0 0
      %3633 = vmatprep.subr.bf16.mxu0 0
      %3634 = vmatpush1.bf16.xpose.msra.mxu0 0
      %3635 = vmatprep.subr.bf16.mxu0 0
      %3636 = vmatpush1.bf16.xpose.msra.mxu0 0
      %3637 = vmatprep.subr.bf16.mxu0 0
      %3638 = vmatpush1.bf16.xpose.msra.mxu0 0
      %3639 = vmatprep.subr.bf16.mxu0 0
      %3640 = vmatpush1.bf16.xpose.msra.mxu0 0
      %3641 = vmatprep.subr.bf16.mxu0 0
      %3642 = vmatpush1.bf16.xpose.msra.mxu0 %v3625
      %3643 = vmatprep.subr.bf16.mxu0 0
      %3644 = vmatpush2.bf16.xpose.msra.mxu0 0
      %3645 = vmatprep.subr.bf16.mxu0 0
      %3646 = vmatpush2.bf16.xpose.msra.mxu0 0
      %3647 = vmatprep.subr.bf16.mxu0 0
      %3648 = vmatpush2.bf16.xpose.msra.mxu0 0
      %3649 = vmatprep.subr.bf16.mxu0 0
      %3650 = vmatpush2.bf16.xpose.msra.mxu0 0
      %3651 = vmatprep.subr.bf16.mxu0 0
      %3652 = vmatpush2.bf16.xpose.msra.mxu0 0
      %3653 = vmatprep.subr.bf16.mxu0 0
      %3654 = vmatpush2.bf16.xpose.msra.mxu0 0
      %3655 = vmatprep.subr.bf16.mxu0 0
      %3656 = vmatpush2.bf16.xpose.msra.mxu0 0
      %3657 = vmatprep.subr.bf16.mxu0 0
      %3658 = vmatpush2.bf16.xpose.msra.mxu0 0
      %3659 = vmatprep.mubr.bf16.mxu0 0
      %3660 = vmatmul.mubr.bf16.gmra.mxu0 %v3622
      %v3661 = vpop.f32.mrf.mxu0
      %v3662 = vadd.f32 0.0, %v3661
      %v3663 = vpop.f32.mrf.mxu0
      %v3664 = vpop.f32.mrf.mxu0
      %v3665 = vpop.f32.mrf.mxu0
      %3666 = vdwg.mxu0
      %3667 = vrot.lane.b32.xlu0 %v911, 104
      %v3668 = vpop.permute.xlu0 %3667
      %3669 = vrot.lane.b32.xlu0 %v919, 72
      %v3670 = vpop.permute.xlu0 %3669
      %v3672 = vsel %vm928, %v3668, 0
      %v3675 = vsel %vm928, %v3670, 0
      %3677 = vmatprep.subr.bf16.mxu0 0
      %3678 = vmatpush1.bf16.xpose.msra.mxu0 0
      %3679 = vmatprep.subr.bf16.mxu0 0
      %3680 = vmatpush1.bf16.xpose.msra.mxu0 0
      %3681 = vmatprep.subr.bf16.mxu0 0
      %3682 = vmatpush1.bf16.xpose.msra.mxu0 0
      %3683 = vmatprep.subr.bf16.mxu0 0
      %3684 = vmatpush1.bf16.xpose.msra.mxu0 0
      %3685 = vmatprep.subr.bf16.mxu0 0
      %3686 = vmatpush1.bf16.xpose.msra.mxu0 0
      %3687 = vmatprep.subr.bf16.mxu0 0
      %3688 = vmatpush1.bf16.xpose.msra.mxu0 0
      %3689 = vmatprep.subr.bf16.mxu0 0
      %3690 = vmatpush1.bf16.xpose.msra.mxu0 0
      %3691 = vmatprep.subr.bf16.mxu0 0
      %3692 = vmatpush1.bf16.xpose.msra.mxu0 %v3675
      %3693 = vmatprep.subr.bf16.mxu0 0
      %3694 = vmatpush2.bf16.xpose.msra.mxu0 0
      %3695 = vmatprep.subr.bf16.mxu0 0
      %3696 = vmatpush2.bf16.xpose.msra.mxu0 0
      %3697 = vmatprep.subr.bf16.mxu0 0
      %3698 = vmatpush2.bf16.xpose.msra.mxu0 0
      %3699 = vmatprep.subr.bf16.mxu0 0
      %3700 = vmatpush2.bf16.xpose.msra.mxu0 0
      %3701 = vmatprep.subr.bf16.mxu0 0
      %3702 = vmatpush2.bf16.xpose.msra.mxu0 0
      %3703 = vmatprep.subr.bf16.mxu0 0
      %3704 = vmatpush2.bf16.xpose.msra.mxu0 0
      %3705 = vmatprep.subr.bf16.mxu0 0
      %3706 = vmatpush2.bf16.xpose.msra.mxu0 0
      %3707 = vmatprep.subr.bf16.mxu0 0
      %3708 = vmatpush2.bf16.xpose.msra.mxu0 0
      %3709 = vmatprep.mubr.bf16.mxu0 0
      %3710 = vmatmul.mubr.bf16.gmra.mxu0 %v3672
      %v3711 = vpop.f32.mrf.mxu0
      %v3712 = vadd.f32 0.0, %v3711
      %v3713 = vpop.f32.mrf.mxu0
      %v3714 = vpop.f32.mrf.mxu0
      %v3715 = vpop.f32.mrf.mxu0
      %3716 = vdwg.mxu0
      %3717 = vrot.lane.b32.xlu0 %v912, 104
      %v3718 = vpop.permute.xlu0 %3717
      %3719 = vrot.lane.b32.xlu0 %v920, 72
      %v3720 = vpop.permute.xlu0 %3719
      %v3722 = vsel %vm928, %v3718, 0
      %v3725 = vsel %vm928, %v3720, 0
      %3727 = vmatprep.subr.bf16.mxu0 0
      %3728 = vmatpush1.bf16.xpose.msra.mxu0 0
      %3729 = vmatprep.subr.bf16.mxu0 0
      %3730 = vmatpush1.bf16.xpose.msra.mxu0 0
      %3731 = vmatprep.subr.bf16.mxu0 0
      %3732 = vmatpush1.bf16.xpose.msra.mxu0 0
      %3733 = vmatprep.subr.bf16.mxu0 0
      %3734 = vmatpush1.bf16.xpose.msra.mxu0 0
      %3735 = vmatprep.subr.bf16.mxu0 0
      %3736 = vmatpush1.bf16.xpose.msra.mxu0 0
      %3737 = vmatprep.subr.bf16.mxu0 0
      %3738 = vmatpush1.bf16.xpose.msra.mxu0 0
      %3739 = vmatprep.subr.bf16.mxu0 0
      %3740 = vmatpush1.bf16.xpose.msra.mxu0 0
      %3741 = vmatprep.subr.bf16.mxu0 0
      %3742 = vmatpush1.bf16.xpose.msra.mxu0 %v3725
      %3743 = vmatprep.subr.bf16.mxu0 0
      %3744 = vmatpush2.bf16.xpose.msra.mxu0 0
      %3745 = vmatprep.subr.bf16.mxu0 0
      %3746 = vmatpush2.bf16.xpose.msra.mxu0 0
      %3747 = vmatprep.subr.bf16.mxu0 0
      %3748 = vmatpush2.bf16.xpose.msra.mxu0 0
      %3749 = vmatprep.subr.bf16.mxu0 0
      %3750 = vmatpush2.bf16.xpose.msra.mxu0 0
      %3751 = vmatprep.subr.bf16.mxu0 0
      %3752 = vmatpush2.bf16.xpose.msra.mxu0 0
      %3753 = vmatprep.subr.bf16.mxu0 0
      %3754 = vmatpush2.bf16.xpose.msra.mxu0 0
      %3755 = vmatprep.subr.bf16.mxu0 0
      %3756 = vmatpush2.bf16.xpose.msra.mxu0 0
      %3757 = vmatprep.subr.bf16.mxu0 0
      %3758 = vmatpush2.bf16.xpose.msra.mxu0 0
      %3759 = vmatprep.mubr.bf16.mxu0 0
      %3760 = vmatmul.mubr.bf16.gmra.mxu0 %v3722
      %v3761 = vpop.f32.mrf.mxu0
      %v3762 = vadd.f32 0.0, %v3761
      %v3763 = vpop.f32.mrf.mxu0
      %v3764 = vpop.f32.mrf.mxu0
      %v3765 = vpop.f32.mrf.mxu0
      %3766 = vdwg.mxu0
      %3767 = vrot.lane.b32.xlu0 %v913, 104
      %v3768 = vpop.permute.xlu0 %3767
      %3769 = vrot.lane.b32.xlu0 %v921, 72
      %v3770 = vpop.permute.xlu0 %3769
      %v3772 = vsel %vm928, %v3768, 0
      %v3775 = vsel %vm928, %v3770, 0
      %3777 = vmatprep.subr.bf16.mxu0 0
      %3778 = vmatpush1.bf16.xpose.msra.mxu0 0
      %3779 = vmatprep.subr.bf16.mxu0 0
      %3780 = vmatpush1.bf16.xpose.msra.mxu0 0
      %3781 = vmatprep.subr.bf16.mxu0 0
      %3782 = vmatpush1.bf16.xpose.msra.mxu0 0
      %3783 = vmatprep.subr.bf16.mxu0 0
      %3784 = vmatpush1.bf16.xpose.msra.mxu0 0
      %3785 = vmatprep.subr.bf16.mxu0 0
      %3786 = vmatpush1.bf16.xpose.msra.mxu0 0
      %3787 = vmatprep.subr.bf16.mxu0 0
      %3788 = vmatpush1.bf16.xpose.msra.mxu0 0
      %3789 = vmatprep.subr.bf16.mxu0 0
      %3790 = vmatpush1.bf16.xpose.msra.mxu0 0
      %3791 = vmatprep.subr.bf16.mxu0 0
      %3792 = vmatpush1.bf16.xpose.msra.mxu0 %v3775
      %3793 = vmatprep.subr.bf16.mxu0 0
      %3794 = vmatpush2.bf16.xpose.msra.mxu0 0
      %3795 = vmatprep.subr.bf16.mxu0 0
      %3796 = vmatpush2.bf16.xpose.msra.mxu0 0
      %3797 = vmatprep.subr.bf16.mxu0 0
      %3798 = vmatpush2.bf16.xpose.msra.mxu0 0
      %3799 = vmatprep.subr.bf16.mxu0 0
      %3800 = vmatpush2.bf16.xpose.msra.mxu0 0
      %3801 = vmatprep.subr.bf16.mxu0 0
      %3802 = vmatpush2.bf16.xpose.msra.mxu0 0
      %3803 = vmatprep.subr.bf16.mxu0 0
      %3804 = vmatpush2.bf16.xpose.msra.mxu0 0
      %3805 = vmatprep.subr.bf16.mxu0 0
      %3806 = vmatpush2.bf16.xpose.msra.mxu0 0
      %3807 = vmatprep.subr.bf16.mxu0 0
      %3808 = vmatpush2.bf16.xpose.msra.mxu0 0
      %3809 = vmatprep.mubr.bf16.mxu0 0
      %3810 = vmatmul.mubr.bf16.gmra.mxu0 %v3772
      %v3811 = vpop.f32.mrf.mxu0
      %v3812 = vadd.f32 0.0, %v3811
      %v3813 = vpop.f32.mrf.mxu0
      %v3814 = vpop.f32.mrf.mxu0
      %v3815 = vpop.f32.mrf.mxu0
      %3816 = vdwg.mxu0
      %3817 = vrot.lane.b32.xlu0 %v914, 104
      %v3818 = vpop.permute.xlu0 %3817
      %3819 = vrot.lane.b32.xlu0 %v922, 72
      %v3820 = vpop.permute.xlu0 %3819
      %v3822 = vsel %vm928, %v3818, 0
      %v3825 = vsel %vm928, %v3820, 0
      %3827 = vmatprep.subr.bf16.mxu0 0
      %3828 = vmatpush1.bf16.xpose.msra.mxu0 0
      %3829 = vmatprep.subr.bf16.mxu0 0
      %3830 = vmatpush1.bf16.xpose.msra.mxu0 0
      %3831 = vmatprep.subr.bf16.mxu0 0
      %3832 = vmatpush1.bf16.xpose.msra.mxu0 0
      %3833 = vmatprep.subr.bf16.mxu0 0
      %3834 = vmatpush1.bf16.xpose.msra.mxu0 0
      %3835 = vmatprep.subr.bf16.mxu0 0
      %3836 = vmatpush1.bf16.xpose.msra.mxu0 0
      %3837 = vmatprep.subr.bf16.mxu0 0
      %3838 = vmatpush1.bf16.xpose.msra.mxu0 0
      %3839 = vmatprep.subr.bf16.mxu0 0
      %3840 = vmatpush1.bf16.xpose.msra.mxu0 0
      %3841 = vmatprep.subr.bf16.mxu0 0
      %3842 = vmatpush1.bf16.xpose.msra.mxu0 %v3825
      %3843 = vmatprep.subr.bf16.mxu0 0
      %3844 = vmatpush2.bf16.xpose.msra.mxu0 0
      %3845 = vmatprep.subr.bf16.mxu0 0
      %3846 = vmatpush2.bf16.xpose.msra.mxu0 0
      %3847 = vmatprep.subr.bf16.mxu0 0
      %3848 = vmatpush2.bf16.xpose.msra.mxu0 0
      %3849 = vmatprep.subr.bf16.mxu0 0
      %3850 = vmatpush2.bf16.xpose.msra.mxu0 0
      %3851 = vmatprep.subr.bf16.mxu0 0
      %3852 = vmatpush2.bf16.xpose.msra.mxu0 0
      %3853 = vmatprep.subr.bf16.mxu0 0
      %3854 = vmatpush2.bf16.xpose.msra.mxu0 0
      %3855 = vmatprep.subr.bf16.mxu0 0
      %3856 = vmatpush2.bf16.xpose.msra.mxu0 0
      %3857 = vmatprep.subr.bf16.mxu0 0
      %3858 = vmatpush2.bf16.xpose.msra.mxu0 0
      %3859 = vmatprep.mubr.bf16.mxu0 0
      %3860 = vmatmul.mubr.bf16.gmra.mxu0 %v3822
      %v3861 = vpop.f32.mrf.mxu0
      %v3862 = vadd.f32 0.0, %v3861
      %v3863 = vpop.f32.mrf.mxu0
      %v3864 = vpop.f32.mrf.mxu0
      %v3865 = vpop.f32.mrf.mxu0
      %3866 = vdwg.mxu0
      %3867 = vrot.lane.b32.xlu0 %v915, 104
      %v3868 = vpop.permute.xlu0 %3867
      %3869 = vrot.lane.b32.xlu0 %v923, 72
      %v3870 = vpop.permute.xlu0 %3869
      %v3872 = vsel %vm928, %v3868, 0
      %v3875 = vsel %vm928, %v3870, 0
      %3877 = vmatprep.subr.bf16.mxu0 0
      %3878 = vmatpush1.bf16.xpose.msra.mxu0 0
      %3879 = vmatprep.subr.bf16.mxu0 0
      %3880 = vmatpush1.bf16.xpose.msra.mxu0 0
      %3881 = vmatprep.subr.bf16.mxu0 0
      %3882 = vmatpush1.bf16.xpose.msra.mxu0 0
      %3883 = vmatprep.subr.bf16.mxu0 0
      %3884 = vmatpush1.bf16.xpose.msra.mxu0 0
      %3885 = vmatprep.subr.bf16.mxu0 0
      %3886 = vmatpush1.bf16.xpose.msra.mxu0 0
      %3887 = vmatprep.subr.bf16.mxu0 0
      %3888 = vmatpush1.bf16.xpose.msra.mxu0 0
      %3889 = vmatprep.subr.bf16.mxu0 0
      %3890 = vmatpush1.bf16.xpose.msra.mxu0 0
      %3891 = vmatprep.subr.bf16.mxu0 0
      %3892 = vmatpush1.bf16.xpose.msra.mxu0 %v3875
      %3893 = vmatprep.subr.bf16.mxu0 0
      %3894 = vmatpush2.bf16.xpose.msra.mxu0 0
      %3895 = vmatprep.subr.bf16.mxu0 0
      %3896 = vmatpush2.bf16.xpose.msra.mxu0 0
      %3897 = vmatprep.subr.bf16.mxu0 0
      %3898 = vmatpush2.bf16.xpose.msra.mxu0 0
      %3899 = vmatprep.subr.bf16.mxu0 0
      %3900 = vmatpush2.bf16.xpose.msra.mxu0 0
      %3901 = vmatprep.subr.bf16.mxu0 0
      %3902 = vmatpush2.bf16.xpose.msra.mxu0 0
      %3903 = vmatprep.subr.bf16.mxu0 0
      %3904 = vmatpush2.bf16.xpose.msra.mxu0 0
      %3905 = vmatprep.subr.bf16.mxu0 0
      %3906 = vmatpush2.bf16.xpose.msra.mxu0 0
      %3907 = vmatprep.subr.bf16.mxu0 0
      %3908 = vmatpush2.bf16.xpose.msra.mxu0 0
      %3909 = vmatprep.mubr.bf16.mxu0 0
      %3910 = vmatmul.mubr.bf16.gmra.mxu0 %v3872
      %v3911 = vpop.f32.mrf.mxu0
      %v3912 = vadd.f32 0.0, %v3911
      %v3913 = vpop.f32.mrf.mxu0
      %v3914 = vpop.f32.mrf.mxu0
      %v3915 = vpop.f32.mrf.mxu0
      %3916 = vdwg.mxu0
      %3917 = vrot.lane.b32.xlu0 %v916, 104
      %v3918 = vpop.permute.xlu0 %3917
      %3919 = vrot.lane.b32.xlu0 %v924, 72
      %v3920 = vpop.permute.xlu0 %3919
      %v3922 = vsel %vm928, %v3918, 0
      %v3925 = vsel %vm928, %v3920, 0
      %3927 = vmatprep.subr.bf16.mxu0 0
      %3928 = vmatpush1.bf16.xpose.msra.mxu0 0
      %3929 = vmatprep.subr.bf16.mxu0 0
      %3930 = vmatpush1.bf16.xpose.msra.mxu0 0
      %3931 = vmatprep.subr.bf16.mxu0 0
      %3932 = vmatpush1.bf16.xpose.msra.mxu0 0
      %3933 = vmatprep.subr.bf16.mxu0 0
      %3934 = vmatpush1.bf16.xpose.msra.mxu0 0
      %3935 = vmatprep.subr.bf16.mxu0 0
      %3936 = vmatpush1.bf16.xpose.msra.mxu0 0
      %3937 = vmatprep.subr.bf16.mxu0 0
      %3938 = vmatpush1.bf16.xpose.msra.mxu0 0
      %3939 = vmatprep.subr.bf16.mxu0 0
      %3940 = vmatpush1.bf16.xpose.msra.mxu0 0
      %3941 = vmatprep.subr.bf16.mxu0 0
      %3942 = vmatpush1.bf16.xpose.msra.mxu0 %v3925
      %3943 = vmatprep.subr.bf16.mxu0 0
      %3944 = vmatpush2.bf16.xpose.msra.mxu0 0
      %3945 = vmatprep.subr.bf16.mxu0 0
      %3946 = vmatpush2.bf16.xpose.msra.mxu0 0
      %3947 = vmatprep.subr.bf16.mxu0 0
      %3948 = vmatpush2.bf16.xpose.msra.mxu0 0
      %3949 = vmatprep.subr.bf16.mxu0 0
      %3950 = vmatpush2.bf16.xpose.msra.mxu0 0
      %3951 = vmatprep.subr.bf16.mxu0 0
      %3952 = vmatpush2.bf16.xpose.msra.mxu0 0
      %3953 = vmatprep.subr.bf16.mxu0 0
      %3954 = vmatpush2.bf16.xpose.msra.mxu0 0
      %3955 = vmatprep.subr.bf16.mxu0 0
      %3956 = vmatpush2.bf16.xpose.msra.mxu0 0
      %3957 = vmatprep.subr.bf16.mxu0 0
      %3958 = vmatpush2.bf16.xpose.msra.mxu0 0
      %3959 = vmatprep.mubr.bf16.mxu0 0
      %3960 = vmatmul.mubr.bf16.gmra.mxu0 %v3922
      %v3961 = vpop.f32.mrf.mxu0
      %v3962 = vadd.f32 0.0, %v3961
      %v3963 = vpop.f32.mrf.mxu0
      %v3964 = vpop.f32.mrf.mxu0
      %v3965 = vpop.f32.mrf.mxu0
      %3966 = vdwg.mxu0
      %v3967 = vsel %vm928, %v3612, -inf
      %3968 = vmax.xlane.f32.xlu0 %v3967
      %v3969 = vpop.xlane.xlu0 %3968
      %v3970 = vsel %vm928, %v3662, -inf
      %3971 = vmax.xlane.f32.xlu0 %v3970
      %v3972 = vpop.xlane.xlu0 %3971
      %v3973 = vsel %vm928, %v3712, -inf
      %3974 = vmax.xlane.f32.xlu0 %v3973
      %v3975 = vpop.xlane.xlu0 %3974
      %v3976 = vsel %vm928, %v3762, -inf
      %3977 = vmax.xlane.f32.xlu0 %v3976
      %v3978 = vpop.xlane.xlu0 %3977
      %v3979 = vsel %vm928, %v3812, -inf
      %3980 = vmax.xlane.f32.xlu0 %v3979
      %v3981 = vpop.xlane.xlu0 %3980
      %v3982 = vsel %vm928, %v3862, -inf
      %3983 = vmax.xlane.f32.xlu0 %v3982
      %v3984 = vpop.xlane.xlu0 %3983
      %v3985 = vsel %vm928, %v3912, -inf
      %3986 = vmax.xlane.f32.xlu0 %v3985
      %v3987 = vpop.xlane.xlu0 %3986
      %v3988 = vsel %vm928, %v3962, -inf
      %3989 = vmax.xlane.f32.xlu0 %v3988
      %v3990 = vpop.xlane.xlu0 %3989
      %v3991 = vsub.f32 %v3612, %v3969
      %v3992 = vsub.f32 %v3662, %v3972
      %v3993 = vsub.f32 %v3712, %v3975
      %v3994 = vsub.f32 %v3762, %v3978
      %v3995 = vsub.f32 %v3812, %v3981
      %v3996 = vsub.f32 %v3862, %v3984
      %v3997 = vsub.f32 %v3912, %v3987
      %v3998 = vsub.f32 %v3962, %v3990
      %v3999 = vmul.f32 %v3991, 1.442695
      %v4000 = vpow.pop %v3999
      %v4001 = vmul.f32 %v3992, 1.442695
      %v4002 = vpow.pop %v4001
      %v4003 = vmul.f32 %v3993, 1.442695
      %v4004 = vpow.pop %v4003
      %v4005 = vmul.f32 %v3994, 1.442695
      %v4006 = vpow.pop %v4005
      %v4007 = vmul.f32 %v3995, 1.442695
      %v4008 = vpow.pop %v4007
      %v4009 = vmul.f32 %v3996, 1.442695
      %v4010 = vpow.pop %v4009
      %v4011 = vmul.f32 %v3997, 1.442695
      %v4012 = vpow.pop %v4011
      %v4013 = vmul.f32 %v3998, 1.442695
      %v4014 = vpow.pop %v4013
      %v4015 = vsel %vm928, %v4000, 0.0
      %4016 = vadd.xlane.f32.xlu0 %v4015
      %v4017 = vpop.xlane.xlu0 %4016
      %v4018 = vsel %vm928, %v4002, 0.0
      %4019 = vadd.xlane.f32.xlu0 %v4018
      %v4020 = vpop.xlane.xlu0 %4019
      %v4021 = vsel %vm928, %v4004, 0.0
      %4022 = vadd.xlane.f32.xlu0 %v4021
      %v4023 = vpop.xlane.xlu0 %4022
      %v4024 = vsel %vm928, %v4006, 0.0
      %4025 = vadd.xlane.f32.xlu0 %v4024
      %v4026 = vpop.xlane.xlu0 %4025
      %v4027 = vsel %vm928, %v4008, 0.0
      %4028 = vadd.xlane.f32.xlu0 %v4027
      %v4029 = vpop.xlane.xlu0 %4028
      %v4030 = vsel %vm928, %v4010, 0.0
      %4031 = vadd.xlane.f32.xlu0 %v4030
      %v4032 = vpop.xlane.xlu0 %4031
      %v4033 = vsel %vm928, %v4012, 0.0
      %4034 = vadd.xlane.f32.xlu0 %v4033
      %v4035 = vpop.xlane.xlu0 %4034
      %v4036 = vsel %vm928, %v4014, 0.0
      %4037 = vadd.xlane.f32.xlu0 %v4036
      %v4038 = vpop.xlane.xlu0 %4037
      %v4039 = vrcp.pop %v4017
      %v4040 = vrcp.pop %v4020
      %v4041 = vrcp.pop %v4023
      %v4042 = vrcp.pop %v4026
      %v4043 = vrcp.pop %v4029
      %v4044 = vrcp.pop %v4032
      %v4045 = vrcp.pop %v4035
      %v4046 = vrcp.pop %v4038
      %v4047 = vmul.f32 %v4000, %v4039
      %v4048 = vmul.f32 %v4002, %v4040
      %v4049 = vmul.f32 %v4004, %v4041
      %v4050 = vmul.f32 %v4006, %v4042
      %v4051 = vmul.f32 %v4008, %v4043
      %v4052 = vmul.f32 %v4010, %v4044
      %v4053 = vmul.f32 %v4012, %v4045
      %v4054 = vmul.f32 %v4014, %v4046
      %v4055 = vpack.c.bf16 %v4047, %v4047
      %v4056 = vpack.c.bf16 %v4048, %v4048
      %v4057 = vpack.c.bf16 %v4049, %v4049
      %v4058 = vpack.c.bf16 %v4050, %v4050
      %v4059 = vpack.c.bf16 %v4051, %v4051
      %v4060 = vpack.c.bf16 %v4052, %v4052
      %v4061 = vpack.c.bf16 %v4053, %v4053
      %v4062 = vpack.c.bf16 %v4054, %v4054
      %4063 = vrot.lane.b32.xlu0 %v917, 40
      %v4064 = vpop.permute.xlu0 %4063
      %v4066 = vsel %vm928, %v4055, 0
      %v4069 = vsel %vm1419, %v4064, 0
      %4071 = vmatprep.subr.bf16.mxu0 0
      %4072 = vmatpush1.bf16.msra.mxu0 0
      %4073 = vmatprep.subr.bf16.mxu0 0
      %4074 = vmatpush1.bf16.msra.mxu0 0
      %4075 = vmatprep.subr.bf16.mxu0 0
      %4076 = vmatpush1.bf16.msra.mxu0 0
      %4077 = vmatprep.subr.bf16.mxu0 0
      %4078 = vmatpush1.bf16.msra.mxu0 0
      %4079 = vmatprep.subr.bf16.mxu0 0
      %4080 = vmatpush1.bf16.msra.mxu0 0
      %4081 = vmatprep.subr.bf16.mxu0 0
      %4082 = vmatpush1.bf16.msra.mxu0 0
      %4083 = vmatprep.subr.bf16.mxu0 0
      %4084 = vmatpush1.bf16.msra.mxu0 0
      %4085 = vmatprep.subr.bf16.mxu0 0
      %4086 = vmatpush1.bf16.msra.mxu0 %v4069
      %4087 = vmatprep.subr.bf16.mxu0 0
      %4088 = vmatpush2.bf16.msra.mxu0 0
      %4089 = vmatprep.subr.bf16.mxu0 0
      %4090 = vmatpush2.bf16.msra.mxu0 0
      %4091 = vmatprep.subr.bf16.mxu0 0
      %4092 = vmatpush2.bf16.msra.mxu0 0
      %4093 = vmatprep.subr.bf16.mxu0 0
      %4094 = vmatpush2.bf16.msra.mxu0 0
      %4095 = vmatprep.subr.bf16.mxu0 0
      %4096 = vmatpush2.bf16.msra.mxu0 0
      %4097 = vmatprep.subr.bf16.mxu0 0
      %4098 = vmatpush2.bf16.msra.mxu0 0
      %4099 = vmatprep.subr.bf16.mxu0 0
      %4100 = vmatpush2.bf16.msra.mxu0 0
      %4101 = vmatprep.subr.bf16.mxu0 0
      %4102 = vmatpush2.bf16.msra.mxu0 0
      %4103 = vmatprep.mubr.bf16.mxu0 0
      %4104 = vmatmul.mubr.bf16.gmra.mxu0 %v4066
      %v4105 = vpop.f32.mrf.mxu0
      %v4106 = vadd.f32 0.0, %v4105
      %v4107 = vpop.f32.mrf.mxu0
      %v4108 = vpop.f32.mrf.mxu0
      %v4109 = vpop.f32.mrf.mxu0
      %4110 = vdwg.mxu0
      %4111 = vrot.lane.b32.xlu0 %v918, 40
      %v4112 = vpop.permute.xlu0 %4111
      %v4114 = vsel %vm928, %v4056, 0
      %v4117 = vsel %vm1419, %v4112, 0
      %4119 = vmatprep.subr.bf16.mxu0 0
      %4120 = vmatpush1.bf16.msra.mxu0 0
      %4121 = vmatprep.subr.bf16.mxu0 0
      %4122 = vmatpush1.bf16.msra.mxu0 0
      %4123 = vmatprep.subr.bf16.mxu0 0
      %4124 = vmatpush1.bf16.msra.mxu0 0
      %4125 = vmatprep.subr.bf16.mxu0 0
      %4126 = vmatpush1.bf16.msra.mxu0 0
      %4127 = vmatprep.subr.bf16.mxu0 0
      %4128 = vmatpush1.bf16.msra.mxu0 0
      %4129 = vmatprep.subr.bf16.mxu0 0
      %4130 = vmatpush1.bf16.msra.mxu0 0
      %4131 = vmatprep.subr.bf16.mxu0 0
      %4132 = vmatpush1.bf16.msra.mxu0 0
      %4133 = vmatprep.subr.bf16.mxu0 0
      %4134 = vmatpush1.bf16.msra.mxu0 %v4117
      %4135 = vmatprep.subr.bf16.mxu0 0
      %4136 = vmatpush2.bf16.msra.mxu0 0
      %4137 = vmatprep.subr.bf16.mxu0 0
      %4138 = vmatpush2.bf16.msra.mxu0 0
      %4139 = vmatprep.subr.bf16.mxu0 0
      %4140 = vmatpush2.bf16.msra.mxu0 0
      %4141 = vmatprep.subr.bf16.mxu0 0
      %4142 = vmatpush2.bf16.msra.mxu0 0
      %4143 = vmatprep.subr.bf16.mxu0 0
      %4144 = vmatpush2.bf16.msra.mxu0 0
      %4145 = vmatprep.subr.bf16.mxu0 0
      %4146 = vmatpush2.bf16.msra.mxu0 0
      %4147 = vmatprep.subr.bf16.mxu0 0
      %4148 = vmatpush2.bf16.msra.mxu0 0
      %4149 = vmatprep.subr.bf16.mxu0 0
      %4150 = vmatpush2.bf16.msra.mxu0 0
      %4151 = vmatprep.mubr.bf16.mxu0 0
      %4152 = vmatmul.mubr.bf16.gmra.mxu0 %v4114
      %v4153 = vpop.f32.mrf.mxu0
      %v4154 = vadd.f32 0.0, %v4153
      %v4155 = vpop.f32.mrf.mxu0
      %v4156 = vpop.f32.mrf.mxu0
      %v4157 = vpop.f32.mrf.mxu0
      %4158 = vdwg.mxu0
      %4159 = vrot.lane.b32.xlu0 %v919, 40
      %v4160 = vpop.permute.xlu0 %4159
      %v4162 = vsel %vm928, %v4057, 0
      %v4165 = vsel %vm1419, %v4160, 0
      %4167 = vmatprep.subr.bf16.mxu0 0
      %4168 = vmatpush1.bf16.msra.mxu0 0
      %4169 = vmatprep.subr.bf16.mxu0 0
      %4170 = vmatpush1.bf16.msra.mxu0 0
      %4171 = vmatprep.subr.bf16.mxu0 0
      %4172 = vmatpush1.bf16.msra.mxu0 0
      %4173 = vmatprep.subr.bf16.mxu0 0
      %4174 = vmatpush1.bf16.msra.mxu0 0
      %4175 = vmatprep.subr.bf16.mxu0 0
      %4176 = vmatpush1.bf16.msra.mxu0 0
      %4177 = vmatprep.subr.bf16.mxu0 0
      %4178 = vmatpush1.bf16.msra.mxu0 0
      %4179 = vmatprep.subr.bf16.mxu0 0
      %4180 = vmatpush1.bf16.msra.mxu0 0
      %4181 = vmatprep.subr.bf16.mxu0 0
      %4182 = vmatpush1.bf16.msra.mxu0 %v4165
      %4183 = vmatprep.subr.bf16.mxu0 0
      %4184 = vmatpush2.bf16.msra.mxu0 0
      %4185 = vmatprep.subr.bf16.mxu0 0
      %4186 = vmatpush2.bf16.msra.mxu0 0
      %4187 = vmatprep.subr.bf16.mxu0 0
      %4188 = vmatpush2.bf16.msra.mxu0 0
      %4189 = vmatprep.subr.bf16.mxu0 0
      %4190 = vmatpush2.bf16.msra.mxu0 0
      %4191 = vmatprep.subr.bf16.mxu0 0
      %4192 = vmatpush2.bf16.msra.mxu0 0
      %4193 = vmatprep.subr.bf16.mxu0 0
      %4194 = vmatpush2.bf16.msra.mxu0 0
      %4195 = vmatprep.subr.bf16.mxu0 0
      %4196 = vmatpush2.bf16.msra.mxu0 0
      %4197 = vmatprep.subr.bf16.mxu0 0
      %4198 = vmatpush2.bf16.msra.mxu0 0
      %4199 = vmatprep.mubr.bf16.mxu0 0
      %4200 = vmatmul.mubr.bf16.gmra.mxu0 %v4162
      %v4201 = vpop.f32.mrf.mxu0
      %v4202 = vadd.f32 0.0, %v4201
      %v4203 = vpop.f32.mrf.mxu0
      %v4204 = vpop.f32.mrf.mxu0
      %v4205 = vpop.f32.mrf.mxu0
      %4206 = vdwg.mxu0
      %4207 = vrot.lane.b32.xlu0 %v920, 40
      %v4208 = vpop.permute.xlu0 %4207
      %v4210 = vsel %vm928, %v4058, 0
      %v4213 = vsel %vm1419, %v4208, 0
      %4215 = vmatprep.subr.bf16.mxu0 0
      %4216 = vmatpush1.bf16.msra.mxu0 0
      %4217 = vmatprep.subr.bf16.mxu0 0
      %4218 = vmatpush1.bf16.msra.mxu0 0
      %4219 = vmatprep.subr.bf16.mxu0 0
      %4220 = vmatpush1.bf16.msra.mxu0 0
      %4221 = vmatprep.subr.bf16.mxu0 0
      %4222 = vmatpush1.bf16.msra.mxu0 0
      %4223 = vmatprep.subr.bf16.mxu0 0
      %4224 = vmatpush1.bf16.msra.mxu0 0
      %4225 = vmatprep.subr.bf16.mxu0 0
      %4226 = vmatpush1.bf16.msra.mxu0 0
      %4227 = vmatprep.subr.bf16.mxu0 0
      %4228 = vmatpush1.bf16.msra.mxu0 0
      %4229 = vmatprep.subr.bf16.mxu0 0
      %4230 = vmatpush1.bf16.msra.mxu0 %v4213
      %4231 = vmatprep.subr.bf16.mxu0 0
      %4232 = vmatpush2.bf16.msra.mxu0 0
      %4233 = vmatprep.subr.bf16.mxu0 0
      %4234 = vmatpush2.bf16.msra.mxu0 0
      %4235 = vmatprep.subr.bf16.mxu0 0
      %4236 = vmatpush2.bf16.msra.mxu0 0
      %4237 = vmatprep.subr.bf16.mxu0 0
      %4238 = vmatpush2.bf16.msra.mxu0 0
      %4239 = vmatprep.subr.bf16.mxu0 0
      %4240 = vmatpush2.bf16.msra.mxu0 0
      %4241 = vmatprep.subr.bf16.mxu0 0
      %4242 = vmatpush2.bf16.msra.mxu0 0
      %4243 = vmatprep.subr.bf16.mxu0 0
      %4244 = vmatpush2.bf16.msra.mxu0 0
      %4245 = vmatprep.subr.bf16.mxu0 0
      %4246 = vmatpush2.bf16.msra.mxu0 0
      %4247 = vmatprep.mubr.bf16.mxu0 0
      %4248 = vmatmul.mubr.bf16.gmra.mxu0 %v4210
      %v4249 = vpop.f32.mrf.mxu0
      %v4250 = vadd.f32 0.0, %v4249
      %v4251 = vpop.f32.mrf.mxu0
      %v4252 = vpop.f32.mrf.mxu0
      %v4253 = vpop.f32.mrf.mxu0
      %4254 = vdwg.mxu0
      %4255 = vrot.lane.b32.xlu0 %v921, 40
      %v4256 = vpop.permute.xlu0 %4255
      %v4258 = vsel %vm928, %v4059, 0
      %v4261 = vsel %vm1419, %v4256, 0
      %4263 = vmatprep.subr.bf16.mxu0 0
      %4264 = vmatpush1.bf16.msra.mxu0 0
      %4265 = vmatprep.subr.bf16.mxu0 0
      %4266 = vmatpush1.bf16.msra.mxu0 0
      %4267 = vmatprep.subr.bf16.mxu0 0
      %4268 = vmatpush1.bf16.msra.mxu0 0
      %4269 = vmatprep.subr.bf16.mxu0 0
      %4270 = vmatpush1.bf16.msra.mxu0 0
      %4271 = vmatprep.subr.bf16.mxu0 0
      %4272 = vmatpush1.bf16.msra.mxu0 0
      %4273 = vmatprep.subr.bf16.mxu0 0
      %4274 = vmatpush1.bf16.msra.mxu0 0
      %4275 = vmatprep.subr.bf16.mxu0 0
      %4276 = vmatpush1.bf16.msra.mxu0 0
      %4277 = vmatprep.subr.bf16.mxu0 0
      %4278 = vmatpush1.bf16.msra.mxu0 %v4261
      %4279 = vmatprep.subr.bf16.mxu0 0
      %4280 = vmatpush2.bf16.msra.mxu0 0
      %4281 = vmatprep.subr.bf16.mxu0 0
      %4282 = vmatpush2.bf16.msra.mxu0 0
      %4283 = vmatprep.subr.bf16.mxu0 0
      %4284 = vmatpush2.bf16.msra.mxu0 0
      %4285 = vmatprep.subr.bf16.mxu0 0
      %4286 = vmatpush2.bf16.msra.mxu0 0
      %4287 = vmatprep.subr.bf16.mxu0 0
      %4288 = vmatpush2.bf16.msra.mxu0 0
      %4289 = vmatprep.subr.bf16.mxu0 0
      %4290 = vmatpush2.bf16.msra.mxu0 0
      %4291 = vmatprep.subr.bf16.mxu0 0
      %4292 = vmatpush2.bf16.msra.mxu0 0
      %4293 = vmatprep.subr.bf16.mxu0 0
      %4294 = vmatpush2.bf16.msra.mxu0 0
      %4295 = vmatprep.mubr.bf16.mxu0 0
      %4296 = vmatmul.mubr.bf16.gmra.mxu0 %v4258
      %v4297 = vpop.f32.mrf.mxu0
      %v4298 = vadd.f32 0.0, %v4297
      %v4299 = vpop.f32.mrf.mxu0
      %v4300 = vpop.f32.mrf.mxu0
      %v4301 = vpop.f32.mrf.mxu0
      %4302 = vdwg.mxu0
      %4303 = vrot.lane.b32.xlu0 %v922, 40
      %v4304 = vpop.permute.xlu0 %4303
      %v4306 = vsel %vm928, %v4060, 0
      %v4309 = vsel %vm1419, %v4304, 0
      %4311 = vmatprep.subr.bf16.mxu0 0
      %4312 = vmatpush1.bf16.msra.mxu0 0
      %4313 = vmatprep.subr.bf16.mxu0 0
      %4314 = vmatpush1.bf16.msra.mxu0 0
      %4315 = vmatprep.subr.bf16.mxu0 0
      %4316 = vmatpush1.bf16.msra.mxu0 0
      %4317 = vmatprep.subr.bf16.mxu0 0
      %4318 = vmatpush1.bf16.msra.mxu0 0
      %4319 = vmatprep.subr.bf16.mxu0 0
      %4320 = vmatpush1.bf16.msra.mxu0 0
      %4321 = vmatprep.subr.bf16.mxu0 0
      %4322 = vmatpush1.bf16.msra.mxu0 0
      %4323 = vmatprep.subr.bf16.mxu0 0
      %4324 = vmatpush1.bf16.msra.mxu0 0
      %4325 = vmatprep.subr.bf16.mxu0 0
      %4326 = vmatpush1.bf16.msra.mxu0 %v4309
      %4327 = vmatprep.subr.bf16.mxu0 0
      %4328 = vmatpush2.bf16.msra.mxu0 0
      %4329 = vmatprep.subr.bf16.mxu0 0
      %4330 = vmatpush2.bf16.msra.mxu0 0
      %4331 = vmatprep.subr.bf16.mxu0 0
      %4332 = vmatpush2.bf16.msra.mxu0 0
      %4333 = vmatprep.subr.bf16.mxu0 0
      %4334 = vmatpush2.bf16.msra.mxu0 0
      %4335 = vmatprep.subr.bf16.mxu0 0
      %4336 = vmatpush2.bf16.msra.mxu0 0
      %4337 = vmatprep.subr.bf16.mxu0 0
      %4338 = vmatpush2.bf16.msra.mxu0 0
      %4339 = vmatprep.subr.bf16.mxu0 0
      %4340 = vmatpush2.bf16.msra.mxu0 0
      %4341 = vmatprep.subr.bf16.mxu0 0
      %4342 = vmatpush2.bf16.msra.mxu0 0
      %4343 = vmatprep.mubr.bf16.mxu0 0
      %4344 = vmatmul.mubr.bf16.gmra.mxu0 %v4306
      %v4345 = vpop.f32.mrf.mxu0
      %v4346 = vadd.f32 0.0, %v4345
      %v4347 = vpop.f32.mrf.mxu0
      %v4348 = vpop.f32.mrf.mxu0
      %v4349 = vpop.f32.mrf.mxu0
      %4350 = vdwg.mxu0
      %4351 = vrot.lane.b32.xlu0 %v923, 40
      %v4352 = vpop.permute.xlu0 %4351
      %v4354 = vsel %vm928, %v4061, 0
      %v4357 = vsel %vm1419, %v4352, 0
      %4359 = vmatprep.subr.bf16.mxu0 0
      %4360 = vmatpush1.bf16.msra.mxu0 0
      %4361 = vmatprep.subr.bf16.mxu0 0
      %4362 = vmatpush1.bf16.msra.mxu0 0
      %4363 = vmatprep.subr.bf16.mxu0 0
      %4364 = vmatpush1.bf16.msra.mxu0 0
      %4365 = vmatprep.subr.bf16.mxu0 0
      %4366 = vmatpush1.bf16.msra.mxu0 0
      %4367 = vmatprep.subr.bf16.mxu0 0
      %4368 = vmatpush1.bf16.msra.mxu0 0
      %4369 = vmatprep.subr.bf16.mxu0 0
      %4370 = vmatpush1.bf16.msra.mxu0 0
      %4371 = vmatprep.subr.bf16.mxu0 0
      %4372 = vmatpush1.bf16.msra.mxu0 0
      %4373 = vmatprep.subr.bf16.mxu0 0
      %4374 = vmatpush1.bf16.msra.mxu0 %v4357
      %4375 = vmatprep.subr.bf16.mxu0 0
      %4376 = vmatpush2.bf16.msra.mxu0 0
      %4377 = vmatprep.subr.bf16.mxu0 0
      %4378 = vmatpush2.bf16.msra.mxu0 0
      %4379 = vmatprep.subr.bf16.mxu0 0
      %4380 = vmatpush2.bf16.msra.mxu0 0
      %4381 = vmatprep.subr.bf16.mxu0 0
      %4382 = vmatpush2.bf16.msra.mxu0 0
      %4383 = vmatprep.subr.bf16.mxu0 0
      %4384 = vmatpush2.bf16.msra.mxu0 0
      %4385 = vmatprep.subr.bf16.mxu0 0
      %4386 = vmatpush2.bf16.msra.mxu0 0
      %4387 = vmatprep.subr.bf16.mxu0 0
      %4388 = vmatpush2.bf16.msra.mxu0 0
      %4389 = vmatprep.subr.bf16.mxu0 0
      %4390 = vmatpush2.bf16.msra.mxu0 0
      %4391 = vmatprep.mubr.bf16.mxu0 0
      %4392 = vmatmul.mubr.bf16.gmra.mxu0 %v4354
      %v4393 = vpop.f32.mrf.mxu0
      %v4394 = vadd.f32 0.0, %v4393
      %v4395 = vpop.f32.mrf.mxu0
      %v4396 = vpop.f32.mrf.mxu0
      %v4397 = vpop.f32.mrf.mxu0
      %4398 = vdwg.mxu0
      %4399 = vrot.lane.b32.xlu0 %v924, 40
      %v4400 = vpop.permute.xlu0 %4399
      %v4402 = vsel %vm928, %v4062, 0
      %v4405 = vsel %vm1419, %v4400, 0
      %4407 = vmatprep.subr.bf16.mxu0 0
      %4408 = vmatpush1.bf16.msra.mxu0 0
      %4409 = vmatprep.subr.bf16.mxu0 0
      %4410 = vmatpush1.bf16.msra.mxu0 0
      %4411 = vmatprep.subr.bf16.mxu0 0
      %4412 = vmatpush1.bf16.msra.mxu0 0
      %4413 = vmatprep.subr.bf16.mxu0 0
      %4414 = vmatpush1.bf16.msra.mxu0 0
      %4415 = vmatprep.subr.bf16.mxu0 0
      %4416 = vmatpush1.bf16.msra.mxu0 0
      %4417 = vmatprep.subr.bf16.mxu0 0
      %4418 = vmatpush1.bf16.msra.mxu0 0
      %4419 = vmatprep.subr.bf16.mxu0 0
      %4420 = vmatpush1.bf16.msra.mxu0 0
      %4421 = vmatprep.subr.bf16.mxu0 0
      %4422 = vmatpush1.bf16.msra.mxu0 %v4405
      %4423 = vmatprep.subr.bf16.mxu0 0
      %4424 = vmatpush2.bf16.msra.mxu0 0
      %4425 = vmatprep.subr.bf16.mxu0 0
      %4426 = vmatpush2.bf16.msra.mxu0 0
      %4427 = vmatprep.subr.bf16.mxu0 0
      %4428 = vmatpush2.bf16.msra.mxu0 0
      %4429 = vmatprep.subr.bf16.mxu0 0
      %4430 = vmatpush2.bf16.msra.mxu0 0
      %4431 = vmatprep.subr.bf16.mxu0 0
      %4432 = vmatpush2.bf16.msra.mxu0 0
      %4433 = vmatprep.subr.bf16.mxu0 0
      %4434 = vmatpush2.bf16.msra.mxu0 0
      %4435 = vmatprep.subr.bf16.mxu0 0
      %4436 = vmatpush2.bf16.msra.mxu0 0
      %4437 = vmatprep.subr.bf16.mxu0 0
      %4438 = vmatpush2.bf16.msra.mxu0 0
      %4439 = vmatprep.mubr.bf16.mxu0 0
      %4440 = vmatmul.mubr.bf16.gmra.mxu0 %v4402
      %v4441 = vpop.f32.mrf.mxu0
      %v4442 = vadd.f32 0.0, %v4441
      %v4443 = vpop.f32.mrf.mxu0
      %v4444 = vpop.f32.mrf.mxu0
      %v4445 = vpop.f32.mrf.mxu0
      %4446 = vdwg.mxu0
      %4455 = vrot.lane.b32.xlu0 %v2346, 8
      %v4456 = vpop.permute.xlu0 %4455
      %4457 = vrot.lane.b32.xlu0 %v2394, 8
      %v4458 = vpop.permute.xlu0 %4457
      %4459 = vrot.lane.b32.xlu0 %v2442, 8
      %v4460 = vpop.permute.xlu0 %4459
      %4461 = vrot.lane.b32.xlu0 %v2490, 8
      %v4462 = vpop.permute.xlu0 %4461
      %4463 = vrot.lane.b32.xlu0 %v2538, 8
      %v4464 = vpop.permute.xlu0 %4463
      %4465 = vrot.lane.b32.xlu0 %v2586, 8
      %v4466 = vpop.permute.xlu0 %4465
      %4467 = vrot.lane.b32.xlu0 %v2634, 8
      %v4468 = vpop.permute.xlu0 %4467
      %4469 = vrot.lane.b32.xlu0 %v2682, 8
      %v4470 = vpop.permute.xlu0 %4469
      %4487 = vrot.lane.b32.xlu0 %v3226, 16
      %v4488 = vpop.permute.xlu0 %4487
      %4489 = vrot.lane.b32.xlu0 %v3274, 16
      %v4490 = vpop.permute.xlu0 %4489
      %4491 = vrot.lane.b32.xlu0 %v3322, 16
      %v4492 = vpop.permute.xlu0 %4491
      %4493 = vrot.lane.b32.xlu0 %v3370, 16
      %v4494 = vpop.permute.xlu0 %4493
      %4495 = vrot.lane.b32.xlu0 %v3418, 16
      %v4496 = vpop.permute.xlu0 %4495
      %4497 = vrot.lane.b32.xlu0 %v3466, 16
      %v4498 = vpop.permute.xlu0 %4497
      %4499 = vrot.lane.b32.xlu0 %v3514, 16
      %v4500 = vpop.permute.xlu0 %4499
      %4501 = vrot.lane.b32.xlu0 %v3562, 16
      %v4502 = vpop.permute.xlu0 %4501
      %4519 = vrot.lane.b32.xlu0 %v4106, 24
      %v4520 = vpop.permute.xlu0 %4519
      %4521 = vrot.lane.b32.xlu0 %v4154, 24
      %v4522 = vpop.permute.xlu0 %4521
      %4523 = vrot.lane.b32.xlu0 %v4202, 24
      %v4524 = vpop.permute.xlu0 %4523
      %4525 = vrot.lane.b32.xlu0 %v4250, 24
      %v4526 = vpop.permute.xlu0 %4525
      %4527 = vrot.lane.b32.xlu0 %v4298, 24
      %v4528 = vpop.permute.xlu0 %4527
      %4529 = vrot.lane.b32.xlu0 %v4346, 24
      %v4530 = vpop.permute.xlu0 %4529
      %4531 = vrot.lane.b32.xlu0 %v4394, 24
      %v4532 = vpop.permute.xlu0 %4531
      %4533 = vrot.lane.b32.xlu0 %v4442, 24
      %v4534 = vpop.permute.xlu0 %4533
      %v4543 = vsel %vm928, %v1458, %v4456
      %v4544 = vsel %vm928, %v1506, %v4458
      %v4545 = vsel %vm928, %v1554, %v4460
      %v4546 = vsel %vm928, %v1602, %v4462
      %v4547 = vsel %vm928, %v1650, %v4464
      %v4548 = vsel %vm928, %v1698, %v4466
      %v4549 = vsel %vm928, %v1746, %v4468
      %v4550 = vsel %vm928, %v1794, %v4470
      %v4551 = vsel %vm586, %v4543, %v4488
      %v4552 = vsel %vm586, %v4544, %v4490
      %v4553 = vsel %vm586, %v4545, %v4492
      %v4554 = vsel %vm586, %v4546, %v4494
      %v4555 = vsel %vm586, %v4547, %v4496
      %v4556 = vsel %vm586, %v4548, %v4498
      %v4557 = vsel %vm586, %v4549, %v4500
      %v4558 = vsel %vm586, %v4550, %v4502
      %vm4559 = vcmask 195584
      %v4560 = vsel %vm4559, %v4551, %v4520
      %v4561 = vsel %vm4559, %v4552, %v4522
      %v4562 = vsel %vm4559, %v4553, %v4524
      %v4563 = vsel %vm4559, %v4554, %v4526
      %v4564 = vsel %vm4559, %v4555, %v4528
      %v4565 = vsel %vm4559, %v4556, %v4530
      %v4566 = vsel %vm4559, %v4557, %v4532
      %v4567 = vsel %vm4559, %v4558, %v4534
      %v4568 = vpack.c.bf16 %v4561, %v4560
      %v4569 = vpack.c.bf16 %v4563, %v4562
      %v4570 = vpack.c.bf16 %v4565, %v4564
      %v4571 = vpack.c.bf16 %v4567, %v4566
      %v4572 = vld [vmem:[%s7] sm:$0xf]
      %v4573 = vld [vmem:[%s7 + $0x4] sm:$0xf]
      %v4574 = vld [vmem:[%s7 + $0x8] sm:$0xf]
      %v4575 = vld [vmem:[%s7 + $0xc] sm:$0xf]
      %v4580 = vunpack.c.l.b16 %v4572
      %v4581 = vunpack.c.l.b16 %v4573
      %v4582 = vunpack.c.l.b16 %v4574
      %v4583 = vunpack.c.l.b16 %v4575
      %v4584 = vpack.c.b16 %v4581, %v4580
      %v4585 = vpack.c.b16 %v4583, %v4582
      %v4589 = vsel %vm664, %v4568, 0
      %v4592 = vsel %vm664, %v4569, 0
      %v4595 = vsel %vm664, %v4570, 0
      %v4598 = vsel %vm664, %v4571, 0
      %4600 = vmatprep.subr.bf16.mxu0 0
      %4601 = vmatpush1.bf16.msra.mxu0 0
      %4602 = vmatprep.subr.bf16.mxu0 0
      %4603 = vmatpush1.bf16.msra.mxu0 0
      %4604 = vmatprep.subr.bf16.mxu0 0
      %4605 = vmatpush1.bf16.msra.mxu0 0
      %4606 = vmatprep.subr.bf16.mxu0 0
      %4607 = vmatpush1.bf16.msra.mxu0 0
      %4608 = vmatprep.subr.bf16.mxu0 0
      %4609 = vmatpush1.bf16.msra.mxu0 0
      %4610 = vmatprep.subr.bf16.mxu0 0
      %4611 = vmatpush1.bf16.msra.mxu0 0
      %4612 = vmatprep.subr.bf16.mxu0 0
      %4613 = vmatpush1.bf16.msra.mxu0 %v4585
      %4614 = vmatprep.subr.bf16.mxu0 0
      %4615 = vmatpush1.bf16.msra.mxu0 %v4584
      %4616 = vmatprep.subr.bf16.mxu0 0
      %4617 = vmatpush2.bf16.msra.mxu0 0
      %4618 = vmatprep.subr.bf16.mxu0 0
      %4619 = vmatpush2.bf16.msra.mxu0 0
      %4620 = vmatprep.subr.bf16.mxu0 0
      %4621 = vmatpush2.bf16.msra.mxu0 0
      %4622 = vmatprep.subr.bf16.mxu0 0
      %4623 = vmatpush2.bf16.msra.mxu0 0
      %4624 = vmatprep.subr.bf16.mxu0 0
      %4625 = vmatpush2.bf16.msra.mxu0 0
      %4626 = vmatprep.subr.bf16.mxu0 0
      %4627 = vmatpush2.bf16.msra.mxu0 0
      %4628 = vmatprep.subr.bf16.mxu0 0
      %4629 = vmatpush2.bf16.msra.mxu0 0
      %4630 = vmatprep.subr.bf16.mxu0 0
      %4631 = vmatpush2.bf16.msra.mxu0 0
      %4632 = vmatprep.mubr.bf16.mxu0 0
      %4633 = vmatmul.mubr.bf16.gmra.mxu0 %v4589
      %v4634 = vpop.f32.mrf.mxu0
      %v4635 = vadd.f32 0.0, %v4634
      %v4636 = vpop.f32.mrf.mxu0
      %v4637 = vpop.f32.mrf.mxu0
      %v4638 = vadd.f32 0.0, %v4637
      %v4639 = vpop.f32.mrf.mxu0
      %4640 = vmatprep.mubr.bf16.mxu0 0
      %4641 = vmatmul.mubr.bf16.gmra.mxu0 %v4592
      %v4642 = vpop.f32.mrf.mxu0
      %v4643 = vadd.f32 0.0, %v4642
      %v4644 = vpop.f32.mrf.mxu0
      %v4645 = vpop.f32.mrf.mxu0
      %v4646 = vadd.f32 0.0, %v4645
      %v4647 = vpop.f32.mrf.mxu0
      %4648 = vmatprep.mubr.bf16.mxu0 0
      %4649 = vmatmul.mubr.bf16.gmra.mxu0 %v4595
      %v4650 = vpop.f32.mrf.mxu0
      %v4651 = vadd.f32 0.0, %v4650
      %v4652 = vpop.f32.mrf.mxu0
      %v4653 = vpop.f32.mrf.mxu0
      %v4654 = vadd.f32 0.0, %v4653
      %v4655 = vpop.f32.mrf.mxu0
      %4656 = vmatprep.mubr.bf16.mxu0 0
      %4657 = vmatmul.mubr.bf16.gmra.mxu0 %v4598
      %v4658 = vpop.f32.mrf.mxu0
      %v4659 = vadd.f32 0.0, %v4658
      %v4660 = vpop.f32.mrf.mxu0
      %v4661 = vpop.f32.mrf.mxu0
      %v4662 = vadd.f32 0.0, %v4661
      %v4663 = vpop.f32.mrf.mxu0
      %4664 = vdwg.mxu0
      %v4665 = vadd.f32 %v634, %v4635
      %v4666 = vadd.f32 %v637, %v4638
      %v4667 = vadd.f32 %v642, %v4643
      %v4668 = vadd.f32 %v645, %v4646
      %v4669 = vadd.f32 %v650, %v4651
      %v4670 = vadd.f32 %v653, %v4654
      %v4671 = vadd.f32 %v658, %v4659
      %v4672 = vadd.f32 %v661, %v4662
      %v4674 = vlaneseq
      %v4675 = vshrl.u32 %v4674, 7
      %v4676 = vsub.s32 0, %v4675
      %v4677 = vrot.slane %v555, %v4676
      %v4679 = vadd.f32 %v4665, %v4677
      %v4680 = vadd.f32 %v4666, %v4677
      %v4681 = vadd.f32 %v4667, %v4677
      %v4682 = vadd.f32 %v4668, %v4677
      %v4683 = vadd.f32 %v4669, %v4677
      %v4684 = vadd.f32 %v4670, %v4677
      %v4685 = vadd.f32 %v4671, %v4677
      %v4686 = vadd.f32 %v4672, %v4677
      %v4687 = vsel %vm664, %v4679, 0.0
      %4688 = vadd.xlane.f32.xlu0 %v4687
      %v4689 = vpop.xlane.xlu0 %4688
      %v4690 = vsel %vm664, %v4680, 0.0
      %4691 = vadd.xlane.f32.xlu0 %v4690
      %v4692 = vpop.xlane.xlu0 %4691
      %v4693 = vsel %vm664, %v4681, 0.0
      %4694 = vadd.xlane.f32.xlu0 %v4693
      %v4695 = vpop.xlane.xlu0 %4694
      %v4696 = vsel %vm664, %v4682, 0.0
      %4697 = vadd.xlane.f32.xlu0 %v4696
      %v4698 = vpop.xlane.xlu0 %4697
      %v4699 = vsel %vm664, %v4683, 0.0
      %4700 = vadd.xlane.f32.xlu0 %v4699
      %v4701 = vpop.xlane.xlu0 %4700
      %v4702 = vsel %vm664, %v4684, 0.0
      %4703 = vadd.xlane.f32.xlu0 %v4702
      %v4704 = vpop.xlane.xlu0 %4703
      %v4705 = vsel %vm664, %v4685, 0.0
      %4706 = vadd.xlane.f32.xlu0 %v4705
      %v4707 = vpop.xlane.xlu0 %4706
      %v4708 = vsel %vm664, %v4686, 0.0
      %4709 = vadd.xlane.f32.xlu0 %v4708
      %v4710 = vpop.xlane.xlu0 %4709
      %v4711 = vmul.f32 %v4689, %v689
      %v4712 = vmul.f32 %v4692, %v689
      %v4713 = vmul.f32 %v4695, %v689
      %v4714 = vmul.f32 %v4698, %v689
      %v4715 = vmul.f32 %v4701, %v689
      %v4716 = vmul.f32 %v4704, %v689
      %v4717 = vmul.f32 %v4707, %v689
      %v4718 = vmul.f32 %v4710, %v689
      %v4719 = vsub.f32 %v4679, %v4711
      %v4720 = vsub.f32 %v4680, %v4712
      %v4721 = vsub.f32 %v4681, %v4713
      %v4722 = vsub.f32 %v4682, %v4714
      %v4723 = vsub.f32 %v4683, %v4715
      %v4724 = vsub.f32 %v4684, %v4716
      %v4725 = vsub.f32 %v4685, %v4717
      %v4726 = vsub.f32 %v4686, %v4718
      %v4727 = vmul.f32 %v4719, %v4719
      %v4728 = vmul.f32 %v4720, %v4720
      %v4729 = vmul.f32 %v4721, %v4721
      %v4730 = vmul.f32 %v4722, %v4722
      %v4731 = vmul.f32 %v4723, %v4723
      %v4732 = vmul.f32 %v4724, %v4724
      %v4733 = vmul.f32 %v4725, %v4725
      %v4734 = vmul.f32 %v4726, %v4726
      %v4735 = vsel %vm664, %v4727, 0.0
      %4736 = vadd.xlane.f32.xlu0 %v4735
      %v4737 = vpop.xlane.xlu0 %4736
      %v4738 = vsel %vm664, %v4728, 0.0
      %4739 = vadd.xlane.f32.xlu0 %v4738
      %v4740 = vpop.xlane.xlu0 %4739
      %v4741 = vsel %vm664, %v4729, 0.0
      %4742 = vadd.xlane.f32.xlu0 %v4741
      %v4743 = vpop.xlane.xlu0 %4742
      %v4744 = vsel %vm664, %v4730, 0.0
      %4745 = vadd.xlane.f32.xlu0 %v4744
      %v4746 = vpop.xlane.xlu0 %4745
      %v4747 = vsel %vm664, %v4731, 0.0
      %4748 = vadd.xlane.f32.xlu0 %v4747
      %v4749 = vpop.xlane.xlu0 %4748
      %v4750 = vsel %vm664, %v4732, 0.0
      %4751 = vadd.xlane.f32.xlu0 %v4750
      %v4752 = vpop.xlane.xlu0 %4751
      %v4753 = vsel %vm664, %v4733, 0.0
      %4754 = vadd.xlane.f32.xlu0 %v4753
      %v4755 = vpop.xlane.xlu0 %4754
      %v4756 = vsel %vm664, %v4734, 0.0
      %4757 = vadd.xlane.f32.xlu0 %v4756
      %v4758 = vpop.xlane.xlu0 %4757
      %v4759 = vmul.f32 %v4737, %v689
      %v4760 = vmul.f32 %v4740, %v689
      %v4761 = vmul.f32 %v4743, %v689
      %v4762 = vmul.f32 %v4746, %v689
      %v4763 = vmul.f32 %v4749, %v689
      %v4764 = vmul.f32 %v4752, %v689
      %v4765 = vmul.f32 %v4755, %v689
      %v4766 = vmul.f32 %v4758, %v689
      %v4767 = vadd.f32 %v4759, 1e-05
      %v4768 = vadd.f32 %v4760, 1e-05
      %v4769 = vadd.f32 %v4761, 1e-05
      %v4770 = vadd.f32 %v4762, 1e-05
      %v4771 = vadd.f32 %v4763, 1e-05
      %v4772 = vadd.f32 %v4764, 1e-05
      %v4773 = vadd.f32 %v4765, 1e-05
      %v4774 = vadd.f32 %v4766, 1e-05
      %v4775 = vrsqrt.pop %v4767
      %v4776 = vrsqrt.pop %v4768
      %v4777 = vrsqrt.pop %v4769
      %v4778 = vrsqrt.pop %v4770
      %v4779 = vrsqrt.pop %v4771
      %v4780 = vrsqrt.pop %v4772
      %v4781 = vrsqrt.pop %v4773
      %v4782 = vrsqrt.pop %v4774
      %v4783 = vmul.f32 %v4719, %v4775
      %v4784 = vmul.f32 %v4720, %v4776
      %v4785 = vmul.f32 %v4721, %v4777
      %v4786 = vmul.f32 %v4722, %v4778
      %v4787 = vmul.f32 %v4723, %v4779
      %v4788 = vmul.f32 %v4724, %v4780
      %v4789 = vmul.f32 %v4725, %v4781
      %v4790 = vmul.f32 %v4726, %v4782
      %v4792 = vlaneseq
      %v4793 = vshrl.u32 %v4792, 7
      %v4794 = vsub.s32 0, %v4793
      %v4795 = vrot.slane %v552, %v4794
      %v4797 = vmul.f32 %v4783, %v4795
      %v4798 = vmul.f32 %v4784, %v4795
      %v4799 = vmul.f32 %v4785, %v4795
      %v4800 = vmul.f32 %v4786, %v4795
      %v4801 = vmul.f32 %v4787, %v4795
      %v4802 = vmul.f32 %v4788, %v4795
      %v4803 = vmul.f32 %v4789, %v4795
      %v4804 = vmul.f32 %v4790, %v4795
      %v4806 = vlaneseq
      %v4807 = vshrl.u32 %v4806, 7
      %v4808 = vsub.s32 0, %v4807
      %v4809 = vrot.slane %v553, %v4808
      %v4811 = vadd.f32 %v4797, %v4809
      %v4812 = vadd.f32 %v4798, %v4809
      %v4813 = vadd.f32 %v4799, %v4809
      %v4814 = vadd.f32 %v4800, %v4809
      %v4815 = vadd.f32 %v4801, %v4809
      %v4816 = vadd.f32 %v4802, %v4809
      %v4817 = vadd.f32 %v4803, %v4809
      %v4818 = vadd.f32 %v4804, %v4809
      %v4819 = vpack.c.bf16 %v4812, %v4811
      %v4820 = vpack.c.bf16 %v4814, %v4813
      %v4821 = vpack.c.bf16 %v4816, %v4815
      %v4822 = vpack.c.bf16 %v4818, %v4817
      %v4823 = vld [vmem:[%s11] sm:$0xf]
      %v4824 = vld [vmem:[%s11 + $0x4] sm:$0xf]
      %v4825 = vld [vmem:[%s11 + $0x8] sm:$0xf]
      %v4826 = vld [vmem:[%s11 + $0xc] sm:$0xf]
      %v4828 = vlaneseq
      %v4829 = vshrl.u32 %v4828, 7
      %v4830 = vsub.s32 0, %v4829
      %v4831 = vrot.slane %v556, %v4830
      %v4837 = vunpack.c.l.b16 %v4823
      %v4838 = vunpack.c.l.b16 %v4824
      %v4839 = vunpack.c.l.b16 %v4825
      %v4840 = vunpack.c.l.b16 %v4826
      %v4841 = vpack.c.b16 %v4838, %v4837
      %v4842 = vpack.c.b16 %v4840, %v4839
      %v4846 = vsel %vm664, %v4819, 0
      %v4849 = vsel %vm664, %v4820, 0
      %v4852 = vsel %vm664, %v4821, 0
      %v4855 = vsel %vm664, %v4822, 0
      %4857 = vmatprep.subr.bf16.mxu0 0
      %4858 = vmatpush1.bf16.msra.mxu0 0
      %4859 = vmatprep.subr.bf16.mxu0 0
      %4860 = vmatpush1.bf16.msra.mxu0 0
      %4861 = vmatprep.subr.bf16.mxu0 0
      %4862 = vmatpush1.bf16.msra.mxu0 0
      %4863 = vmatprep.subr.bf16.mxu0 0
      %4864 = vmatpush1.bf16.msra.mxu0 0
      %4865 = vmatprep.subr.bf16.mxu0 0
      %4866 = vmatpush1.bf16.msra.mxu0 0
      %4867 = vmatprep.subr.bf16.mxu0 0
      %4868 = vmatpush1.bf16.msra.mxu0 0
      %4869 = vmatprep.subr.bf16.mxu0 0
      %4870 = vmatpush1.bf16.msra.mxu0 %v4842
      %4871 = vmatprep.subr.bf16.mxu0 0
      %4872 = vmatpush1.bf16.msra.mxu0 %v4841
      %4873 = vmatprep.subr.bf16.mxu0 0
      %4874 = vmatpush2.bf16.msra.mxu0 0
      %4875 = vmatprep.subr.bf16.mxu0 0
      %4876 = vmatpush2.bf16.msra.mxu0 0
      %4877 = vmatprep.subr.bf16.mxu0 0
      %4878 = vmatpush2.bf16.msra.mxu0 0
      %4879 = vmatprep.subr.bf16.mxu0 0
      %4880 = vmatpush2.bf16.msra.mxu0 0
      %4881 = vmatprep.subr.bf16.mxu0 0
      %4882 = vmatpush2.bf16.msra.mxu0 0
      %4883 = vmatprep.subr.bf16.mxu0 0
      %4884 = vmatpush2.bf16.msra.mxu0 0
      %4885 = vmatprep.subr.bf16.mxu0 0
      %4886 = vmatpush2.bf16.msra.mxu0 0
      %4887 = vmatprep.subr.bf16.mxu0 0
      %4888 = vmatpush2.bf16.msra.mxu0 0
      %4889 = vmatprep.mubr.bf16.mxu0 0
      %4890 = vmatmul.mubr.bf16.gmra.mxu0 %v4846
      %v4891 = vpop.f32.mrf.mxu0
      %v4892 = vadd.f32 %v4831, %v4891
      %v4893 = vpop.f32.mrf.mxu0
      %v4894 = vpop.f32.mrf.mxu0
      %v4895 = vadd.f32 %v4831, %v4894
      %v4896 = vpop.f32.mrf.mxu0
      %4897 = vmatprep.mubr.bf16.mxu0 0
      %4898 = vmatmul.mubr.bf16.gmra.mxu0 %v4849
      %v4899 = vpop.f32.mrf.mxu0
      %v4900 = vadd.f32 %v4831, %v4899
      %v4901 = vpop.f32.mrf.mxu0
      %v4902 = vpop.f32.mrf.mxu0
      %v4903 = vadd.f32 %v4831, %v4902
      %v4904 = vpop.f32.mrf.mxu0
      %4905 = vmatprep.mubr.bf16.mxu0 0
      %4906 = vmatmul.mubr.bf16.gmra.mxu0 %v4852
      %v4907 = vpop.f32.mrf.mxu0
      %v4908 = vadd.f32 %v4831, %v4907
      %v4909 = vpop.f32.mrf.mxu0
      %v4910 = vpop.f32.mrf.mxu0
      %v4911 = vadd.f32 %v4831, %v4910
      %v4912 = vpop.f32.mrf.mxu0
      %4913 = vmatprep.mubr.bf16.mxu0 0
      %4914 = vmatmul.mubr.bf16.gmra.mxu0 %v4855
      %v4915 = vpop.f32.mrf.mxu0
      %v4916 = vadd.f32 %v4831, %v4915
      %v4917 = vpop.f32.mrf.mxu0
      %v4918 = vpop.f32.mrf.mxu0
      %v4919 = vadd.f32 %v4831, %v4918
      %v4920 = vpop.f32.mrf.mxu0
      %4921 = vdwg.mxu0
      %v4922 = vmax.f32 %v4892, 0.0
      %v4923 = vmax.f32 %v4895, 0.0
      %v4924 = vmax.f32 %v4900, 0.0
      %v4925 = vmax.f32 %v4903, 0.0
      %v4926 = vmax.f32 %v4908, 0.0
      %v4927 = vmax.f32 %v4911, 0.0
      %v4928 = vmax.f32 %v4916, 0.0
      %v4929 = vmax.f32 %v4919, 0.0
      %v4930 = vpack.c.bf16 %v4923, %v4922
      %v4931 = vpack.c.bf16 %v4925, %v4924
      %v4932 = vpack.c.bf16 %v4927, %v4926
      %v4933 = vpack.c.bf16 %v4929, %v4928
      %v4934 = vld [vmem:[%s13] sm:$0xf]
      %v4935 = vld [vmem:[%s13 + $0x4] sm:$0xf]
      %v4936 = vld [vmem:[%s13 + $0x8] sm:$0xf]
      %v4937 = vld [vmem:[%s13 + $0xc] sm:$0xf]
      %v4938 = vld [vmem:[%s13 + $0x10] sm:$0xf]
      %v4939 = vld [vmem:[%s13 + $0x14] sm:$0xf]
      %v4940 = vld [vmem:[%s13 + $0x18] sm:$0xf]
      %v4941 = vld [vmem:[%s13 + $0x1c] sm:$0xf]
      %v4942 = vld [vmem:[%s13 + $0x20] sm:$0xf]
      %v4943 = vld [vmem:[%s13 + $0x24] sm:$0xf]
      %v4944 = vld [vmem:[%s13 + $0x28] sm:$0xf]
      %v4945 = vld [vmem:[%s13 + $0x2c] sm:$0xf]
      %v4958 = vunpack.c.l.b16 %v4934
      %v4959 = vunpack.c.l.b16 %v4935
      %v4960 = vunpack.c.l.b16 %v4936
      %v4961 = vunpack.c.l.b16 %v4937
      %v4962 = vunpack.c.l.b16 %v4938
      %v4963 = vunpack.c.l.b16 %v4939
      %v4964 = vunpack.c.l.b16 %v4940
      %v4965 = vunpack.c.l.b16 %v4941
      %v4966 = vunpack.c.l.b16 %v4942
      %v4967 = vunpack.c.l.b16 %v4943
      %v4968 = vunpack.c.l.b16 %v4944
      %v4969 = vunpack.c.l.b16 %v4945
      %v4970 = vpack.c.b16 %v4959, %v4958
      %v4971 = vpack.c.b16 %v4961, %v4960
      %v4972 = vpack.c.b16 %v4963, %v4962
      %v4973 = vpack.c.b16 %v4965, %v4964
      %v4974 = vpack.c.b16 %v4967, %v4966
      %v4975 = vpack.c.b16 %v4969, %v4968
      %vm4982 = vcmask 785408
      %v4984 = vsel %vm4982, %v4930, 0
      %v4987 = vsel %vm4982, %v4931, 0
      %v4990 = vsel %vm4982, %v4932, 0
      %v4993 = vsel %vm4982, %v4933, 0
      %4995 = vmatprep.subr.bf16.mxu0 0
      %4996 = vmatpush1.bf16.msra.mxu0 0
      %4997 = vmatprep.subr.bf16.mxu0 0
      %4998 = vmatpush1.bf16.msra.mxu0 0
      %4999 = vmatprep.subr.bf16.mxu0 0
      %5000 = vmatpush1.bf16.msra.mxu0 %v4975
      %5001 = vmatprep.subr.bf16.mxu0 0
      %5002 = vmatpush1.bf16.msra.mxu0 %v4974
      %5003 = vmatprep.subr.bf16.mxu0 0
      %5004 = vmatpush1.bf16.msra.mxu0 %v4973
      %5005 = vmatprep.subr.bf16.mxu0 0
      %5006 = vmatpush1.bf16.msra.mxu0 %v4972
      %5007 = vmatprep.subr.bf16.mxu0 0
      %5008 = vmatpush1.bf16.msra.mxu0 %v4971
      %5009 = vmatprep.subr.bf16.mxu0 0
      %5010 = vmatpush1.bf16.msra.mxu0 %v4970
      %5011 = vmatprep.subr.bf16.mxu0 0
      %5012 = vmatpush2.bf16.msra.mxu0 0
      %5013 = vmatprep.subr.bf16.mxu0 0
      %5014 = vmatpush2.bf16.msra.mxu0 0
      %5015 = vmatprep.subr.bf16.mxu0 0
      %5016 = vmatpush2.bf16.msra.mxu0 0
      %5017 = vmatprep.subr.bf16.mxu0 0
      %5018 = vmatpush2.bf16.msra.mxu0 0
      %5019 = vmatprep.subr.bf16.mxu0 0
      %5020 = vmatpush2.bf16.msra.mxu0 0
      %5021 = vmatprep.subr.bf16.mxu0 0
      %5022 = vmatpush2.bf16.msra.mxu0 0
      %5023 = vmatprep.subr.bf16.mxu0 0
      %5024 = vmatpush2.bf16.msra.mxu0 0
      %5025 = vmatprep.subr.bf16.mxu0 0
      %5026 = vmatpush2.bf16.msra.mxu0 0
      %5027 = vmatprep.mubr.bf16.mxu0 0
      %5028 = vmatmul.mubr.bf16.gmra.mxu0 %v4984
      %v5029 = vpop.f32.mrf.mxu0
      %v5030 = vadd.f32 0.0, %v5029
      %v5031 = vpop.f32.mrf.mxu0
      %v5032 = vpop.f32.mrf.mxu0
      %v5033 = vadd.f32 0.0, %v5032
      %v5034 = vpop.f32.mrf.mxu0
      %5035 = vmatprep.mubr.bf16.mxu0 0
      %5036 = vmatmul.mubr.bf16.gmra.mxu0 %v4987
      %v5037 = vpop.f32.mrf.mxu0
      %v5038 = vadd.f32 0.0, %v5037
      %v5039 = vpop.f32.mrf.mxu0
      %v5040 = vpop.f32.mrf.mxu0
      %v5041 = vadd.f32 0.0, %v5040
      %v5042 = vpop.f32.mrf.mxu0
      %5043 = vmatprep.mubr.bf16.mxu0 0
      %5044 = vmatmul.mubr.bf16.gmra.mxu0 %v4990
      %v5045 = vpop.f32.mrf.mxu0
      %v5046 = vadd.f32 0.0, %v5045
      %v5047 = vpop.f32.mrf.mxu0
      %v5048 = vpop.f32.mrf.mxu0
      %v5049 = vadd.f32 0.0, %v5048
      %v5050 = vpop.f32.mrf.mxu0
      %5051 = vmatprep.mubr.bf16.mxu0 0
      %5052 = vmatmul.mubr.bf16.gmra.mxu0 %v4993
      %v5053 = vpop.f32.mrf.mxu0
      %v5054 = vadd.f32 0.0, %v5053
      %v5055 = vpop.f32.mrf.mxu0
      %v5056 = vpop.f32.mrf.mxu0
      %v5057 = vadd.f32 0.0, %v5056
      %v5058 = vpop.f32.mrf.mxu0
      %5059 = vdwg.mxu0
      %v5060 = vadd.f32 %v4679, %v5030
      %v5061 = vadd.f32 %v4680, %v5033
      %v5062 = vadd.f32 %v4681, %v5038
      %v5063 = vadd.f32 %v4682, %v5041
      %v5064 = vadd.f32 %v4683, %v5046
      %v5065 = vadd.f32 %v4684, %v5049
      %v5066 = vadd.f32 %v4685, %v5054
      %v5067 = vadd.f32 %v4686, %v5057
      %v5069 = vlaneseq
      %v5070 = vshrl.u32 %v5069, 7
      %v5071 = vsub.s32 0, %v5070
      %v5072 = vrot.slane %v557, %v5071
      %v5074 = vadd.f32 %v5060, %v5072
      %v5075 = vadd.f32 %v5061, %v5072
      %v5076 = vadd.f32 %v5062, %v5072
      %v5077 = vadd.f32 %v5063, %v5072
      %v5078 = vadd.f32 %v5064, %v5072
      %v5079 = vadd.f32 %v5065, %v5072
      %v5080 = vadd.f32 %v5066, %v5072
      %v5081 = vadd.f32 %v5067, %v5072
      %v5082 = vld [vmem:[%s15] sm:$0xff]
      %v5083 = vmul.f32 %v5074, %v5082
      %v5084 = vmul.f32 %v5075, %v5082
      %v5085 = vmul.f32 %v5076, %v5082
      %v5086 = vmul.f32 %v5077, %v5082
      %v5087 = vmul.f32 %v5078, %v5082
      %v5088 = vmul.f32 %v5079, %v5082
      %v5089 = vmul.f32 %v5080, %v5082
      %v5090 = vmul.f32 %v5081, %v5082
      %v5091 = vsel %vm664, %v5083, 0.0
      %5092 = vadd.xlane.f32.xlu0 %v5091
      %v5093 = vpop.xlane.xlu0 %5092
      %v5094 = vsel %vm664, %v5084, 0.0
      %5095 = vadd.xlane.f32.xlu0 %v5094
      %v5096 = vpop.xlane.xlu0 %5095
      %v5097 = vsel %vm664, %v5085, 0.0
      %5098 = vadd.xlane.f32.xlu0 %v5097
      %v5099 = vpop.xlane.xlu0 %5098
      %v5100 = vsel %vm664, %v5086, 0.0
      %5101 = vadd.xlane.f32.xlu0 %v5100
      %v5102 = vpop.xlane.xlu0 %5101
      %v5103 = vsel %vm664, %v5087, 0.0
      %5104 = vadd.xlane.f32.xlu0 %v5103
      %v5105 = vpop.xlane.xlu0 %5104
      %v5106 = vsel %vm664, %v5088, 0.0
      %5107 = vadd.xlane.f32.xlu0 %v5106
      %v5108 = vpop.xlane.xlu0 %5107
      %v5109 = vsel %vm664, %v5089, 0.0
      %5110 = vadd.xlane.f32.xlu0 %v5109
      %v5111 = vpop.xlane.xlu0 %5110
      %v5112 = vsel %vm664, %v5090, 0.0
      %5113 = vadd.xlane.f32.xlu0 %v5112
      %v5114 = vpop.xlane.xlu0 %5113
      %v5123 = vlaneseq
      %v5124 = vand.u32 %v5123, 127
      %v5125 = vlaneseq
      %v5126 = vshrl.u32 %v5125, 7
      %v5127 = vsub.s32 %v5124, %v5126
      %v5128 = vrot.slane %v5093, %v5127
      %v5129 = vlaneseq
      %v5130 = vshrl.u32 %v5129, 7
      %v5131 = vsub.s32 %v5124, %v5130
      %v5132 = vrot.slane %v5096, %v5131
      %v5133 = vlaneseq
      %v5134 = vshrl.u32 %v5133, 7
      %v5135 = vsub.s32 %v5124, %v5134
      %v5136 = vrot.slane %v5099, %v5135
      %v5137 = vlaneseq
      %v5138 = vshrl.u32 %v5137, 7
      %v5139 = vsub.s32 %v5124, %v5138
      %v5140 = vrot.slane %v5102, %v5139
      %v5141 = vlaneseq
      %v5142 = vshrl.u32 %v5141, 7
      %v5143 = vsub.s32 %v5124, %v5142
      %v5144 = vrot.slane %v5105, %v5143
      %v5145 = vlaneseq
      %v5146 = vshrl.u32 %v5145, 7
      %v5147 = vsub.s32 %v5124, %v5146
      %v5148 = vrot.slane %v5108, %v5147
      %v5149 = vlaneseq
      %v5150 = vshrl.u32 %v5149, 7
      %v5151 = vsub.s32 %v5124, %v5150
      %v5152 = vrot.slane %v5111, %v5151
      %v5153 = vlaneseq
      %v5154 = vshrl.u32 %v5153, 7
      %v5155 = vsub.s32 %v5124, %v5154
      %v5156 = vrot.slane %v5114, %v5155
      %vm5157 = vcmask 1041409
      %v5158 = vsel %vm5157, %v5132, %v5128
      %vm5159 = vcmask 1042434
      %v5160 = vsel %vm5159, %v5136, %v5158
      %vm5161 = vcmask 1043459
      %v5162 = vsel %vm5161, %v5140, %v5160
      %vm5163 = vcmask 1044484
      %v5164 = vsel %vm5163, %v5144, %v5162
      %vm5165 = vcmask 1045509
      %v5166 = vsel %vm5165, %v5148, %v5164
      %vm5167 = vcmask 1046534
      %v5168 = vsel %vm5167, %v5152, %v5166
      %vm5169 = vcmask 1047559
      %v5170 = vsel %vm5169, %v5156, %v5168
      %v5172 = vsel %vm928, %v5170, 0.0
      %5173 = vadd.xlane.f32.xlu0 %v5172
      %v5174 = vpop.xlane.xlu0 %5173
      %s5175 = scalar_lea.vmem %s15, 8
      %v5176 = vld [vmem:[%s5175] sm:$0xff]
      %v5177 = vmul.f32 %v5074, %v5176
      %v5178 = vmul.f32 %v5075, %v5176
      %v5179 = vmul.f32 %v5076, %v5176
      %v5180 = vmul.f32 %v5077, %v5176
      %v5181 = vmul.f32 %v5078, %v5176
      %v5182 = vmul.f32 %v5079, %v5176
      %v5183 = vmul.f32 %v5080, %v5176
      %v5184 = vmul.f32 %v5081, %v5176
      %v5185 = vsel %vm664, %v5177, 0.0
      %5186 = vadd.xlane.f32.xlu0 %v5185
      %v5187 = vpop.xlane.xlu0 %5186
      %v5188 = vsel %vm664, %v5178, 0.0
      %5189 = vadd.xlane.f32.xlu0 %v5188
      %v5190 = vpop.xlane.xlu0 %5189
      %v5191 = vsel %vm664, %v5179, 0.0
      %5192 = vadd.xlane.f32.xlu0 %v5191
      %v5193 = vpop.xlane.xlu0 %5192
      %v5194 = vsel %vm664, %v5180, 0.0
      %5195 = vadd.xlane.f32.xlu0 %v5194
      %v5196 = vpop.xlane.xlu0 %5195
      %v5197 = vsel %vm664, %v5181, 0.0
      %5198 = vadd.xlane.f32.xlu0 %v5197
      %v5199 = vpop.xlane.xlu0 %5198
      %v5200 = vsel %vm664, %v5182, 0.0
      %5201 = vadd.xlane.f32.xlu0 %v5200
      %v5202 = vpop.xlane.xlu0 %5201
      %v5203 = vsel %vm664, %v5183, 0.0
      %5204 = vadd.xlane.f32.xlu0 %v5203
      %v5205 = vpop.xlane.xlu0 %5204
      %v5206 = vsel %vm664, %v5184, 0.0
      %5207 = vadd.xlane.f32.xlu0 %v5206
      %v5208 = vpop.xlane.xlu0 %5207
      %v5217 = vlaneseq
      %v5218 = vshrl.u32 %v5217, 7
      %v5219 = vsub.s32 %v5124, %v5218
      %v5220 = vrot.slane %v5187, %v5219
      %v5221 = vlaneseq
      %v5222 = vshrl.u32 %v5221, 7
      %v5223 = vsub.s32 %v5124, %v5222
      %v5224 = vrot.slane %v5190, %v5223
      %v5225 = vlaneseq
      %v5226 = vshrl.u32 %v5225, 7
      %v5227 = vsub.s32 %v5124, %v5226
      %v5228 = vrot.slane %v5193, %v5227
      %v5229 = vlaneseq
      %v5230 = vshrl.u32 %v5229, 7
      %v5231 = vsub.s32 %v5124, %v5230
      %v5232 = vrot.slane %v5196, %v5231
      %v5233 = vlaneseq
      %v5234 = vshrl.u32 %v5233, 7
      %v5235 = vsub.s32 %v5124, %v5234
      %v5236 = vrot.slane %v5199, %v5235
      %v5237 = vlaneseq
      %v5238 = vshrl.u32 %v5237, 7
      %v5239 = vsub.s32 %v5124, %v5238
      %v5240 = vrot.slane %v5202, %v5239
      %v5241 = vlaneseq
      %v5242 = vshrl.u32 %v5241, 7
      %v5243 = vsub.s32 %v5124, %v5242
      %v5244 = vrot.slane %v5205, %v5243
      %v5245 = vlaneseq
      %v5246 = vshrl.u32 %v5245, 7
      %v5247 = vsub.s32 %v5124, %v5246
      %v5248 = vrot.slane %v5208, %v5247
      %v5249 = vsel %vm5157, %v5224, %v5220
      %v5250 = vsel %vm5159, %v5228, %v5249
      %v5251 = vsel %vm5161, %v5232, %v5250
      %v5252 = vsel %vm5163, %v5236, %v5251
      %v5253 = vsel %vm5165, %v5240, %v5252
      %v5254 = vsel %vm5167, %v5244, %v5253
      %v5255 = vsel %vm5169, %v5248, %v5254
      %v5257 = vsel %vm928, %v5255, 0.0
      %5258 = vadd.xlane.f32.xlu0 %v5257
      %v5259 = vpop.xlane.xlu0 %5258
      %s5260 = scalar_lea.vmem %s15, 16
      %v5261 = vld [vmem:[%s5260] sm:$0xff]
      %v5262 = vmul.f32 %v5074, %v5261
      %v5263 = vmul.f32 %v5075, %v5261
      %v5264 = vmul.f32 %v5076, %v5261
      %v5265 = vmul.f32 %v5077, %v5261
      %v5266 = vmul.f32 %v5078, %v5261
      %v5267 = vmul.f32 %v5079, %v5261
      %v5268 = vmul.f32 %v5080, %v5261
      %v5269 = vmul.f32 %v5081, %v5261
      %v5270 = vsel %vm664, %v5262, 0.0
      %5271 = vadd.xlane.f32.xlu0 %v5270
      %v5272 = vpop.xlane.xlu0 %5271
      %v5273 = vsel %vm664, %v5263, 0.0
      %5274 = vadd.xlane.f32.xlu0 %v5273
      %v5275 = vpop.xlane.xlu0 %5274
      %v5276 = vsel %vm664, %v5264, 0.0
      %5277 = vadd.xlane.f32.xlu0 %v5276
      %v5278 = vpop.xlane.xlu0 %5277
      %v5279 = vsel %vm664, %v5265, 0.0
      %5280 = vadd.xlane.f32.xlu0 %v5279
      %v5281 = vpop.xlane.xlu0 %5280
      %v5282 = vsel %vm664, %v5266, 0.0
      %5283 = vadd.xlane.f32.xlu0 %v5282
      %v5284 = vpop.xlane.xlu0 %5283
      %v5285 = vsel %vm664, %v5267, 0.0
      %5286 = vadd.xlane.f32.xlu0 %v5285
      %v5287 = vpop.xlane.xlu0 %5286
      %v5288 = vsel %vm664, %v5268, 0.0
      %5289 = vadd.xlane.f32.xlu0 %v5288
      %v5290 = vpop.xlane.xlu0 %5289
      %v5291 = vsel %vm664, %v5269, 0.0
      %5292 = vadd.xlane.f32.xlu0 %v5291
      %v5293 = vpop.xlane.xlu0 %5292
      %v5302 = vlaneseq
      %v5303 = vshrl.u32 %v5302, 7
      %v5304 = vsub.s32 %v5124, %v5303
      %v5305 = vrot.slane %v5272, %v5304
      %v5306 = vlaneseq
      %v5307 = vshrl.u32 %v5306, 7
      %v5308 = vsub.s32 %v5124, %v5307
      %v5309 = vrot.slane %v5275, %v5308
      %v5310 = vlaneseq
      %v5311 = vshrl.u32 %v5310, 7
      %v5312 = vsub.s32 %v5124, %v5311
      %v5313 = vrot.slane %v5278, %v5312
      %v5314 = vlaneseq
      %v5315 = vshrl.u32 %v5314, 7
      %v5316 = vsub.s32 %v5124, %v5315
      %v5317 = vrot.slane %v5281, %v5316
      %v5318 = vlaneseq
      %v5319 = vshrl.u32 %v5318, 7
      %v5320 = vsub.s32 %v5124, %v5319
      %v5321 = vrot.slane %v5284, %v5320
      %v5322 = vlaneseq
      %v5323 = vshrl.u32 %v5322, 7
      %v5324 = vsub.s32 %v5124, %v5323
      %v5325 = vrot.slane %v5287, %v5324
      %v5326 = vlaneseq
      %v5327 = vshrl.u32 %v5326, 7
      %v5328 = vsub.s32 %v5124, %v5327
      %v5329 = vrot.slane %v5290, %v5328
      %v5330 = vlaneseq
      %v5331 = vshrl.u32 %v5330, 7
      %v5332 = vsub.s32 %v5124, %v5331
      %v5333 = vrot.slane %v5293, %v5332
      %v5334 = vsel %vm5157, %v5309, %v5305
      %v5335 = vsel %vm5159, %v5313, %v5334
      %v5336 = vsel %vm5161, %v5317, %v5335
      %v5337 = vsel %vm5163, %v5321, %v5336
      %v5338 = vsel %vm5165, %v5325, %v5337
      %v5339 = vsel %vm5167, %v5329, %v5338
      %v5340 = vsel %vm5169, %v5333, %v5339
      %v5342 = vsel %vm928, %v5340, 0.0
      %5343 = vadd.xlane.f32.xlu0 %v5342
      %v5344 = vpop.xlane.xlu0 %5343
      %s5345 = scalar_lea.vmem %s15, 24
      %v5346 = vld [vmem:[%s5345] sm:$0xff]
      %v5347 = vmul.f32 %v5074, %v5346
      %v5348 = vmul.f32 %v5075, %v5346
      %v5349 = vmul.f32 %v5076, %v5346
      %v5350 = vmul.f32 %v5077, %v5346
      %v5351 = vmul.f32 %v5078, %v5346
      %v5352 = vmul.f32 %v5079, %v5346
      %v5353 = vmul.f32 %v5080, %v5346
      %v5354 = vmul.f32 %v5081, %v5346
      %v5355 = vsel %vm664, %v5347, 0.0
      %5356 = vadd.xlane.f32.xlu0 %v5355
      %v5357 = vpop.xlane.xlu0 %5356
      %v5358 = vsel %vm664, %v5348, 0.0
      %5359 = vadd.xlane.f32.xlu0 %v5358
      %v5360 = vpop.xlane.xlu0 %5359
      %v5361 = vsel %vm664, %v5349, 0.0
      %5362 = vadd.xlane.f32.xlu0 %v5361
      %v5363 = vpop.xlane.xlu0 %5362
      %v5364 = vsel %vm664, %v5350, 0.0
      %5365 = vadd.xlane.f32.xlu0 %v5364
      %v5366 = vpop.xlane.xlu0 %5365
      %v5367 = vsel %vm664, %v5351, 0.0
      %5368 = vadd.xlane.f32.xlu0 %v5367
      %v5369 = vpop.xlane.xlu0 %5368
      %v5370 = vsel %vm664, %v5352, 0.0
      %5371 = vadd.xlane.f32.xlu0 %v5370
      %v5372 = vpop.xlane.xlu0 %5371
      %v5373 = vsel %vm664, %v5353, 0.0
      %5374 = vadd.xlane.f32.xlu0 %v5373
      %v5375 = vpop.xlane.xlu0 %5374
      %v5376 = vsel %vm664, %v5354, 0.0
      %5377 = vadd.xlane.f32.xlu0 %v5376
      %v5378 = vpop.xlane.xlu0 %5377
      %v5387 = vlaneseq
      %v5388 = vshrl.u32 %v5387, 7
      %v5389 = vsub.s32 %v5124, %v5388
      %v5390 = vrot.slane %v5357, %v5389
      %v5391 = vlaneseq
      %v5392 = vshrl.u32 %v5391, 7
      %v5393 = vsub.s32 %v5124, %v5392
      %v5394 = vrot.slane %v5360, %v5393
      %v5395 = vlaneseq
      %v5396 = vshrl.u32 %v5395, 7
      %v5397 = vsub.s32 %v5124, %v5396
      %v5398 = vrot.slane %v5363, %v5397
      %v5399 = vlaneseq
      %v5400 = vshrl.u32 %v5399, 7
      %v5401 = vsub.s32 %v5124, %v5400
      %v5402 = vrot.slane %v5366, %v5401
      %v5403 = vlaneseq
      %v5404 = vshrl.u32 %v5403, 7
      %v5405 = vsub.s32 %v5124, %v5404
      %v5406 = vrot.slane %v5369, %v5405
      %v5407 = vlaneseq
      %v5408 = vshrl.u32 %v5407, 7
      %v5409 = vsub.s32 %v5124, %v5408
      %v5410 = vrot.slane %v5372, %v5409
      %v5411 = vlaneseq
      %v5412 = vshrl.u32 %v5411, 7
      %v5413 = vsub.s32 %v5124, %v5412
      %v5414 = vrot.slane %v5375, %v5413
      %v5415 = vlaneseq
      %v5416 = vshrl.u32 %v5415, 7
      %v5417 = vsub.s32 %v5124, %v5416
      %v5418 = vrot.slane %v5378, %v5417
      %v5419 = vsel %vm5157, %v5394, %v5390
      %v5420 = vsel %vm5159, %v5398, %v5419
      %v5421 = vsel %vm5161, %v5402, %v5420
      %v5422 = vsel %vm5163, %v5406, %v5421
      %v5423 = vsel %vm5165, %v5410, %v5422
      %v5424 = vsel %vm5167, %v5414, %v5423
      %v5425 = vsel %vm5169, %v5418, %v5424
      %v5427 = vsel %vm928, %v5425, 0.0
      %5428 = vadd.xlane.f32.xlu0 %v5427
      %v5429 = vpop.xlane.xlu0 %5428
      %vm5430 = vcmask 7168
      %v5431 = vsel %vm5430, %v5174, %v5259
      %vm5432 = vcmask 15360
      %v5433 = vsel %vm5432, %v5431, %v5344
      %vm5434 = vcmask 23552
      %v5435 = vsel %vm5434, %v5433, %v5429
      %v5436 = vld [vmem:[%s16] sm:$0x1]
      %v5438 = vlaneseq
      %v5439 = vshrl.u32 %v5438, 7
      %v5440 = vsub.s32 0, %v5439
      %v5441 = vrot.slane %v5436, %v5440
      %v5443 = vadd.f32 %v5435, %v5441
      %vm5444 = vcmask 31744
      %5445 = vst.msk [vmem:[%s548] sm:$0xff] %vm5444, %v5443
      %p5446 = scmp.lt.s32.totalorder %s28, 1
      %s5447 = scalar_select %p5446, %s28, 1
      %s5448 = smul.addr %s5447, 8
      %s5449 = scalar_lea.vmem %s17, %s5448
      // Predicated region
      $region89: #{tpu_custom_call.1} parent=87 // pred_check
        %p5450 = pneg %p408
      $region90: #{tpu_custom_call.1} parent=87 // pred_check_branch
        %5452 = sbr.rel (%p5450) target = $region92
      $region91: #{tpu_custom_call.1} parent=87 // pred_region
        _
      $region92: #{tpu_custom_call.1} parent=87 // pred_fallthru
        _
    $region88: #{tpu_custom_call.1} parent=5 // pred_fallthru
      _
    %p5453 = scmp.le.s32.totalorder 2, %s23
    // Predicated region
    $region93: #{tpu_custom_call.1} parent=5 // pred_check
      %p5454 = pneg %p5453
    $region94: #{tpu_custom_call.1} parent=5 // pred_check_branch
      %5456 = sbr.rel (%p5454) target = $region96
    $region95: #{tpu_custom_call.1} parent=5 // pred_region
      %s5457 = ssub.s32 %s23, 2
      // Predicated region
      $region97: #{tpu_custom_call.1} parent=95 // pred_check
        %p5458 = pneg %p414
      $region98: #{tpu_custom_call.1} parent=95 // pred_check_branch
        %5460 = sbr.rel (%p5458) target = $region100
      $region99: #{tpu_custom_call.1} parent=95 // pred_region
        %p5461 = scmp.lt.s32.totalorder %s29, 1
        %s5462 = scalar_select %p5461, %s29, 1
        %s5463 = smul.addr %s5462, 8
        %s5464 = scalar_lea.vmem %s17, %s5463
      $region100: #{tpu_custom_call.1} parent=95 // pred_fallthru
        _
    $region96: #{tpu_custom_call.1} parent=5 // pred_fallthru
      _
  $region6: #{tpu_custom_call.1} parent=0 // loop_footer
    %s27 = sadd.s32 1, %s23
  $region7: #{tpu_custom_call.1} parent=0 // loop_footer_branch
    %22 = sbr.rel target = $region3
  $region8: #{tpu_custom_call.1} parent=0 // loop_exit
    _

</llo_original>
